<compile_context>
chip_gen: v7x
topology: tpu7x:2x2x1
jax: 0.10.0
libtpu: 0.0.40
codegen_flags: <defaults>
</compile_context>

<pallas_src>
import functools
import math

import jax
import jax.numpy as jnp
from jax import lax
from jax.experimental import pallas as pl
from jax.experimental.pallas import tpu as pltpu


def _layer_norm(x, g, b, eps=1e-5):
    # x: (N, D), g/b: (1, D).  Biased variance, matching torch.nn.LayerNorm.
    mu = jnp.mean(x, axis=-1, keepdims=True)
    xc = x - mu
    var = jnp.mean(xc * xc, axis=-1, keepdims=True)
    return xc * lax.rsqrt(var + eps) * g + b


def decoder_block_kernel(x_ref, en_ref, wqkv_ref, wff_ref, wo_ref, bqkv_ref,
                         vec_ref, o_ref, *, heads, bb):
    # x_ref/en_ref/o_ref: (bb, S, D); wqkv_ref: (2, D, 3D); wff_ref: (2, D, D);
    # wo_ref: (2, heads, hd, D); bqkv_ref: (2, 3D) f32; vec_ref: (10, D) f32.
    S, D = x_ref.shape[1], x_ref.shape[2]
    hd = D // heads
    n = bb * S
    g = heads * bb
    cdt = wqkv_ref.dtype                    # matmul-operand dtype (bf16 by default)

    x = x_ref[...].astype(jnp.float32).reshape(n, D)
    en = en_ref[...].astype(jnp.float32).reshape(n, D)
    V = vec_ref[...]
    BQ = bqkv_ref[...]

    ln1_g, ln1_b = V[0:1, :], V[1:2, :]
    ln2_g, ln2_b = V[2:3, :], V[3:4, :]
    ln3_g, ln3_b = V[4:5, :], V[5:6, :]
    bo1, bo2 = V[6:7, :], V[7:8, :]
    bf1, bf2 = V[8:9, :], V[9:10, :]

    # ut_mask: triu(ones, diagonal=1) == True means "do not attend".  Built once
    # per grid step, shared by both attention blocks (additive form).
    row = lax.broadcasted_iota(jnp.int32, (S, S), 0)
    col = lax.broadcasted_iota(jnp.int32, (S, S), 1)
    neg_mask = jnp.where(col > row, -1e30, 0.0).astype(jnp.float32)[None]   # (1, S, S)

    def mm(a, w):                            # bf16 MXU matmul, f32 accumulation
        return jnp.dot(a.astype(cdt), w, preferred_element_type=jnp.float32)

    def to_heads(t, base):
        # t: (n, W) f32, take lanes [base + h*hd, base + (h+1)*hd) per head and
        # return (g, S, hd) with g index = h*bb + b.  Only `heads` static lane
        # slices (bb-independent); reshapes below are pure leading-dim splits.
        th = jnp.stack([t[:, base + h * hd: base + (h + 1) * hd]
                        for h in range(heads)], axis=0)       # (heads, n, hd)
        return th.reshape(g, S, hd)

    def mha(q_in, kv_in, wqkv, bqkv, wo_h, bo, self_attn):
        # q_in, kv_in: (n, D) f32; wqkv: (D, 3D) fused Q|K|V (Q pre-scaled by
        # 1/sqrt(hd)); bqkv: (1, 3D) f32; wo_h: (heads, hd, D); bo: (1, D).
        if self_attn:
            qkv = mm(q_in, wqkv) + bqkv                        # one fused (n, 3D) matmul
            q_src, q_off = qkv, 0
            kv_src, k_off, v_off = qkv, D, 2 * D
        else:
            q_src = mm(q_in, wqkv[:, :D]) + bqkv[:, :D]        # (n, D)
            kv_src = mm(kv_in, wqkv[:, D:]) + bqkv[:, D:]      # fused K|V (n, 2D)
            q_off, k_off, v_off = 0, 0, D

        qh = to_heads(q_src, q_off).astype(cdt)                # (g, S, hd)
        kh = to_heads(kv_src, k_off).astype(cdt)               # (g, S, hd)
        vh = to_heads(kv_src, v_off).astype(cdt)               # (g, S, hd)

        # scores[g,i,j] = sum_e qh[g,i,e] * kh[g,j,e]
        s = lax.dot_general(qh, kh, (((2,), (2,)), ((0,), (0,))),
                            preferred_element_type=jnp.float32)          # (g, S, S)
        s = s + neg_mask                                       # broadcast over g
        s = s - jnp.max(s, axis=-1, keepdims=True)
        p = jnp.exp(s)
        denom = jnp.sum(p, axis=-1, keepdims=True)
        p = p * pl.reciprocal(denom, approx=True)              # EUP slot, VALU-free
        # ctx[g,i,e] = sum_j p[g,i,j] * vh[g,j,e]
        ctx = lax.dot_general(p.astype(cdt), vh, (((2,), (1,)), ((0,), (0,))),
                              preferred_element_type=jnp.float32)        # (g, S, hd)

        # Output projection batched over heads (no Wo duplication): each head's
        # context rows (all batches) hit that head's (hd, D) slab, then head-sum.
        ctx_h = ctx.reshape(heads, n, hd).astype(cdt)          # pure leading-dim reshape
        per_head = lax.dot_general(ctx_h, wo_h, (((2,), (1,)), ((0,), (0,))),
                                   preferred_element_type=jnp.float32)   # (heads, n, D)
        return jnp.sum(per_head, axis=0) + bo                  # (n, D)

    # --- M1 = SkipConct(Multihead(LayerNorm(Qin;Kin;Vin))) -----------------------
    h1 = _layer_norm(x, ln1_g, ln1_b)
    m1 = h1 + mha(h1, h1, wqkv_ref[0], BQ[0:1, :], wo_ref[0], bo1, self_attn=True)

    # --- M2 = SkipConct(Multihead(LayerNorm(M1;O;O))) ----------------------------
    en_n = _layer_norm(en, ln2_g, ln2_b)
    m2 = m1 + mha(m1, en_n, wqkv_ref[1], BQ[1:2, :], wo_ref[1], bo2, self_attn=False)

    # --- L = SkipConct(FFN(LayerNorm(M2))) ---------------------------------------
    h3 = _layer_norm(m2, ln3_g, ln3_b)
    ff = jnp.maximum(mm(h3, wff_ref[0]) + bf1, 0.0)
    ff = mm(ff, wff_ref[1]) + bf2
    o_ref[...] = (h3 + ff).reshape(bb, S, D).astype(o_ref.dtype)


def pack_decoder_params(p, *, heads, matmul_dtype=jnp.bfloat16):
    """Pack parameters (already in y = x @ W + b layout) for the kernel.

    Returns:
      WQKV: (2, D, 3D)        fused [Wq|Wk|Wv] for self / cross attn (matmul_dtype)
      WFF : (2, D, D)         [wf1, wf2]                              (matmul_dtype)
      WO  : (2, heads, hd, D) per-head output projections             (matmul_dtype)
      BQKV: (2, 3D) f32       fused [bq|bk|bv] for self / cross attn
      V   : (10, D) f32       [ln1_g, ln1_b, ln2_g, ln2_b, ln3_g, ln3_b,
                               bo1, bo2, bf1, bf2]
    1/sqrt(head_dim) is folded into Wq AND bq.
    """
    D = p["wq1"].shape[0]
    hd = D // heads
    scale = float(hd) ** -0.5
    wq1, bq1 = p["wq1"] * scale, p["bq1"] * scale
    wq2, bq2 = p["wq2"] * scale, p["bq2"] * scale
    WQKV = jnp.stack([
        jnp.concatenate([wq1, p["wk1"], p["wv1"]], axis=1),
        jnp.concatenate([wq2, p["wk2"], p["wv2"]], axis=1),
    ]).astype(matmul_dtype)                                            # (2, D, 3D)
    WFF = jnp.stack([p["wf1"], p["wf2"]]).astype(matmul_dtype)         # (2, D, D)
    WO = jnp.stack([p["wo1"].reshape(heads, hd, D),
                    p["wo2"].reshape(heads, hd, D)]).astype(matmul_dtype)
    BQKV = jnp.stack([
        jnp.concatenate([bq1, p["bk1"], p["bv1"]]),
        jnp.concatenate([bq2, p["bk2"], p["bv2"]]),
    ]).astype(jnp.float32)                                             # (2, 3D)
    V = jnp.stack([p["ln1_g"], p["ln1_b"], p["ln2_g"], p["ln2_b"],
                   p["ln3_g"], p["ln3_b"],
                   p["bo1"], p["bo2"], p["bf1"], p["bf2"]]).astype(jnp.float32)
    return WQKV, WFF, WO, BQKV, V


def decoder_block_forward(x, en_out, WQKV, WFF, WO, BQKV, V, *, heads):
    """x, en_out: (B, S, D) f32.  Returns (B, S, D) f32."""
    B, S, D = x.shape
    hd = D // heads
    # Batch fold: at most 2 grid steps.  Two equal "parallel" steps when B is even
    # and >= 4 (both v7x TensorCores get one big block each; input/output DMA of
    # step i+1 overlaps compute of step i), otherwise one big step (single-TC
    # v5e/v6e: extra steps are pure per-step overhead).  Every matmul then sees
    # M = bb*S rows, amortizing the ~0.35us/step fixed cost.
    if B % 2 == 0 and B >= 4:
        bb, nb = B // 2, 2
    else:
        bb, nb = B, 1
    # Raise the scoped-VMEM limit only if a very large bb would exceed the default
    # (v7x scoped default is 32 MiB of 64 MiB physical); footprint here is tiny.
    io_bytes = 3 * 2 * bb * S * D * 4          # x, en, out blocks, double-buffered
    vmem_limit = None
    if io_bytes > 8 * (1 << 20):
        vmem_limit = min(4 * io_bytes, 56 * (1 << 20))

    kernel = functools.partial(decoder_block_kernel, heads=heads, bb=bb)
    return pl.pallas_call(
        kernel,
        out_shape=jax.ShapeDtypeStruct((B, S, D), jnp.float32),
        grid=(nb,),
        in_specs=[
            pl.BlockSpec((bb, S, D), lambda i: (i, 0, 0)),             # x (batch sub-block)
            pl.BlockSpec((bb, S, D), lambda i: (i, 0, 0)),             # en_out
            pl.BlockSpec((2, D, 3 * D), lambda i: (0, 0, 0)),          # fused QKV weights (resident)
            pl.BlockSpec((2, D, D), lambda i: (0, 0, 0)),              # FFN weights (resident)
            pl.BlockSpec((2, heads, hd, D), lambda i: (0, 0, 0, 0)),   # per-head Wo (resident)
            pl.BlockSpec((2, 3 * D), lambda i: (0, 0)),                # fused QKV biases
            pl.BlockSpec((10, D), lambda i: (0, 0)),                   # LN params + out/FFN biases
        ],
        out_specs=pl.BlockSpec((bb, S, D), lambda i: (i, 0, 0)),
        compiler_params=pltpu.CompilerParams(
            dimension_semantics=("parallel",),
            vmem_limit_bytes=vmem_limit),
    )(x, en_out, WQKV, WFF, WO, BQKV, V)


if __name__ == "__main__":
    # Small shapes consistent with the module: dim_model=32, heads_de=4, seq_len=8.
    B, S, D, H = 2, 8, 32, 4
    total_res = 2            # emb_type does not start with 'R_' -> Embedding(total_res+1, D)

    key = jax.random.PRNGKey(0)
    k_emb, k_res, k_pos, k_en, k_w, k_b = jax.random.split(key, 6)

    # Inputs (diff is unused for the default emb_type / first_block=True path).
    embd_res_table = jax.random.normal(k_emb, (total_res + 1, D), jnp.float32) * 0.1
    in_res = jax.random.randint(k_res, (B, S), 0, total_res + 1)
    in_pos = jax.random.normal(k_pos, (B, S, D), jnp.float32) * 0.1
    en_out = jax.random.normal(k_en, (B, S, D), jnp.float32) * 0.1

    # Deterministic synthetic parameters in the y = x @ W + b convention.
    wkeys = jax.random.split(k_w, 10)
    wscale = 1.0 / math.sqrt(D)
    wnames = ["wq1", "wk1", "wv1", "wo1", "wq2", "wk2", "wv2", "wo2", "wf1", "wf2"]
    params = {name: jax.random.normal(wkeys[i], (D, D), jnp.float32) * wscale
              for i, name in enumerate(wnames)}
    bkeys = jax.random.split(k_b, 10)
    bnames = ["bq1", "bk1", "bv1", "bo1", "bq2", "bk2", "bv2", "bo2", "bf1", "bf2"]
    params.update({name: jax.random.normal(bkeys[i], (D,), jnp.float32) * 0.02
                   for i, name in enumerate(bnames)})
    for i in (1, 2, 3):
        params[f"ln{i}_g"] = jnp.ones((D,), jnp.float32)
        params[f"ln{i}_b"] = jnp.zeros((D,), jnp.float32)

    WQKV, WFF, WO, BQKV, V = pack_decoder_params(params, heads=H)

    # Glue: embedding lookup + positional add (first_block=True, non-R_ emb_type).
    x = embd_res_table[in_res] + in_pos                               # (B, S, D)

    out = decoder_block_forward(x, en_out, WQKV, WFF, WO, BQKV, V, heads=H)
    out = jax.block_until_ready(out)
    assert out.shape == (B, S, D), out.shape
    assert bool(jnp.all(jnp.isfinite(out)))
    print("KERNEL_OK")
</pallas_src>

<mosaic_0001>
module attributes {stable_mosaic.version = 11 : i64} {
  func.func @decoder_block_kernel(%arg0: i32, %arg1: memref<2x8x32xf32, #tpu.memory_space<vmem>>, %arg2: memref<2x8x32xf32, #tpu.memory_space<vmem>>, %arg3: memref<2x32x96xbf16, #tpu.memory_space<vmem>>, %arg4: memref<2x32x32xbf16, #tpu.memory_space<vmem>>, %arg5: memref<2x4x8x32xbf16, #tpu.memory_space<vmem>>, %arg6: memref<2x96xf32, #tpu.memory_space<vmem>>, %arg7: memref<10x32xf32, #tpu.memory_space<vmem>>, %arg8: memref<2x8x32xf32, #tpu.memory_space<vmem>>) attributes {dimension_semantics = [#tpu.dimension_semantics<parallel>], iteration_bounds = array<i64: 1>, scalar_prefetch = 0 : i64, scratch_operands = 0 : i64, tpu.core_type = #tpu.core_type<tc>, window_params = [{transform_indices = @transform_0, window_bounds = array<i64: 2, 8, 32>}, {transform_indices = @transform_1, window_bounds = array<i64: 2, 8, 32>}, {pipeline_mode = #tpu.pipeline_mode<synchronous>, transform_indices = @transform_2, window_bounds = array<i64: 2, 32, 96>}, {pipeline_mode = #tpu.pipeline_mode<synchronous>, transform_indices = @transform_3, window_bounds = array<i64: 2, 32, 32>}, {pipeline_mode = #tpu.pipeline_mode<synchronous>, transform_indices = @transform_4, window_bounds = array<i64: 2, 4, 8, 32>}, {pipeline_mode = #tpu.pipeline_mode<synchronous>, transform_indices = @transform_5, window_bounds = array<i64: 2, 96>}, {pipeline_mode = #tpu.pipeline_mode<synchronous>, transform_indices = @transform_6, window_bounds = array<i64: 10, 32>}, {transform_indices = @transform_7, window_bounds = array<i64: 2, 8, 32>}]} {
    %c0 = arith.constant 0 : index
    %c0_0 = arith.constant 0 : index
    %c0_1 = arith.constant 0 : index
    %0 = vector.load %arg1[%c0, %c0_0, %c0_1] : memref<2x8x32xf32, #tpu.memory_space<vmem>>, vector<2x8x32xf32>
    %1 = vector.shape_cast %0 : vector<2x8x32xf32> to vector<16x32xf32>
    %c0_2 = arith.constant 0 : index
    %c0_3 = arith.constant 0 : index
    %c0_4 = arith.constant 0 : index
    %2 = vector.load %arg2[%c0_2, %c0_3, %c0_4] : memref<2x8x32xf32, #tpu.memory_space<vmem>>, vector<2x8x32xf32>
    %3 = vector.shape_cast %2 : vector<2x8x32xf32> to vector<16x32xf32>
    %c0_5 = arith.constant 0 : index
    %c0_6 = arith.constant 0 : index
    %4 = vector.load %arg7[%c0_5, %c0_6] : memref<10x32xf32, #tpu.memory_space<vmem>>, vector<10x32xf32>
    %c0_7 = arith.constant 0 : index
    %c0_8 = arith.constant 0 : index
    %5 = vector.load %arg6[%c0_7, %c0_8] : memref<2x96xf32, #tpu.memory_space<vmem>>, vector<2x96xf32>
    %6 = vector.extract_strided_slice %4 {offsets = [0, 0], sizes = [1, 32], strides = [1, 1]} : vector<10x32xf32> to vector<1x32xf32>
    %7 = vector.extract_strided_slice %4 {offsets = [1, 0], sizes = [1, 32], strides = [1, 1]} : vector<10x32xf32> to vector<1x32xf32>
    %8 = vector.extract_strided_slice %4 {offsets = [2, 0], sizes = [1, 32], strides = [1, 1]} : vector<10x32xf32> to vector<1x32xf32>
    %9 = vector.extract_strided_slice %4 {offsets = [3, 0], sizes = [1, 32], strides = [1, 1]} : vector<10x32xf32> to vector<1x32xf32>
    %10 = vector.extract_strided_slice %4 {offsets = [4, 0], sizes = [1, 32], strides = [1, 1]} : vector<10x32xf32> to vector<1x32xf32>
    %11 = vector.extract_strided_slice %4 {offsets = [5, 0], sizes = [1, 32], strides = [1, 1]} : vector<10x32xf32> to vector<1x32xf32>
    %12 = vector.extract_strided_slice %4 {offsets = [6, 0], sizes = [1, 32], strides = [1, 1]} : vector<10x32xf32> to vector<1x32xf32>
    %13 = vector.extract_strided_slice %4 {offsets = [7, 0], sizes = [1, 32], strides = [1, 1]} : vector<10x32xf32> to vector<1x32xf32>
    %14 = vector.extract_strided_slice %4 {offsets = [8, 0], sizes = [1, 32], strides = [1, 1]} : vector<10x32xf32> to vector<1x32xf32>
    %15 = vector.extract_strided_slice %4 {offsets = [9, 0], sizes = [1, 32], strides = [1, 1]} : vector<10x32xf32> to vector<1x32xf32>
    %16 = tpu.iota {dimensions = array<i32: 0>} : vector<8x8xi32>
    %17 = tpu.iota {dimensions = array<i32: 1>} : vector<8x8xi32>
    %18 = arith.cmpi sgt, %17, %16 : vector<8x8xi32>
    %cst = arith.constant -1.000000e+30 : f32
    %cst_9 = arith.constant 0.000000e+00 : f32
    %19 = vector.broadcast %cst : f32 to vector<8x8xf32>
    %20 = vector.broadcast %cst_9 : f32 to vector<8x8xf32>
    %21 = arith.select %18, %19, %20 : vector<8x8xi1>, vector<8x8xf32>
    %22 = vector.shape_cast %21 : vector<8x8xf32> to vector<1x8x8xf32>
    %cst_10 = arith.constant dense<0.000000e+00> : vector<16xf32>
    %23 = vector.multi_reduction <add>, %1, %cst_10 [1] : vector<16x32xf32> to vector<16xf32>
    %24 = vector.shape_cast %23 : vector<16xf32> to vector<16x1xf32>
    %cst_11 = arith.constant 3.200000e+01 : f32
    %25 = vector.broadcast %cst_11 : f32 to vector<16x1xf32>
    %26 = arith.divf %24, %25 : vector<16x1xf32>
    %27 = vector.broadcast %26 : vector<16x1xf32> to vector<16x32xf32>
    %28 = arith.subf %1, %27 : vector<16x32xf32>
    %29 = arith.mulf %28, %28 : vector<16x32xf32>
    %cst_12 = arith.constant dense<0.000000e+00> : vector<16xf32>
    %30 = vector.multi_reduction <add>, %29, %cst_12 [1] : vector<16x32xf32> to vector<16xf32>
    %31 = vector.shape_cast %30 : vector<16xf32> to vector<16x1xf32>
    %cst_13 = arith.constant 3.200000e+01 : f32
    %32 = vector.broadcast %cst_13 : f32 to vector<16x1xf32>
    %33 = arith.divf %31, %32 : vector<16x1xf32>
    %cst_14 = arith.constant 9.99999974E-6 : f32
    %34 = vector.broadcast %cst_14 : f32 to vector<16x1xf32>
    %35 = arith.addf %33, %34 : vector<16x1xf32>
    %36 = math.rsqrt %35 : vector<16x1xf32>
    %37 = vector.broadcast %36 : vector<16x1xf32> to vector<16x32xf32>
    %38 = arith.mulf %28, %37 : vector<16x32xf32>
    %39 = vector.broadcast %6 : vector<1x32xf32> to vector<16x32xf32>
    %40 = arith.mulf %38, %39 : vector<16x32xf32>
    %41 = vector.broadcast %7 : vector<1x32xf32> to vector<16x32xf32>
    %42 = arith.addf %40, %41 : vector<16x32xf32>
    %c0_15 = arith.constant 0 : index
    %c0_16 = arith.constant 0 : index
    %c0_17 = arith.constant 0 : index
    %43 = vector.load %arg3[%c0_15, %c0_16, %c0_17] : memref<2x32x96xbf16, #tpu.memory_space<vmem>>, vector<1x32x96xbf16>
    %44 = vector.shape_cast %43 : vector<1x32x96xbf16> to vector<32x96xbf16>
    %45 = vector.extract_strided_slice %5 {offsets = [0, 0], sizes = [1, 96], strides = [1, 1]} : vector<2x96xf32> to vector<1x96xf32>
    %c0_18 = arith.constant 0 : index
    %c0_19 = arith.constant 0 : index
    %c0_20 = arith.constant 0 : index
    %c0_21 = arith.constant 0 : index
    %46 = vector.load %arg5[%c0_18, %c0_19, %c0_20, %c0_21] : memref<2x4x8x32xbf16, #tpu.memory_space<vmem>>, vector<1x4x8x32xbf16>
    %47 = vector.shape_cast %46 : vector<1x4x8x32xbf16> to vector<4x8x32xbf16>
    %48 = arith.truncf %42 : vector<16x32xf32> to vector<16x32xbf16>
    %cst_22 = arith.constant dense<0.000000e+00> : vector<16x96xf32>
    %49 = tpu.matmul %48, %44, %cst_22 {dimension_numbers = #tpu.dot_dimension_numbers<[1], [0], [0], [1], [0, 0, 1, 1], [], []>} : vector<16x32xbf16>, vector<32x96xbf16>, vector<16x96xf32> -> vector<16x96xf32>
    %50 = vector.broadcast %45 : vector<1x96xf32> to vector<16x96xf32>
    %51 = arith.addf %49, %50 : vector<16x96xf32>
    %52 = vector.extract_strided_slice %51 {offsets = [0, 0], sizes = [16, 8], strides = [1, 1]} : vector<16x96xf32> to vector<16x8xf32>
    %53 = vector.extract_strided_slice %51 {offsets = [0, 8], sizes = [16, 8], strides = [1, 1]} : vector<16x96xf32> to vector<16x8xf32>
    %54 = vector.extract_strided_slice %51 {offsets = [0, 16], sizes = [16, 8], strides = [1, 1]} : vector<16x96xf32> to vector<16x8xf32>
    %55 = vector.extract_strided_slice %51 {offsets = [0, 24], sizes = [16, 8], strides = [1, 1]} : vector<16x96xf32> to vector<16x8xf32>
    %56 = vector.shape_cast %52 : vector<16x8xf32> to vector<1x16x8xf32>
    %57 = vector.shape_cast %53 : vector<16x8xf32> to vector<1x16x8xf32>
    %58 = vector.shape_cast %54 : vector<16x8xf32> to vector<1x16x8xf32>
    %59 = vector.shape_cast %55 : vector<16x8xf32> to vector<1x16x8xf32>
    %60 = tpu.concatenate %56, %57, %58, %59 in 0 : vector<1x16x8xf32>, vector<1x16x8xf32>, vector<1x16x8xf32>, vector<1x16x8xf32> -> vector<4x16x8xf32>
    %61 = vector.shape_cast %60 : vector<4x16x8xf32> to vector<8x8x8xf32>
    %62 = arith.truncf %61 : vector<8x8x8xf32> to vector<8x8x8xbf16>
    %63 = vector.extract_strided_slice %51 {offsets = [0, 32], sizes = [16, 8], strides = [1, 1]} : vector<16x96xf32> to vector<16x8xf32>
    %64 = vector.extract_strided_slice %51 {offsets = [0, 40], sizes = [16, 8], strides = [1, 1]} : vector<16x96xf32> to vector<16x8xf32>
    %65 = vector.extract_strided_slice %51 {offsets = [0, 48], sizes = [16, 8], strides = [1, 1]} : vector<16x96xf32> to vector<16x8xf32>
    %66 = vector.extract_strided_slice %51 {offsets = [0, 56], sizes = [16, 8], strides = [1, 1]} : vector<16x96xf32> to vector<16x8xf32>
    %67 = vector.shape_cast %63 : vector<16x8xf32> to vector<1x16x8xf32>
    %68 = vector.shape_cast %64 : vector<16x8xf32> to vector<1x16x8xf32>
    %69 = vector.shape_cast %65 : vector<16x8xf32> to vector<1x16x8xf32>
    %70 = vector.shape_cast %66 : vector<16x8xf32> to vector<1x16x8xf32>
    %71 = tpu.concatenate %67, %68, %69, %70 in 0 : vector<1x16x8xf32>, vector<1x16x8xf32>, vector<1x16x8xf32>, vector<1x16x8xf32> -> vector<4x16x8xf32>
    %72 = vector.shape_cast %71 : vector<4x16x8xf32> to vector<8x8x8xf32>
    %73 = arith.truncf %72 : vector<8x8x8xf32> to vector<8x8x8xbf16>
    %74 = vector.extract_strided_slice %51 {offsets = [0, 64], sizes = [16, 8], strides = [1, 1]} : vector<16x96xf32> to vector<16x8xf32>
    %75 = vector.extract_strided_slice %51 {offsets = [0, 72], sizes = [16, 8], strides = [1, 1]} : vector<16x96xf32> to vector<16x8xf32>
    %76 = vector.extract_strided_slice %51 {offsets = [0, 80], sizes = [16, 8], strides = [1, 1]} : vector<16x96xf32> to vector<16x8xf32>
    %77 = vector.extract_strided_slice %51 {offsets = [0, 88], sizes = [16, 8], strides = [1, 1]} : vector<16x96xf32> to vector<16x8xf32>
    %78 = vector.shape_cast %74 : vector<16x8xf32> to vector<1x16x8xf32>
    %79 = vector.shape_cast %75 : vector<16x8xf32> to vector<1x16x8xf32>
    %80 = vector.shape_cast %76 : vector<16x8xf32> to vector<1x16x8xf32>
    %81 = vector.shape_cast %77 : vector<16x8xf32> to vector<1x16x8xf32>
    %82 = tpu.concatenate %78, %79, %80, %81 in 0 : vector<1x16x8xf32>, vector<1x16x8xf32>, vector<1x16x8xf32>, vector<1x16x8xf32> -> vector<4x16x8xf32>
    %83 = vector.shape_cast %82 : vector<4x16x8xf32> to vector<8x8x8xf32>
    %84 = arith.truncf %83 : vector<8x8x8xf32> to vector<8x8x8xbf16>
    %cst_23 = arith.constant dense<0.000000e+00> : vector<8x8x8xf32>
    %85 = tpu.matmul %62, %73, %cst_23 {dimension_numbers = #tpu.dot_dimension_numbers<[2], [2], [1], [1], [0, 0, 0, 1, 1, 1], [0], [0]>} : vector<8x8x8xbf16>, vector<8x8x8xbf16>, vector<8x8x8xf32> -> vector<8x8x8xf32>
    %86 = vector.broadcast %22 : vector<1x8x8xf32> to vector<8x8x8xf32>
    %87 = arith.addf %85, %86 : vector<8x8x8xf32>
    %cst_24 = arith.constant dense<0xFF800000> : vector<8x8xf32>
    %88 = vector.multi_reduction <maximumf>, %87, %cst_24 [2] : vector<8x8x8xf32> to vector<8x8xf32>
    %89 = vector.shape_cast %88 : vector<8x8xf32> to vector<8x8x1xf32>
    %90 = vector.broadcast %89 : vector<8x8x1xf32> to vector<8x8x8xf32>
    %91 = arith.subf %87, %90 : vector<8x8x8xf32>
    %92 = math.exp %91 : vector<8x8x8xf32>
    %cst_25 = arith.constant dense<0.000000e+00> : vector<8x8xf32>
    %93 = vector.multi_reduction <add>, %92, %cst_25 [2] : vector<8x8x8xf32> to vector<8x8xf32>
    %94 = vector.shape_cast %93 : vector<8x8xf32> to vector<8x8x1xf32>
    %95 = tpu.reciprocal %94 {approx = true} : vector<8x8x1xf32> -> vector<8x8x1xf32>
    %96 = vector.broadcast %95 : vector<8x8x1xf32> to vector<8x8x8xf32>
    %97 = arith.mulf %92, %96 : vector<8x8x8xf32>
    %98 = arith.truncf %97 : vector<8x8x8xf32> to vector<8x8x8xbf16>
    %cst_26 = arith.constant dense<0.000000e+00> : vector<8x8x8xf32>
    %99 = tpu.matmul %98, %84, %cst_26 {dimension_numbers = #tpu.dot_dimension_numbers<[2], [1], [1], [2], [0, 0, 0, 1, 1, 2], [0], [0]>} : vector<8x8x8xbf16>, vector<8x8x8xbf16>, vector<8x8x8xf32> -> vector<8x8x8xf32>
    %100 = vector.shape_cast %99 : vector<8x8x8xf32> to vector<4x16x8xf32>
    %101 = arith.truncf %100 : vector<4x16x8xf32> to vector<4x16x8xbf16>
    %cst_27 = arith.constant dense<0.000000e+00> : vector<4x16x32xf32>
    %102 = tpu.matmul %101, %47, %cst_27 {dimension_numbers = #tpu.dot_dimension_numbers<[2], [1], [1], [2], [0, 0, 0, 1, 1, 2], [0], [0]>} : vector<4x16x8xbf16>, vector<4x8x32xbf16>, vector<4x16x32xf32> -> vector<4x16x32xf32>
    %cst_28 = arith.constant dense<0.000000e+00> : vector<16x32xf32>
    %103 = vector.multi_reduction <add>, %102, %cst_28 [0] : vector<4x16x32xf32> to vector<16x32xf32>
    %104 = vector.broadcast %12 : vector<1x32xf32> to vector<16x32xf32>
    %105 = arith.addf %103, %104 : vector<16x32xf32>
    %106 = arith.addf %42, %105 : vector<16x32xf32>
    %cst_29 = arith.constant dense<0.000000e+00> : vector<16xf32>
    %107 = vector.multi_reduction <add>, %3, %cst_29 [1] : vector<16x32xf32> to vector<16xf32>
    %108 = vector.shape_cast %107 : vector<16xf32> to vector<16x1xf32>
    %cst_30 = arith.constant 3.200000e+01 : f32
    %109 = vector.broadcast %cst_30 : f32 to vector<16x1xf32>
    %110 = arith.divf %108, %109 : vector<16x1xf32>
    %111 = vector.broadcast %110 : vector<16x1xf32> to vector<16x32xf32>
    %112 = arith.subf %3, %111 : vector<16x32xf32>
    %113 = arith.mulf %112, %112 : vector<16x32xf32>
    %cst_31 = arith.constant dense<0.000000e+00> : vector<16xf32>
    %114 = vector.multi_reduction <add>, %113, %cst_31 [1] : vector<16x32xf32> to vector<16xf32>
    %115 = vector.shape_cast %114 : vector<16xf32> to vector<16x1xf32>
    %cst_32 = arith.constant 3.200000e+01 : f32
    %116 = vector.broadcast %cst_32 : f32 to vector<16x1xf32>
    %117 = arith.divf %115, %116 : vector<16x1xf32>
    %cst_33 = arith.constant 9.99999974E-6 : f32
    %118 = vector.broadcast %cst_33 : f32 to vector<16x1xf32>
    %119 = arith.addf %117, %118 : vector<16x1xf32>
    %120 = math.rsqrt %119 : vector<16x1xf32>
    %121 = vector.broadcast %120 : vector<16x1xf32> to vector<16x32xf32>
    %122 = arith.mulf %112, %121 : vector<16x32xf32>
    %123 = vector.broadcast %8 : vector<1x32xf32> to vector<16x32xf32>
    %124 = arith.mulf %122, %123 : vector<16x32xf32>
    %125 = vector.broadcast %9 : vector<1x32xf32> to vector<16x32xf32>
    %126 = arith.addf %124, %125 : vector<16x32xf32>
    %c1 = arith.constant 1 : index
    %c0_34 = arith.constant 0 : index
    %c0_35 = arith.constant 0 : index
    %127 = vector.load %arg3[%c1, %c0_34, %c0_35] : memref<2x32x96xbf16, #tpu.memory_space<vmem>>, vector<1x32x96xbf16>
    %128 = vector.shape_cast %127 : vector<1x32x96xbf16> to vector<32x96xbf16>
    %129 = vector.extract_strided_slice %5 {offsets = [1, 0], sizes = [1, 96], strides = [1, 1]} : vector<2x96xf32> to vector<1x96xf32>
    %c1_36 = arith.constant 1 : index
    %c0_37 = arith.constant 0 : index
    %c0_38 = arith.constant 0 : index
    %c0_39 = arith.constant 0 : index
    %130 = vector.load %arg5[%c1_36, %c0_37, %c0_38, %c0_39] : memref<2x4x8x32xbf16, #tpu.memory_space<vmem>>, vector<1x4x8x32xbf16>
    %131 = vector.shape_cast %130 : vector<1x4x8x32xbf16> to vector<4x8x32xbf16>
    %132 = vector.extract_strided_slice %128 {offsets = [0, 0], sizes = [32, 32], strides = [1, 1]} : vector<32x96xbf16> to vector<32x32xbf16>
    %133 = arith.truncf %106 : vector<16x32xf32> to vector<16x32xbf16>
    %cst_40 = arith.constant dense<0.000000e+00> : vector<16x32xf32>
    %134 = tpu.matmul %133, %132, %cst_40 {dimension_numbers = #tpu.dot_dimension_numbers<[1], [0], [0], [1], [0, 0, 1, 1], [], []>} : vector<16x32xbf16>, vector<32x32xbf16>, vector<16x32xf32> -> vector<16x32xf32>
    %135 = vector.extract_strided_slice %129 {offsets = [0, 0], sizes = [1, 32], strides = [1, 1]} : vector<1x96xf32> to vector<1x32xf32>
    %136 = vector.broadcast %135 : vector<1x32xf32> to vector<16x32xf32>
    %137 = arith.addf %134, %136 : vector<16x32xf32>
    %138 = vector.extract_strided_slice %128 {offsets = [0, 32], sizes = [32, 64], strides = [1, 1]} : vector<32x96xbf16> to vector<32x64xbf16>
    %139 = arith.truncf %126 : vector<16x32xf32> to vector<16x32xbf16>
    %cst_41 = arith.constant dense<0.000000e+00> : vector<16x64xf32>
    %140 = tpu.matmul %139, %138, %cst_41 {dimension_numbers = #tpu.dot_dimension_numbers<[1], [0], [0], [1], [0, 0, 1, 1], [], []>} : vector<16x32xbf16>, vector<32x64xbf16>, vector<16x64xf32> -> vector<16x64xf32>
    %141 = vector.extract_strided_slice %129 {offsets = [0, 32], sizes = [1, 64], strides = [1, 1]} : vector<1x96xf32> to vector<1x64xf32>
    %142 = vector.broadcast %141 : vector<1x64xf32> to vector<16x64xf32>
    %143 = arith.addf %140, %142 : vector<16x64xf32>
    %144 = vector.extract_strided_slice %137 {offsets = [0, 0], sizes = [16, 8], strides = [1, 1]} : vector<16x32xf32> to vector<16x8xf32>
    %145 = vector.extract_strided_slice %137 {offsets = [0, 8], sizes = [16, 8], strides = [1, 1]} : vector<16x32xf32> to vector<16x8xf32>
    %146 = vector.extract_strided_slice %137 {offsets = [0, 16], sizes = [16, 8], strides = [1, 1]} : vector<16x32xf32> to vector<16x8xf32>
    %147 = vector.extract_strided_slice %137 {offsets = [0, 24], sizes = [16, 8], strides = [1, 1]} : vector<16x32xf32> to vector<16x8xf32>
    %148 = vector.shape_cast %144 : vector<16x8xf32> to vector<1x16x8xf32>
    %149 = vector.shape_cast %145 : vector<16x8xf32> to vector<1x16x8xf32>
    %150 = vector.shape_cast %146 : vector<16x8xf32> to vector<1x16x8xf32>
    %151 = vector.shape_cast %147 : vector<16x8xf32> to vector<1x16x8xf32>
    %152 = tpu.concatenate %148, %149, %150, %151 in 0 : vector<1x16x8xf32>, vector<1x16x8xf32>, vector<1x16x8xf32>, vector<1x16x8xf32> -> vector<4x16x8xf32>
    %153 = vector.shape_cast %152 : vector<4x16x8xf32> to vector<8x8x8xf32>
    %154 = arith.truncf %153 : vector<8x8x8xf32> to vector<8x8x8xbf16>
    %155 = vector.extract_strided_slice %143 {offsets = [0, 0], sizes = [16, 8], strides = [1, 1]} : vector<16x64xf32> to vector<16x8xf32>
    %156 = vector.extract_strided_slice %143 {offsets = [0, 8], sizes = [16, 8], strides = [1, 1]} : vector<16x64xf32> to vector<16x8xf32>
    %157 = vector.extract_strided_slice %143 {offsets = [0, 16], sizes = [16, 8], strides = [1, 1]} : vector<16x64xf32> to vector<16x8xf32>
    %158 = vector.extract_strided_slice %143 {offsets = [0, 24], sizes = [16, 8], strides = [1, 1]} : vector<16x64xf32> to vector<16x8xf32>
    %159 = vector.shape_cast %155 : vector<16x8xf32> to vector<1x16x8xf32>
    %160 = vector.shape_cast %156 : vector<16x8xf32> to vector<1x16x8xf32>
    %161 = vector.shape_cast %157 : vector<16x8xf32> to vector<1x16x8xf32>
    %162 = vector.shape_cast %158 : vector<16x8xf32> to vector<1x16x8xf32>
    %163 = tpu.concatenate %159, %160, %161, %162 in 0 : vector<1x16x8xf32>, vector<1x16x8xf32>, vector<1x16x8xf32>, vector<1x16x8xf32> -> vector<4x16x8xf32>
    %164 = vector.shape_cast %163 : vector<4x16x8xf32> to vector<8x8x8xf32>
    %165 = arith.truncf %164 : vector<8x8x8xf32> to vector<8x8x8xbf16>
    %166 = vector.extract_strided_slice %143 {offsets = [0, 32], sizes = [16, 8], strides = [1, 1]} : vector<16x64xf32> to vector<16x8xf32>
    %167 = vector.extract_strided_slice %143 {offsets = [0, 40], sizes = [16, 8], strides = [1, 1]} : vector<16x64xf32> to vector<16x8xf32>
    %168 = vector.extract_strided_slice %143 {offsets = [0, 48], sizes = [16, 8], strides = [1, 1]} : vector<16x64xf32> to vector<16x8xf32>
    %169 = vector.extract_strided_slice %143 {offsets = [0, 56], sizes = [16, 8], strides = [1, 1]} : vector<16x64xf32> to vector<16x8xf32>
    %170 = vector.shape_cast %166 : vector<16x8xf32> to vector<1x16x8xf32>
    %171 = vector.shape_cast %167 : vector<16x8xf32> to vector<1x16x8xf32>
    %172 = vector.shape_cast %168 : vector<16x8xf32> to vector<1x16x8xf32>
    %173 = vector.shape_cast %169 : vector<16x8xf32> to vector<1x16x8xf32>
    %174 = tpu.concatenate %170, %171, %172, %173 in 0 : vector<1x16x8xf32>, vector<1x16x8xf32>, vector<1x16x8xf32>, vector<1x16x8xf32> -> vector<4x16x8xf32>
    %175 = vector.shape_cast %174 : vector<4x16x8xf32> to vector<8x8x8xf32>
    %176 = arith.truncf %175 : vector<8x8x8xf32> to vector<8x8x8xbf16>
    %cst_42 = arith.constant dense<0.000000e+00> : vector<8x8x8xf32>
    %177 = tpu.matmul %154, %165, %cst_42 {dimension_numbers = #tpu.dot_dimension_numbers<[2], [2], [1], [1], [0, 0, 0, 1, 1, 1], [0], [0]>} : vector<8x8x8xbf16>, vector<8x8x8xbf16>, vector<8x8x8xf32> -> vector<8x8x8xf32>
    %178 = vector.broadcast %22 : vector<1x8x8xf32> to vector<8x8x8xf32>
    %179 = arith.addf %177, %178 : vector<8x8x8xf32>
    %cst_43 = arith.constant dense<0xFF800000> : vector<8x8xf32>
    %180 = vector.multi_reduction <maximumf>, %179, %cst_43 [2] : vector<8x8x8xf32> to vector<8x8xf32>
    %181 = vector.shape_cast %180 : vector<8x8xf32> to vector<8x8x1xf32>
    %182 = vector.broadcast %181 : vector<8x8x1xf32> to vector<8x8x8xf32>
    %183 = arith.subf %179, %182 : vector<8x8x8xf32>
    %184 = math.exp %183 : vector<8x8x8xf32>
    %cst_44 = arith.constant dense<0.000000e+00> : vector<8x8xf32>
    %185 = vector.multi_reduction <add>, %184, %cst_44 [2] : vector<8x8x8xf32> to vector<8x8xf32>
    %186 = vector.shape_cast %185 : vector<8x8xf32> to vector<8x8x1xf32>
    %187 = tpu.reciprocal %186 {approx = true} : vector<8x8x1xf32> -> vector<8x8x1xf32>
    %188 = vector.broadcast %187 : vector<8x8x1xf32> to vector<8x8x8xf32>
    %189 = arith.mulf %184, %188 : vector<8x8x8xf32>
    %190 = arith.truncf %189 : vector<8x8x8xf32> to vector<8x8x8xbf16>
    %cst_45 = arith.constant dense<0.000000e+00> : vector<8x8x8xf32>
    %191 = tpu.matmul %190, %176, %cst_45 {dimension_numbers = #tpu.dot_dimension_numbers<[2], [1], [1], [2], [0, 0, 0, 1, 1, 2], [0], [0]>} : vector<8x8x8xbf16>, vector<8x8x8xbf16>, vector<8x8x8xf32> -> vector<8x8x8xf32>
    %192 = vector.shape_cast %191 : vector<8x8x8xf32> to vector<4x16x8xf32>
    %193 = arith.truncf %192 : vector<4x16x8xf32> to vector<4x16x8xbf16>
    %cst_46 = arith.constant dense<0.000000e+00> : vector<4x16x32xf32>
    %194 = tpu.matmul %193, %131, %cst_46 {dimension_numbers = #tpu.dot_dimension_numbers<[2], [1], [1], [2], [0, 0, 0, 1, 1, 2], [0], [0]>} : vector<4x16x8xbf16>, vector<4x8x32xbf16>, vector<4x16x32xf32> -> vector<4x16x32xf32>
    %cst_47 = arith.constant dense<0.000000e+00> : vector<16x32xf32>
    %195 = vector.multi_reduction <add>, %194, %cst_47 [0] : vector<4x16x32xf32> to vector<16x32xf32>
    %196 = vector.broadcast %13 : vector<1x32xf32> to vector<16x32xf32>
    %197 = arith.addf %195, %196 : vector<16x32xf32>
    %198 = arith.addf %106, %197 : vector<16x32xf32>
    %cst_48 = arith.constant dense<0.000000e+00> : vector<16xf32>
    %199 = vector.multi_reduction <add>, %198, %cst_48 [1] : vector<16x32xf32> to vector<16xf32>
    %200 = vector.shape_cast %199 : vector<16xf32> to vector<16x1xf32>
    %cst_49 = arith.constant 3.200000e+01 : f32
    %201 = vector.broadcast %cst_49 : f32 to vector<16x1xf32>
    %202 = arith.divf %200, %201 : vector<16x1xf32>
    %203 = vector.broadcast %202 : vector<16x1xf32> to vector<16x32xf32>
    %204 = arith.subf %198, %203 : vector<16x32xf32>
    %205 = arith.mulf %204, %204 : vector<16x32xf32>
    %cst_50 = arith.constant dense<0.000000e+00> : vector<16xf32>
    %206 = vector.multi_reduction <add>, %205, %cst_50 [1] : vector<16x32xf32> to vector<16xf32>
    %207 = vector.shape_cast %206 : vector<16xf32> to vector<16x1xf32>
    %cst_51 = arith.constant 3.200000e+01 : f32
    %208 = vector.broadcast %cst_51 : f32 to vector<16x1xf32>
    %209 = arith.divf %207, %208 : vector<16x1xf32>
    %cst_52 = arith.constant 9.99999974E-6 : f32
    %210 = vector.broadcast %cst_52 : f32 to vector<16x1xf32>
    %211 = arith.addf %209, %210 : vector<16x1xf32>
    %212 = math.rsqrt %211 : vector<16x1xf32>
    %213 = vector.broadcast %212 : vector<16x1xf32> to vector<16x32xf32>
    %214 = arith.mulf %204, %213 : vector<16x32xf32>
    %215 = vector.broadcast %10 : vector<1x32xf32> to vector<16x32xf32>
    %216 = arith.mulf %214, %215 : vector<16x32xf32>
    %217 = vector.broadcast %11 : vector<1x32xf32> to vector<16x32xf32>
    %218 = arith.addf %216, %217 : vector<16x32xf32>
    %c0_53 = arith.constant 0 : index
    %c0_54 = arith.constant 0 : index
    %c0_55 = arith.constant 0 : index
    %219 = vector.load %arg4[%c0_53, %c0_54, %c0_55] : memref<2x32x32xbf16, #tpu.memory_space<vmem>>, vector<1x32x32xbf16>
    %220 = vector.shape_cast %219 : vector<1x32x32xbf16> to vector<32x32xbf16>
    %221 = arith.truncf %218 : vector<16x32xf32> to vector<16x32xbf16>
    %cst_56 = arith.constant dense<0.000000e+00> : vector<16x32xf32>
    %222 = tpu.matmul %221, %220, %cst_56 {dimension_numbers = #tpu.dot_dimension_numbers<[1], [0], [0], [1], [0, 0, 1, 1], [], []>} : vector<16x32xbf16>, vector<32x32xbf16>, vector<16x32xf32> -> vector<16x32xf32>
    %223 = vector.broadcast %14 : vector<1x32xf32> to vector<16x32xf32>
    %224 = arith.addf %222, %223 : vector<16x32xf32>
    %cst_57 = arith.constant 0.000000e+00 : f32
    %225 = vector.broadcast %cst_57 : f32 to vector<16x32xf32>
    %226 = arith.maximumf %224, %225 : vector<16x32xf32>
    %c1_58 = arith.constant 1 : index
    %c0_59 = arith.constant 0 : index
    %c0_60 = arith.constant 0 : index
    %227 = vector.load %arg4[%c1_58, %c0_59, %c0_60] : memref<2x32x32xbf16, #tpu.memory_space<vmem>>, vector<1x32x32xbf16>
    %228 = vector.shape_cast %227 : vector<1x32x32xbf16> to vector<32x32xbf16>
    %229 = arith.truncf %226 : vector<16x32xf32> to vector<16x32xbf16>
    %cst_61 = arith.constant dense<0.000000e+00> : vector<16x32xf32>
    %230 = tpu.matmul %229, %228, %cst_61 {dimension_numbers = #tpu.dot_dimension_numbers<[1], [0], [0], [1], [0, 0, 1, 1], [], []>} : vector<16x32xbf16>, vector<32x32xbf16>, vector<16x32xf32> -> vector<16x32xf32>
    %231 = vector.broadcast %15 : vector<1x32xf32> to vector<16x32xf32>
    %232 = arith.addf %230, %231 : vector<16x32xf32>
    %233 = arith.addf %218, %232 : vector<16x32xf32>
    %234 = vector.shape_cast %233 : vector<16x32xf32> to vector<2x8x32xf32>
    %c0_62 = arith.constant 0 : index
    %c0_63 = arith.constant 0 : index
    %c0_64 = arith.constant 0 : index
    %235 = vector.load %arg8[%c0_62, %c0_63, %c0_64] : memref<2x8x32xf32, #tpu.memory_space<vmem>>, vector<2x8x32xf32>
    tpu.vector_store %arg8[%c0_62, %c0_63, %c0_64], %234 {strides = array<i32>} : memref<2x8x32xf32, #tpu.memory_space<vmem>>, vector<2x8x32xf32>,
    return
  }
  func.func @transform_0(%arg0: i32) -> (i32, i32, i32) {
    %c0_i32 = arith.constant 0 : i32
    %c0_i32_0 = arith.constant 0 : i32
    %c0_i32_1 = arith.constant 0 : i32
    return %arg0, %c0_i32, %c0_i32_0 : i32, i32, i32
  }
  func.func @transform_1(%arg0: i32) -> (i32, i32, i32) {
    %c0_i32 = arith.constant 0 : i32
    %c0_i32_0 = arith.constant 0 : i32
    %c0_i32_1 = arith.constant 0 : i32
    return %arg0, %c0_i32, %c0_i32_0 : i32, i32, i32
  }
  func.func @transform_2(%arg0: i32) -> (i32, i32, i32) {
    %c0_i32 = arith.constant 0 : i32
    %c0_i32_0 = arith.constant 0 : i32
    %c0_i32_1 = arith.constant 0 : i32
    %c0_i32_2 = arith.constant 0 : i32
    return %c0_i32, %c0_i32_0, %c0_i32_1 : i32, i32, i32
  }
  func.func @transform_3(%arg0: i32) -> (i32, i32, i32) {
    %c0_i32 = arith.constant 0 : i32
    %c0_i32_0 = arith.constant 0 : i32
    %c0_i32_1 = arith.constant 0 : i32
    %c0_i32_2 = arith.constant 0 : i32
    return %c0_i32, %c0_i32_0, %c0_i32_1 : i32, i32, i32
  }
  func.func @transform_4(%arg0: i32) -> (i32, i32, i32, i32) {
    %c0_i32 = arith.constant 0 : i32
    %c0_i32_0 = arith.constant 0 : i32
    %c0_i32_1 = arith.constant 0 : i32
    %c0_i32_2 = arith.constant 0 : i32
    %c0_i32_3 = arith.constant 0 : i32
    return %c0_i32, %c0_i32_0, %c0_i32_1, %c0_i32_2 : i32, i32, i32, i32
  }
  func.func @transform_5(%arg0: i32) -> (i32, i32) {
    %c0_i32 = arith.constant 0 : i32
    %c0_i32_0 = arith.constant 0 : i32
    %c0_i32_1 = arith.constant 0 : i32
    return %c0_i32, %c0_i32_0 : i32, i32
  }
  func.func @transform_6(%arg0: i32) -> (i32, i32) {
    %c0_i32 = arith.constant 0 : i32
    %c0_i32_0 = arith.constant 0 : i32
    %c0_i32_1 = arith.constant 0 : i32
    return %c0_i32, %c0_i32_0 : i32, i32
  }
  func.func @transform_7(%arg0: i32) -> (i32, i32, i32) {
    %c0_i32 = arith.constant 0 : i32
    %c0_i32_0 = arith.constant 0 : i32
    %c0_i32_1 = arith.constant 0 : i32
    return %arg0, %c0_i32, %c0_i32_0 : i32, i32, i32
  }
}

</mosaic_0001>

<llo_original>
// kernel: tpu_custom_call.1
$region0: #{tpu_custom_call.1}
  #allocation0 [shape = 'u32[]', space=smem, size = 0x4, offset = 0x4, fixed_abs, tag = 'smem constant byte address 0x4 - core index']
  #allocation1 [shape = 'u32[144,128]{1,0:T(1,128)}', space=vmem, size = 0x12000, scoped, tag = 'internal scratch']
  %s0 = inlined_call_operand.hbm [shape: f32[2,8,32], index: 0, kind: input, shape index: {}]
  %s1 = inlined_call_operand.hbm [shape: f32[2,8,32], index: 1, kind: input, shape index: {}]
  %s2 = inlined_call_operand.hbm [shape: bf16[2,32,96], index: 2, kind: input, shape index: {}]
  %s3 = inlined_call_operand.hbm [shape: bf16[2,32,32], index: 3, kind: input, shape index: {}]
  %s4 = inlined_call_operand.hbm [shape: bf16[2,4,8,32], index: 4, kind: input, shape index: {}]
  %s5 = inlined_call_operand.vmem [shape: f32[2,96], index: 5, kind: input, shape index: {}]
  %s6 = inlined_call_operand.vmem [shape: f32[10,32], index: 6, kind: input, shape index: {}]
  %s7 = inlined_call_operand.hbm [shape: f32[2,8,32], index: 7, kind: output, shape index: {}]
  %s8 = sld [smem:[#allocation0]]
  $region58: #{tpu_custom_call.1} parent=0
    _
  %s10 = ssub.s32 1, %s8
  %s11 = scalar_select 0, %s10, %s8
  $region1: #{tpu_custom_call.1} parent=0
    #allocation2 [shape = 'u8[8192]{0}', space=vmem, size = 0x2000, scoped, tag = 'input window, operand 0, single buffered']
    #allocation3 [shape = 's32[1]{0}', space=sflag, size = 0x4, scoped, tag = 'scoped memory for tpu_custom_call.1']
    #allocation4 [shape = 's32[1]{0}', space=sflag, size = 0x4, scoped, tag = 'scoped memory for tpu_custom_call.1']
    #allocation5 [shape = 'u8[8192]{0}', space=vmem, size = 0x2000, scoped, tag = 'input window, operand 1, single buffered']
    #allocation6 [shape = 's32[1]{0}', space=sflag, size = 0x4, scoped, tag = 'scoped memory for tpu_custom_call.1']
    #allocation7 [shape = 'u8[16384]{0}', space=vmem, size = 0x4000, scoped, tag = 'input window, operand 2, single buffered']
    #allocation8 [shape = 'u8[16384]{0}', space=vmem, size = 0x4000, scoped, tag = 'input window, operand 3, single buffered']
    #allocation9 [shape = 's32[1]{0}', space=sflag, size = 0x4, scoped, tag = 'scoped memory for tpu_custom_call.1']
    #allocation10 [shape = 'u8[16384]{0}', space=vmem, size = 0x4000, scoped, tag = 'input window, operand 4, single buffered']
    #allocation11 [shape = 'u8[8192]{0}', space=vmem, size = 0x2000, scoped, tag = 'output window, operand 0, single buffered']
    %12 = vsyncpa [#allocation3], 0
    %13 = vsyncpa [#allocation6], 0
    %14 = vsyncpa [#allocation9], 0
    %15 = vsyncpa [#allocation4], 0
    // Predicated region
    $region2: #{tpu_custom_call.1} parent=1 // pred_check
      _
    $region3: #{tpu_custom_call.1} parent=1 // pred_check_branch
      %17 = sbr.rel (0) target = $region5
    $region4: #{tpu_custom_call.1} parent=1 // pred_region
      %s19 = ssub.s32 256, 256
      %20 = vsyncadd [#allocation3], %s19
      %s21 = sshll.u32 [#allocation2], 4
      %s22 = int_to_ptr.vmem [resolvable:$true] %s21
      %27 = dma.hbm_to_vmem [thread:$0]  %s0, 256, %s22, [#allocation3], 128, 128, 8
    $region5: #{tpu_custom_call.1} parent=1 // pred_fallthru
      _
    // Predicated region
    $region6: #{tpu_custom_call.1} parent=1 // pred_check
      _
    $region7: #{tpu_custom_call.1} parent=1 // pred_check_branch
      %29 = sbr.rel (0) target = $region9
    $region8: #{tpu_custom_call.1} parent=1 // pred_region
      %s31 = ssub.s32 256, 256
      %32 = vsyncadd [#allocation6], %s31
      %s33 = sshll.u32 [#allocation5], 4
      %s34 = int_to_ptr.vmem [resolvable:$true] %s33
      %39 = dma.hbm_to_vmem [thread:$0]  %s1, 256, %s34, [#allocation6], 128, 128, 8
    $region9: #{tpu_custom_call.1} parent=1 // pred_fallthru
      _
    // Predicated region
    $region10: #{tpu_custom_call.1} parent=1 // pred_check
      _
    $region11: #{tpu_custom_call.1} parent=1 // pred_check_branch
      %41 = sbr.rel (0) target = $region13
    $region12: #{tpu_custom_call.1} parent=1 // pred_region
      %s43 = ssub.s32 512, 512
      %44 = vsyncadd [#allocation6], %s43
      %s45 = sshll.u32 [#allocation7], 4
      %s46 = int_to_ptr.vmem [resolvable:$true] %s45
      %51 = dma.hbm_to_vmem [thread:$0]  %s2, 512, %s46, [#allocation6], 64, 64, 4
    $region13: #{tpu_custom_call.1} parent=1 // pred_fallthru
      _
    // Predicated region
    $region14: #{tpu_custom_call.1} parent=1 // pred_check
      _
    $region15: #{tpu_custom_call.1} parent=1 // pred_check_branch
      %53 = sbr.rel (0) target = $region17
    $region16: #{tpu_custom_call.1} parent=1 // pred_region
      %s55 = ssub.s32 512, 512
      %56 = vsyncadd [#allocation9], %s55
      %s57 = sshll.u32 [#allocation8], 4
      %s58 = int_to_ptr.vmem [resolvable:$true] %s57
      %63 = dma.hbm_to_vmem [thread:$0]  %s3, 512, %s58, [#allocation9], 64, 64, 4
    $region17: #{tpu_custom_call.1} parent=1 // pred_fallthru
      _
    // Predicated region
    $region18: #{tpu_custom_call.1} parent=1 // pred_check
      _
    $region19: #{tpu_custom_call.1} parent=1 // pred_check_branch
      %65 = sbr.rel (0) target = $region21
    $region20: #{tpu_custom_call.1} parent=1 // pred_region
      %s67 = ssub.s32 512, 512
      %68 = vsyncadd [#allocation9], %s67
      %s69 = sshll.u32 [#allocation10], 4
      %s70 = int_to_ptr.vmem [resolvable:$true] %s69
      %75 = dma.hbm_to_vmem [thread:$0]  %s4, 512, %s70, [#allocation9], 64, 64, 4
    $region21: #{tpu_custom_call.1} parent=1 // pred_fallthru
      _
    // Predicated region
    $region22: #{tpu_custom_call.1} parent=1 // pred_check
      _
    $region23: #{tpu_custom_call.1} parent=1 // pred_check_branch
      %77 = sbr.rel (0) target = $region25
    $region24: #{tpu_custom_call.1} parent=1 // pred_region
      _
    $region25: #{tpu_custom_call.1} parent=1 // pred_fallthru
      _
    // Predicated region
    $region26: #{tpu_custom_call.1} parent=1 // pred_check
      _
    $region27: #{tpu_custom_call.1} parent=1 // pred_check_branch
      %79 = sbr.rel (0) target = $region29
    $region28: #{tpu_custom_call.1} parent=1 // pred_region
      _
    $region29: #{tpu_custom_call.1} parent=1 // pred_fallthru
      _
    // Predicated region
    $region30: #{tpu_custom_call.1} parent=1 // pred_check
      _
    $region31: #{tpu_custom_call.1} parent=1 // pred_check_branch
      %81 = sbr.rel (0) target = $region33
    $region32: #{tpu_custom_call.1} parent=1 // pred_region
      %82 = dma.done [#allocation3], 256
    $region33: #{tpu_custom_call.1} parent=1 // pred_fallthru
      _
    // Predicated region
    $region34: #{tpu_custom_call.1} parent=1 // pred_check
      _
    $region35: #{tpu_custom_call.1} parent=1 // pred_check_branch
      %84 = sbr.rel (0) target = $region37
    $region36: #{tpu_custom_call.1} parent=1 // pred_region
      %85 = dma.done [#allocation6], 256
    $region37: #{tpu_custom_call.1} parent=1 // pred_fallthru
      _
    // Predicated region
    $region38: #{tpu_custom_call.1} parent=1 // pred_check
      _
    $region39: #{tpu_custom_call.1} parent=1 // pred_check_branch
      %87 = sbr.rel (0) target = $region41
    $region40: #{tpu_custom_call.1} parent=1 // pred_region
      %88 = dma.done [#allocation6], 512
    $region41: #{tpu_custom_call.1} parent=1 // pred_fallthru
      _
    // Predicated region
    $region42: #{tpu_custom_call.1} parent=1 // pred_check
      _
    $region43: #{tpu_custom_call.1} parent=1 // pred_check_branch
      %90 = sbr.rel (0) target = $region45
    $region44: #{tpu_custom_call.1} parent=1 // pred_region
      %91 = dma.done [#allocation9], 512
    $region45: #{tpu_custom_call.1} parent=1 // pred_fallthru
      _
    // Predicated region
    $region46: #{tpu_custom_call.1} parent=1 // pred_check
      _
    $region47: #{tpu_custom_call.1} parent=1 // pred_check_branch
      %93 = sbr.rel (0) target = $region49
    $region48: #{tpu_custom_call.1} parent=1 // pred_region
      %94 = dma.done [#allocation9], 512
    $region49: #{tpu_custom_call.1} parent=1 // pred_fallthru
      _
    %v96 = vld [vmem:[#allocation2] sm:$0xff]
    %v97 = vld [vmem:[#allocation2 + $0x8] sm:$0xff]
    %v98 = vld [vmem:[#allocation5] sm:$0xff]
    %v99 = vld [vmem:[#allocation5 + $0x8] sm:$0xff]
    %v100 = vld [vmem:[%s6] sm:$0xff]
    %v101 = vld [vmem:[%s6 + $0x8] sm:$0x3]
    %v102 = vld [vmem:[%s5] sm:$0x3]
    %v103 = vlaneseq
    %v104 = vshrl.u32 %v103, 7
    %v105 = vlaneseq
    %v106 = vand.u32 %v105, 127
    %vm107 = vcmp.gt.s32.totalorder %v106, %v104
    %v108 = vsel %vm107, -1e+30, 0.0
    %vm109 = vcmask 261120
    %v110 = vsel %vm109, %v96, 0.0
    %111 = vadd.xlane.f32.xlu0 %v110
    %v112 = vpop.xlane.xlu0 %111
    %v113 = vsel %vm109, %v97, 0.0
    %114 = vadd.xlane.f32.xlu0 %v113
    %v115 = vpop.xlane.xlu0 %114
    %v116 = vrcp.pop 32.0
    %v117 = vmul.f32 %v112, %v116
    %v118 = vmul.f32 %v115, %v116
    %v119 = vsub.f32 %v96, %v117
    %v120 = vsub.f32 %v97, %v118
    %v121 = vmul.f32 %v119, %v119
    %v122 = vmul.f32 %v120, %v120
    %v123 = vsel %vm109, %v121, 0.0
    %124 = vadd.xlane.f32.xlu0 %v123
    %v125 = vpop.xlane.xlu0 %124
    %v126 = vsel %vm109, %v122, 0.0
    %127 = vadd.xlane.f32.xlu0 %v126
    %v128 = vpop.xlane.xlu0 %127
    %v129 = vmul.f32 %v125, %v116
    %v130 = vmul.f32 %v128, %v116
    %v131 = vadd.f32 %v129, 1e-05
    %v132 = vadd.f32 %v130, 1e-05
    %v133 = vrsqrt.pop %v131
    %v134 = vrsqrt.pop %v132
    %v135 = vmul.f32 %v119, %v133
    %v136 = vmul.f32 %v120, %v134
    %v137 = vlaneseq
    %v138 = vshrl.u32 %v137, 7
    %v139 = vsub.s32 0, %v138
    %v140 = vrot.slane %v100, %v139
    %v141 = vmul.f32 %v135, %v140
    %v142 = vmul.f32 %v136, %v140
    %v143 = vlaneseq
    %v144 = vshrl.u32 %v143, 7
    %v145 = vsub.s32 1, %v144
    %v146 = vrot.slane %v100, %v145
    %v147 = vadd.f32 %v141, %v146
    %v148 = vadd.f32 %v142, %v146
    %v149 = vld [vmem:[#allocation7] sm:$0xf]
    %v150 = vld [vmem:[#allocation7 + $0x4] sm:$0xf]
    %v151 = vld [vmem:[#allocation7 + $0x8] sm:$0xf]
    %v152 = vld [vmem:[#allocation7 + $0xc] sm:$0xf]
    %v153 = vld [vmem:[#allocation10] sm:$0xf]
    %v154 = vld [vmem:[#allocation10 + $0x4] sm:$0xf]
    %v155 = vld [vmem:[#allocation10 + $0x8] sm:$0xf]
    %v156 = vld [vmem:[#allocation10 + $0xc] sm:$0xf]
    %v157 = vpack.c.bf16 %v148, %v147
    %v158 = vlaneseq
    %v159 = vshrl.u32 %v158, 7
    %v160 = vsub.s32 0, %v159
    %v161 = vrot.slane %v102, %v160
    %v166 = vunpack.c.l.b16 %v149
    %v167 = vunpack.c.l.b16 %v150
    %v168 = vunpack.c.l.b16 %v151
    %v169 = vunpack.c.l.b16 %v152
    %v170 = vpack.c.b16 %v167, %v166
    %v171 = vpack.c.b16 %v169, %v168
    %v175 = vsel %vm109, %v157, 0
    %177 = vmatprep.subr.bf16.mxu0 0
    %178 = vmatpush1.bf16.msra.mxu0 %v170
    %179 = vmatprep.subr.bf16.mxu0 0
    %180 = vmatpush1.bf16.msra.mxu0 %v171
    %181 = vmatprep.subr.bf16.mxu0 0
    %182 = vmatpush1.bf16.msra.mxu0 0
    %183 = vmatprep.subr.bf16.mxu0 0
    %184 = vmatpush1.bf16.msra.mxu0 0
    %185 = vmatprep.subr.bf16.mxu0 0
    %186 = vmatpush1.bf16.msra.mxu0 0
    %187 = vmatprep.subr.bf16.mxu0 0
    %188 = vmatpush1.bf16.msra.mxu0 0
    %189 = vmatprep.subr.bf16.mxu0 0
    %190 = vmatpush1.bf16.msra.mxu0 0
    %191 = vmatprep.subr.bf16.mxu0 0
    %192 = vmatpush1.bf16.msra.mxu0 0
    %193 = vmatprep.subr.bf16.mxu0 0
    %194 = vmatpush1.bf16.msra.mxu0 0
    %195 = vmatprep.subr.bf16.mxu0 0
    %196 = vmatpush1.bf16.msra.mxu0 0
    %197 = vmatprep.subr.bf16.mxu0 0
    %198 = vmatpush1.bf16.msra.mxu0 0
    %199 = vmatprep.subr.bf16.mxu0 0
    %200 = vmatpush1.bf16.msra.mxu0 0
    %201 = vmatprep.subr.bf16.mxu0 0
    %202 = vmatpush1.bf16.msra.mxu0 0
    %203 = vmatprep.subr.bf16.mxu0 0
    %204 = vmatpush1.bf16.msra.mxu0 0
    %205 = vmatprep.subr.bf16.mxu0 0
    %206 = vmatpush1.bf16.msra.mxu0 0
    %207 = vmatprep.subr.bf16.mxu0 0
    %208 = vmatpush1.bf16.msra.mxu0 0
    %209 = vmatprep.mubr.bf16.mxu0 0
    %210 = vmatmul.mubr.bf16.gmra.mrb[0].mxu0 %v175
    %v211 = vpop.f32.mrb[0].mxu0
    %v212 = vadd.f32 %v161, %v211
    %v213 = vpop.f32.mrb[0].mxu0
    %v214 = vpop.f32.mrb[0].mxu0
    %v215 = vadd.f32 %v161, %v214
    %v216 = vpop.f32.mrb[0].mxu0
    %217 = vdwg.mxu0
    %220 = vrot.lane.b32.xlu0 %v212, 120
    %v221 = vpop.permute.xlu0 %220
    %222 = vrot.lane.b32.xlu0 %v215, 120
    %v223 = vpop.permute.xlu0 %222
    %226 = vrot.lane.b32.xlu0 %v212, 112
    %v227 = vpop.permute.xlu0 %226
    %228 = vrot.lane.b32.xlu0 %v215, 112
    %v229 = vpop.permute.xlu0 %228
    %232 = vrot.lane.b32.xlu0 %v212, 104
    %v233 = vpop.permute.xlu0 %232
    %234 = vrot.lane.b32.xlu0 %v215, 104
    %v235 = vpop.permute.xlu0 %234
    %v238 = vpack.c.bf16 %v212, %v212
    %v239 = vpack.c.bf16 %v215, %v215
    %v240 = vpack.c.bf16 %v221, %v221
    %v241 = vpack.c.bf16 %v223, %v223
    %v242 = vpack.c.bf16 %v227, %v227
    %v243 = vpack.c.bf16 %v229, %v229
    %v244 = vpack.c.bf16 %v233, %v233
    %v245 = vpack.c.bf16 %v235, %v235
    %247 = vrot.lane.b32.xlu0 %v238, 96
    %v248 = vpop.permute.xlu0 %247
    %vm249 = vcmask 64512
    %v251 = vsel %vm249, %v238, 0
    %v254 = vsel %vm249, %v248, 0
    %256 = vmatprep.subr.bf16.mxu0 0
    %257 = vmatpush1.bf16.xpose.msra.mxu0 %v254
    %258 = vmatprep.subr.bf16.mxu0 0
    %259 = vmatpush1.bf16.xpose.msra.mxu0 0
    %260 = vmatprep.subr.bf16.mxu0 0
    %261 = vmatpush1.bf16.xpose.msra.mxu0 0
    %262 = vmatprep.subr.bf16.mxu0 0
    %263 = vmatpush1.bf16.xpose.msra.mxu0 0
    %264 = vmatprep.subr.bf16.mxu0 0
    %265 = vmatpush1.bf16.xpose.msra.mxu0 0
    %266 = vmatprep.subr.bf16.mxu0 0
    %267 = vmatpush1.bf16.xpose.msra.mxu0 0
    %268 = vmatprep.subr.bf16.mxu0 0
    %269 = vmatpush1.bf16.xpose.msra.mxu0 0
    %270 = vmatprep.subr.bf16.mxu0 0
    %271 = vmatpush1.bf16.xpose.msra.mxu0 0
    %272 = vmatprep.subr.bf16.mxu0 0
    %273 = vmatpush1.bf16.xpose.msra.mxu0 0
    %274 = vmatprep.subr.bf16.mxu0 0
    %275 = vmatpush1.bf16.xpose.msra.mxu0 0
    %276 = vmatprep.subr.bf16.mxu0 0
    %277 = vmatpush1.bf16.xpose.msra.mxu0 0
    %278 = vmatprep.subr.bf16.mxu0 0
    %279 = vmatpush1.bf16.xpose.msra.mxu0 0
    %280 = vmatprep.subr.bf16.mxu0 0
    %281 = vmatpush1.bf16.xpose.msra.mxu0 0
    %282 = vmatprep.subr.bf16.mxu0 0
    %283 = vmatpush1.bf16.xpose.msra.mxu0 0
    %284 = vmatprep.subr.bf16.mxu0 0
    %285 = vmatpush1.bf16.xpose.msra.mxu0 0
    %286 = vmatprep.subr.bf16.mxu0 0
    %287 = vmatpush1.bf16.xpose.msra.mxu0 0
    %288 = vmatprep.mubr.bf16.mxu0 0
    %289 = vmatmul.mubr.bf16.gmra.mrb[0].mxu0 %v251
    %v290 = vpop.f32.mrb[0].mxu0
    %v291 = vadd.f32 %v108, %v290
    %v292 = vpop.f32.mrb[0].mxu0
    %v293 = vpop.f32.mrb[0].mxu0
    %v294 = vpop.f32.mrb[0].mxu0
    %295 = vdwg.mxu0
    %297 = vrot.lane.b32.xlu0 %v239, 96
    %v298 = vpop.permute.xlu0 %297
    %v300 = vsel %vm249, %v239, 0
    %v303 = vsel %vm249, %v298, 0
    %305 = vmatprep.subr.bf16.mxu0 0
    %306 = vmatpush1.bf16.xpose.msra.mxu0 %v303
    %307 = vmatprep.subr.bf16.mxu0 0
    %308 = vmatpush1.bf16.xpose.msra.mxu0 0
    %309 = vmatprep.subr.bf16.mxu0 0
    %310 = vmatpush1.bf16.xpose.msra.mxu0 0
    %311 = vmatprep.subr.bf16.mxu0 0
    %312 = vmatpush1.bf16.xpose.msra.mxu0 0
    %313 = vmatprep.subr.bf16.mxu0 0
    %314 = vmatpush1.bf16.xpose.msra.mxu0 0
    %315 = vmatprep.subr.bf16.mxu0 0
    %316 = vmatpush1.bf16.xpose.msra.mxu0 0
    %317 = vmatprep.subr.bf16.mxu0 0
    %318 = vmatpush1.bf16.xpose.msra.mxu0 0
    %319 = vmatprep.subr.bf16.mxu0 0
    %320 = vmatpush1.bf16.xpose.msra.mxu0 0
    %321 = vmatprep.subr.bf16.mxu0 0
    %322 = vmatpush1.bf16.xpose.msra.mxu0 0
    %323 = vmatprep.subr.bf16.mxu0 0
    %324 = vmatpush1.bf16.xpose.msra.mxu0 0
    %325 = vmatprep.subr.bf16.mxu0 0
    %326 = vmatpush1.bf16.xpose.msra.mxu0 0
    %327 = vmatprep.subr.bf16.mxu0 0
    %328 = vmatpush1.bf16.xpose.msra.mxu0 0
    %329 = vmatprep.subr.bf16.mxu0 0
    %330 = vmatpush1.bf16.xpose.msra.mxu0 0
    %331 = vmatprep.subr.bf16.mxu0 0
    %332 = vmatpush1.bf16.xpose.msra.mxu0 0
    %333 = vmatprep.subr.bf16.mxu0 0
    %334 = vmatpush1.bf16.xpose.msra.mxu0 0
    %335 = vmatprep.subr.bf16.mxu0 0
    %336 = vmatpush1.bf16.xpose.msra.mxu0 0
    %337 = vmatprep.mubr.bf16.mxu0 0
    %338 = vmatmul.mubr.bf16.gmra.mrb[0].mxu0 %v300
    %v339 = vpop.f32.mrb[0].mxu0
    %v340 = vadd.f32 %v108, %v339
    %v341 = vpop.f32.mrb[0].mxu0
    %v342 = vpop.f32.mrb[0].mxu0
    %v343 = vpop.f32.mrb[0].mxu0
    %344 = vdwg.mxu0
    %346 = vrot.lane.b32.xlu0 %v240, 96
    %v347 = vpop.permute.xlu0 %346
    %v349 = vsel %vm249, %v240, 0
    %v352 = vsel %vm249, %v347, 0
    %354 = vmatprep.subr.bf16.mxu0 0
    %355 = vmatpush1.bf16.xpose.msra.mxu0 %v352
    %356 = vmatprep.subr.bf16.mxu0 0
    %357 = vmatpush1.bf16.xpose.msra.mxu0 0
    %358 = vmatprep.subr.bf16.mxu0 0
    %359 = vmatpush1.bf16.xpose.msra.mxu0 0
    %360 = vmatprep.subr.bf16.mxu0 0
    %361 = vmatpush1.bf16.xpose.msra.mxu0 0
    %362 = vmatprep.subr.bf16.mxu0 0
    %363 = vmatpush1.bf16.xpose.msra.mxu0 0
    %364 = vmatprep.subr.bf16.mxu0 0
    %365 = vmatpush1.bf16.xpose.msra.mxu0 0
    %366 = vmatprep.subr.bf16.mxu0 0
    %367 = vmatpush1.bf16.xpose.msra.mxu0 0
    %368 = vmatprep.subr.bf16.mxu0 0
    %369 = vmatpush1.bf16.xpose.msra.mxu0 0
    %370 = vmatprep.subr.bf16.mxu0 0
    %371 = vmatpush1.bf16.xpose.msra.mxu0 0
    %372 = vmatprep.subr.bf16.mxu0 0
    %373 = vmatpush1.bf16.xpose.msra.mxu0 0
    %374 = vmatprep.subr.bf16.mxu0 0
    %375 = vmatpush1.bf16.xpose.msra.mxu0 0
    %376 = vmatprep.subr.bf16.mxu0 0
    %377 = vmatpush1.bf16.xpose.msra.mxu0 0
    %378 = vmatprep.subr.bf16.mxu0 0
    %379 = vmatpush1.bf16.xpose.msra.mxu0 0
    %380 = vmatprep.subr.bf16.mxu0 0
    %381 = vmatpush1.bf16.xpose.msra.mxu0 0
    %382 = vmatprep.subr.bf16.mxu0 0
    %383 = vmatpush1.bf16.xpose.msra.mxu0 0
    %384 = vmatprep.subr.bf16.mxu0 0
    %385 = vmatpush1.bf16.xpose.msra.mxu0 0
    %386 = vmatprep.mubr.bf16.mxu0 0
    %387 = vmatmul.mubr.bf16.gmra.mrb[0].mxu0 %v349
    %v388 = vpop.f32.mrb[0].mxu0
    %v389 = vadd.f32 %v108, %v388
    %v390 = vpop.f32.mrb[0].mxu0
    %v391 = vpop.f32.mrb[0].mxu0
    %v392 = vpop.f32.mrb[0].mxu0
    %393 = vdwg.mxu0
    %395 = vrot.lane.b32.xlu0 %v241, 96
    %v396 = vpop.permute.xlu0 %395
    %v398 = vsel %vm249, %v241, 0
    %v401 = vsel %vm249, %v396, 0
    %403 = vmatprep.subr.bf16.mxu0 0
    %404 = vmatpush1.bf16.xpose.msra.mxu0 %v401
    %405 = vmatprep.subr.bf16.mxu0 0
    %406 = vmatpush1.bf16.xpose.msra.mxu0 0
    %407 = vmatprep.subr.bf16.mxu0 0
    %408 = vmatpush1.bf16.xpose.msra.mxu0 0
    %409 = vmatprep.subr.bf16.mxu0 0
    %410 = vmatpush1.bf16.xpose.msra.mxu0 0
    %411 = vmatprep.subr.bf16.mxu0 0
    %412 = vmatpush1.bf16.xpose.msra.mxu0 0
    %413 = vmatprep.subr.bf16.mxu0 0
    %414 = vmatpush1.bf16.xpose.msra.mxu0 0
    %415 = vmatprep.subr.bf16.mxu0 0
    %416 = vmatpush1.bf16.xpose.msra.mxu0 0
    %417 = vmatprep.subr.bf16.mxu0 0
    %418 = vmatpush1.bf16.xpose.msra.mxu0 0
    %419 = vmatprep.subr.bf16.mxu0 0
    %420 = vmatpush1.bf16.xpose.msra.mxu0 0
    %421 = vmatprep.subr.bf16.mxu0 0
    %422 = vmatpush1.bf16.xpose.msra.mxu0 0
    %423 = vmatprep.subr.bf16.mxu0 0
    %424 = vmatpush1.bf16.xpose.msra.mxu0 0
    %425 = vmatprep.subr.bf16.mxu0 0
    %426 = vmatpush1.bf16.xpose.msra.mxu0 0
    %427 = vmatprep.subr.bf16.mxu0 0
    %428 = vmatpush1.bf16.xpose.msra.mxu0 0
    %429 = vmatprep.subr.bf16.mxu0 0
    %430 = vmatpush1.bf16.xpose.msra.mxu0 0
    %431 = vmatprep.subr.bf16.mxu0 0
    %432 = vmatpush1.bf16.xpose.msra.mxu0 0
    %433 = vmatprep.subr.bf16.mxu0 0
    %434 = vmatpush1.bf16.xpose.msra.mxu0 0
    %435 = vmatprep.mubr.bf16.mxu0 0
    %436 = vmatmul.mubr.bf16.gmra.mrb[0].mxu0 %v398
    %v437 = vpop.f32.mrb[0].mxu0
    %v438 = vadd.f32 %v108, %v437
    %v439 = vpop.f32.mrb[0].mxu0
    %v440 = vpop.f32.mrb[0].mxu0
    %v441 = vpop.f32.mrb[0].mxu0
    %442 = vdwg.mxu0
    %444 = vrot.lane.b32.xlu0 %v242, 96
    %v445 = vpop.permute.xlu0 %444
    %v447 = vsel %vm249, %v242, 0
    %v450 = vsel %vm249, %v445, 0
    %452 = vmatprep.subr.bf16.mxu0 0
    %453 = vmatpush1.bf16.xpose.msra.mxu0 %v450
    %454 = vmatprep.subr.bf16.mxu0 0
    %455 = vmatpush1.bf16.xpose.msra.mxu0 0
    %456 = vmatprep.subr.bf16.mxu0 0
    %457 = vmatpush1.bf16.xpose.msra.mxu0 0
    %458 = vmatprep.subr.bf16.mxu0 0
    %459 = vmatpush1.bf16.xpose.msra.mxu0 0
    %460 = vmatprep.subr.bf16.mxu0 0
    %461 = vmatpush1.bf16.xpose.msra.mxu0 0
    %462 = vmatprep.subr.bf16.mxu0 0
    %463 = vmatpush1.bf16.xpose.msra.mxu0 0
    %464 = vmatprep.subr.bf16.mxu0 0
    %465 = vmatpush1.bf16.xpose.msra.mxu0 0
    %466 = vmatprep.subr.bf16.mxu0 0
    %467 = vmatpush1.bf16.xpose.msra.mxu0 0
    %468 = vmatprep.subr.bf16.mxu0 0
    %469 = vmatpush1.bf16.xpose.msra.mxu0 0
    %470 = vmatprep.subr.bf16.mxu0 0
    %471 = vmatpush1.bf16.xpose.msra.mxu0 0
    %472 = vmatprep.subr.bf16.mxu0 0
    %473 = vmatpush1.bf16.xpose.msra.mxu0 0
    %474 = vmatprep.subr.bf16.mxu0 0
    %475 = vmatpush1.bf16.xpose.msra.mxu0 0
    %476 = vmatprep.subr.bf16.mxu0 0
    %477 = vmatpush1.bf16.xpose.msra.mxu0 0
    %478 = vmatprep.subr.bf16.mxu0 0
    %479 = vmatpush1.bf16.xpose.msra.mxu0 0
    %480 = vmatprep.subr.bf16.mxu0 0
    %481 = vmatpush1.bf16.xpose.msra.mxu0 0
    %482 = vmatprep.subr.bf16.mxu0 0
    %483 = vmatpush1.bf16.xpose.msra.mxu0 0
    %484 = vmatprep.mubr.bf16.mxu0 0
    %485 = vmatmul.mubr.bf16.gmra.mrb[0].mxu0 %v447
    %v486 = vpop.f32.mrb[0].mxu0
    %v487 = vadd.f32 %v108, %v486
    %v488 = vpop.f32.mrb[0].mxu0
    %v489 = vpop.f32.mrb[0].mxu0
    %v490 = vpop.f32.mrb[0].mxu0
    %491 = vdwg.mxu0
    %493 = vrot.lane.b32.xlu0 %v243, 96
    %v494 = vpop.permute.xlu0 %493
    %v496 = vsel %vm249, %v243, 0
    %v499 = vsel %vm249, %v494, 0
    %501 = vmatprep.subr.bf16.mxu0 0
    %502 = vmatpush1.bf16.xpose.msra.mxu0 %v499
    %503 = vmatprep.subr.bf16.mxu0 0
    %504 = vmatpush1.bf16.xpose.msra.mxu0 0
    %505 = vmatprep.subr.bf16.mxu0 0
    %506 = vmatpush1.bf16.xpose.msra.mxu0 0
    %507 = vmatprep.subr.bf16.mxu0 0
    %508 = vmatpush1.bf16.xpose.msra.mxu0 0
    %509 = vmatprep.subr.bf16.mxu0 0
    %510 = vmatpush1.bf16.xpose.msra.mxu0 0
    %511 = vmatprep.subr.bf16.mxu0 0
    %512 = vmatpush1.bf16.xpose.msra.mxu0 0
    %513 = vmatprep.subr.bf16.mxu0 0
    %514 = vmatpush1.bf16.xpose.msra.mxu0 0
    %515 = vmatprep.subr.bf16.mxu0 0
    %516 = vmatpush1.bf16.xpose.msra.mxu0 0
    %517 = vmatprep.subr.bf16.mxu0 0
    %518 = vmatpush1.bf16.xpose.msra.mxu0 0
    %519 = vmatprep.subr.bf16.mxu0 0
    %520 = vmatpush1.bf16.xpose.msra.mxu0 0
    %521 = vmatprep.subr.bf16.mxu0 0
    %522 = vmatpush1.bf16.xpose.msra.mxu0 0
    %523 = vmatprep.subr.bf16.mxu0 0
    %524 = vmatpush1.bf16.xpose.msra.mxu0 0
    %525 = vmatprep.subr.bf16.mxu0 0
    %526 = vmatpush1.bf16.xpose.msra.mxu0 0
    %527 = vmatprep.subr.bf16.mxu0 0
    %528 = vmatpush1.bf16.xpose.msra.mxu0 0
    %529 = vmatprep.subr.bf16.mxu0 0
    %530 = vmatpush1.bf16.xpose.msra.mxu0 0
    %531 = vmatprep.subr.bf16.mxu0 0
    %532 = vmatpush1.bf16.xpose.msra.mxu0 0
    %533 = vmatprep.mubr.bf16.mxu0 0
    %534 = vmatmul.mubr.bf16.gmra.mrb[0].mxu0 %v496
    %v535 = vpop.f32.mrb[0].mxu0
    %v536 = vadd.f32 %v108, %v535
    %v537 = vpop.f32.mrb[0].mxu0
    %v538 = vpop.f32.mrb[0].mxu0
    %v539 = vpop.f32.mrb[0].mxu0
    %540 = vdwg.mxu0
    %542 = vrot.lane.b32.xlu0 %v244, 96
    %v543 = vpop.permute.xlu0 %542
    %v545 = vsel %vm249, %v244, 0
    %v548 = vsel %vm249, %v543, 0
    %550 = vmatprep.subr.bf16.mxu0 0
    %551 = vmatpush1.bf16.xpose.msra.mxu0 %v548
    %552 = vmatprep.subr.bf16.mxu0 0
    %553 = vmatpush1.bf16.xpose.msra.mxu0 0
    %554 = vmatprep.subr.bf16.mxu0 0
    %555 = vmatpush1.bf16.xpose.msra.mxu0 0
    %556 = vmatprep.subr.bf16.mxu0 0
    %557 = vmatpush1.bf16.xpose.msra.mxu0 0
    %558 = vmatprep.subr.bf16.mxu0 0
    %559 = vmatpush1.bf16.xpose.msra.mxu0 0
    %560 = vmatprep.subr.bf16.mxu0 0
    %561 = vmatpush1.bf16.xpose.msra.mxu0 0
    %562 = vmatprep.subr.bf16.mxu0 0
    %563 = vmatpush1.bf16.xpose.msra.mxu0 0
    %564 = vmatprep.subr.bf16.mxu0 0
    %565 = vmatpush1.bf16.xpose.msra.mxu0 0
    %566 = vmatprep.subr.bf16.mxu0 0
    %567 = vmatpush1.bf16.xpose.msra.mxu0 0
    %568 = vmatprep.subr.bf16.mxu0 0
    %569 = vmatpush1.bf16.xpose.msra.mxu0 0
    %570 = vmatprep.subr.bf16.mxu0 0
    %571 = vmatpush1.bf16.xpose.msra.mxu0 0
    %572 = vmatprep.subr.bf16.mxu0 0
    %573 = vmatpush1.bf16.xpose.msra.mxu0 0
    %574 = vmatprep.subr.bf16.mxu0 0
    %575 = vmatpush1.bf16.xpose.msra.mxu0 0
    %576 = vmatprep.subr.bf16.mxu0 0
    %577 = vmatpush1.bf16.xpose.msra.mxu0 0
    %578 = vmatprep.subr.bf16.mxu0 0
    %579 = vmatpush1.bf16.xpose.msra.mxu0 0
    %580 = vmatprep.subr.bf16.mxu0 0
    %581 = vmatpush1.bf16.xpose.msra.mxu0 0
    %582 = vmatprep.mubr.bf16.mxu0 0
    %583 = vmatmul.mubr.bf16.gmra.mrb[0].mxu0 %v545
    %v584 = vpop.f32.mrb[0].mxu0
    %v585 = vadd.f32 %v108, %v584
    %v586 = vpop.f32.mrb[0].mxu0
    %v587 = vpop.f32.mrb[0].mxu0
    %v588 = vpop.f32.mrb[0].mxu0
    %589 = vdwg.mxu0
    %591 = vrot.lane.b32.xlu0 %v245, 96
    %v592 = vpop.permute.xlu0 %591
    %v594 = vsel %vm249, %v245, 0
    %v597 = vsel %vm249, %v592, 0
    %599 = vmatprep.subr.bf16.mxu0 0
    %600 = vmatpush1.bf16.xpose.msra.mxu0 %v597
    %601 = vmatprep.subr.bf16.mxu0 0
    %602 = vmatpush1.bf16.xpose.msra.mxu0 0
    %603 = vmatprep.subr.bf16.mxu0 0
    %604 = vmatpush1.bf16.xpose.msra.mxu0 0
    %605 = vmatprep.subr.bf16.mxu0 0
    %606 = vmatpush1.bf16.xpose.msra.mxu0 0
    %607 = vmatprep.subr.bf16.mxu0 0
    %608 = vmatpush1.bf16.xpose.msra.mxu0 0
    %609 = vmatprep.subr.bf16.mxu0 0
    %610 = vmatpush1.bf16.xpose.msra.mxu0 0
    %611 = vmatprep.subr.bf16.mxu0 0
    %612 = vmatpush1.bf16.xpose.msra.mxu0 0
    %613 = vmatprep.subr.bf16.mxu0 0
    %614 = vmatpush1.bf16.xpose.msra.mxu0 0
    %615 = vmatprep.subr.bf16.mxu0 0
    %616 = vmatpush1.bf16.xpose.msra.mxu0 0
    %617 = vmatprep.subr.bf16.mxu0 0
    %618 = vmatpush1.bf16.xpose.msra.mxu0 0
    %619 = vmatprep.subr.bf16.mxu0 0
    %620 = vmatpush1.bf16.xpose.msra.mxu0 0
    %621 = vmatprep.subr.bf16.mxu0 0
    %622 = vmatpush1.bf16.xpose.msra.mxu0 0
    %623 = vmatprep.subr.bf16.mxu0 0
    %624 = vmatpush1.bf16.xpose.msra.mxu0 0
    %625 = vmatprep.subr.bf16.mxu0 0
    %626 = vmatpush1.bf16.xpose.msra.mxu0 0
    %627 = vmatprep.subr.bf16.mxu0 0
    %628 = vmatpush1.bf16.xpose.msra.mxu0 0
    %629 = vmatprep.subr.bf16.mxu0 0
    %630 = vmatpush1.bf16.xpose.msra.mxu0 0
    %631 = vmatprep.mubr.bf16.mxu0 0
    %632 = vmatmul.mubr.bf16.gmra.mrb[0].mxu0 %v594
    %v633 = vpop.f32.mrb[0].mxu0
    %v634 = vadd.f32 %v108, %v633
    %v635 = vpop.f32.mrb[0].mxu0
    %v636 = vpop.f32.mrb[0].mxu0
    %v637 = vpop.f32.mrb[0].mxu0
    %638 = vdwg.mxu0
    %v639 = vsel %vm249, %v291, -inf
    %640 = vmax.xlane.f32.xlu0 %v639
    %v641 = vpop.xlane.xlu0 %640
    %v642 = vsel %vm249, %v340, -inf
    %643 = vmax.xlane.f32.xlu0 %v642
    %v644 = vpop.xlane.xlu0 %643
    %v645 = vsel %vm249, %v389, -inf
    %646 = vmax.xlane.f32.xlu0 %v645
    %v647 = vpop.xlane.xlu0 %646
    %v648 = vsel %vm249, %v438, -inf
    %649 = vmax.xlane.f32.xlu0 %v648
    %v650 = vpop.xlane.xlu0 %649
    %v651 = vsel %vm249, %v487, -inf
    %652 = vmax.xlane.f32.xlu0 %v651
    %v653 = vpop.xlane.xlu0 %652
    %v654 = vsel %vm249, %v536, -inf
    %655 = vmax.xlane.f32.xlu0 %v654
    %v656 = vpop.xlane.xlu0 %655
    %v657 = vsel %vm249, %v585, -inf
    %658 = vmax.xlane.f32.xlu0 %v657
    %v659 = vpop.xlane.xlu0 %658
    %v660 = vsel %vm249, %v634, -inf
    %661 = vmax.xlane.f32.xlu0 %v660
    %v662 = vpop.xlane.xlu0 %661
    %v663 = vsub.f32 %v291, %v641
    %v664 = vsub.f32 %v340, %v644
    %v665 = vsub.f32 %v389, %v647
    %v666 = vsub.f32 %v438, %v650
    %v667 = vsub.f32 %v487, %v653
    %v668 = vsub.f32 %v536, %v656
    %v669 = vsub.f32 %v585, %v659
    %v670 = vsub.f32 %v634, %v662
    %v671 = vmul.f32 %v663, 1.442695
    %v672 = vpow.pop %v671
    %v673 = vmul.f32 %v664, 1.442695
    %v674 = vpow.pop %v673
    %v675 = vmul.f32 %v665, 1.442695
    %v676 = vpow.pop %v675
    %v677 = vmul.f32 %v666, 1.442695
    %v678 = vpow.pop %v677
    %v679 = vmul.f32 %v667, 1.442695
    %v680 = vpow.pop %v679
    %v681 = vmul.f32 %v668, 1.442695
    %v682 = vpow.pop %v681
    %v683 = vmul.f32 %v669, 1.442695
    %v684 = vpow.pop %v683
    %v685 = vmul.f32 %v670, 1.442695
    %v686 = vpow.pop %v685
    %v687 = vsel %vm249, %v672, 0.0
    %688 = vadd.xlane.f32.xlu0 %v687
    %v689 = vpop.xlane.xlu0 %688
    %v690 = vsel %vm249, %v674, 0.0
    %691 = vadd.xlane.f32.xlu0 %v690
    %v692 = vpop.xlane.xlu0 %691
    %v693 = vsel %vm249, %v676, 0.0
    %694 = vadd.xlane.f32.xlu0 %v693
    %v695 = vpop.xlane.xlu0 %694
    %v696 = vsel %vm249, %v678, 0.0
    %697 = vadd.xlane.f32.xlu0 %v696
    %v698 = vpop.xlane.xlu0 %697
    %v699 = vsel %vm249, %v680, 0.0
    %700 = vadd.xlane.f32.xlu0 %v699
    %v701 = vpop.xlane.xlu0 %700
    %v702 = vsel %vm249, %v682, 0.0
    %703 = vadd.xlane.f32.xlu0 %v702
    %v704 = vpop.xlane.xlu0 %703
    %v705 = vsel %vm249, %v684, 0.0
    %706 = vadd.xlane.f32.xlu0 %v705
    %v707 = vpop.xlane.xlu0 %706
    %v708 = vsel %vm249, %v686, 0.0
    %709 = vadd.xlane.f32.xlu0 %v708
    %v710 = vpop.xlane.xlu0 %709
    %v711 = vrcp.pop %v689
    %v712 = vrcp.pop %v692
    %v713 = vrcp.pop %v695
    %v714 = vrcp.pop %v698
    %v715 = vrcp.pop %v701
    %v716 = vrcp.pop %v704
    %v717 = vrcp.pop %v707
    %v718 = vrcp.pop %v710
    %v719 = vmul.f32 %v672, %v711
    %v720 = vmul.f32 %v674, %v712
    %v721 = vmul.f32 %v676, %v713
    %v722 = vmul.f32 %v678, %v714
    %v723 = vmul.f32 %v680, %v715
    %v724 = vmul.f32 %v682, %v716
    %v725 = vmul.f32 %v684, %v717
    %v726 = vmul.f32 %v686, %v718
    %v727 = vpack.c.bf16 %v719, %v719
    %v728 = vpack.c.bf16 %v720, %v720
    %v729 = vpack.c.bf16 %v721, %v721
    %v730 = vpack.c.bf16 %v722, %v722
    %v731 = vpack.c.bf16 %v723, %v723
    %v732 = vpack.c.bf16 %v724, %v724
    %v733 = vpack.c.bf16 %v725, %v725
    %v734 = vpack.c.bf16 %v726, %v726
    %735 = vrot.lane.b32.xlu0 %v238, 64
    %v736 = vpop.permute.xlu0 %735
    %v738 = vsel %vm249, %v727, 0
    %vm740 = vcmask 1043456
    %v742 = vsel %vm740, %v736, 0
    %744 = vmatprep.subr.bf16.mxu0 0
    %745 = vmatpush1.bf16.msra.mxu0 %v742
    %746 = vmatprep.subr.bf16.mxu0 0
    %747 = vmatpush1.bf16.msra.mxu0 0
    %748 = vmatprep.subr.bf16.mxu0 0
    %749 = vmatpush1.bf16.msra.mxu0 0
    %750 = vmatprep.subr.bf16.mxu0 0
    %751 = vmatpush1.bf16.msra.mxu0 0
    %752 = vmatprep.subr.bf16.mxu0 0
    %753 = vmatpush1.bf16.msra.mxu0 0
    %754 = vmatprep.subr.bf16.mxu0 0
    %755 = vmatpush1.bf16.msra.mxu0 0
    %756 = vmatprep.subr.bf16.mxu0 0
    %757 = vmatpush1.bf16.msra.mxu0 0
    %758 = vmatprep.subr.bf16.mxu0 0
    %759 = vmatpush1.bf16.msra.mxu0 0
    %760 = vmatprep.subr.bf16.mxu0 0
    %761 = vmatpush1.bf16.msra.mxu0 0
    %762 = vmatprep.subr.bf16.mxu0 0
    %763 = vmatpush1.bf16.msra.mxu0 0
    %764 = vmatprep.subr.bf16.mxu0 0
    %765 = vmatpush1.bf16.msra.mxu0 0
    %766 = vmatprep.subr.bf16.mxu0 0
    %767 = vmatpush1.bf16.msra.mxu0 0
    %768 = vmatprep.subr.bf16.mxu0 0
    %769 = vmatpush1.bf16.msra.mxu0 0
    %770 = vmatprep.subr.bf16.mxu0 0
    %771 = vmatpush1.bf16.msra.mxu0 0
    %772 = vmatprep.subr.bf16.mxu0 0
    %773 = vmatpush1.bf16.msra.mxu0 0
    %774 = vmatprep.subr.bf16.mxu0 0
    %775 = vmatpush1.bf16.msra.mxu0 0
    %776 = vmatprep.mubr.bf16.mxu0 0
    %777 = vmatmul.mubr.bf16.gmra.mrb[0].mxu0 %v738
    %v778 = vpop.f32.mrb[0].mxu0
    %v779 = vadd.f32 0.0, %v778
    %v780 = vpop.f32.mrb[0].mxu0
    %v781 = vpop.f32.mrb[0].mxu0
    %v782 = vpop.f32.mrb[0].mxu0
    %783 = vdwg.mxu0
    %784 = vrot.lane.b32.xlu0 %v239, 64
    %v785 = vpop.permute.xlu0 %784
    %v787 = vsel %vm249, %v728, 0
    %v790 = vsel %vm740, %v785, 0
    %792 = vmatprep.subr.bf16.mxu0 0
    %793 = vmatpush1.bf16.msra.mxu0 %v790
    %794 = vmatprep.subr.bf16.mxu0 0
    %795 = vmatpush1.bf16.msra.mxu0 0
    %796 = vmatprep.subr.bf16.mxu0 0
    %797 = vmatpush1.bf16.msra.mxu0 0
    %798 = vmatprep.subr.bf16.mxu0 0
    %799 = vmatpush1.bf16.msra.mxu0 0
    %800 = vmatprep.subr.bf16.mxu0 0
    %801 = vmatpush1.bf16.msra.mxu0 0
    %802 = vmatprep.subr.bf16.mxu0 0
    %803 = vmatpush1.bf16.msra.mxu0 0
    %804 = vmatprep.subr.bf16.mxu0 0
    %805 = vmatpush1.bf16.msra.mxu0 0
    %806 = vmatprep.subr.bf16.mxu0 0
    %807 = vmatpush1.bf16.msra.mxu0 0
    %808 = vmatprep.subr.bf16.mxu0 0
    %809 = vmatpush1.bf16.msra.mxu0 0
    %810 = vmatprep.subr.bf16.mxu0 0
    %811 = vmatpush1.bf16.msra.mxu0 0
    %812 = vmatprep.subr.bf16.mxu0 0
    %813 = vmatpush1.bf16.msra.mxu0 0
    %814 = vmatprep.subr.bf16.mxu0 0
    %815 = vmatpush1.bf16.msra.mxu0 0
    %816 = vmatprep.subr.bf16.mxu0 0
    %817 = vmatpush1.bf16.msra.mxu0 0
    %818 = vmatprep.subr.bf16.mxu0 0
    %819 = vmatpush1.bf16.msra.mxu0 0
    %820 = vmatprep.subr.bf16.mxu0 0
    %821 = vmatpush1.bf16.msra.mxu0 0
    %822 = vmatprep.subr.bf16.mxu0 0
    %823 = vmatpush1.bf16.msra.mxu0 0
    %824 = vmatprep.mubr.bf16.mxu0 0
    %825 = vmatmul.mubr.bf16.gmra.mrb[0].mxu0 %v787
    %v826 = vpop.f32.mrb[0].mxu0
    %v827 = vadd.f32 0.0, %v826
    %v828 = vpop.f32.mrb[0].mxu0
    %v829 = vpop.f32.mrb[0].mxu0
    %v830 = vpop.f32.mrb[0].mxu0
    %831 = vdwg.mxu0
    %832 = vrot.lane.b32.xlu0 %v240, 64
    %v833 = vpop.permute.xlu0 %832
    %v835 = vsel %vm249, %v729, 0
    %v838 = vsel %vm740, %v833, 0
    %840 = vmatprep.subr.bf16.mxu0 0
    %841 = vmatpush1.bf16.msra.mxu0 %v838
    %842 = vmatprep.subr.bf16.mxu0 0
    %843 = vmatpush1.bf16.msra.mxu0 0
    %844 = vmatprep.subr.bf16.mxu0 0
    %845 = vmatpush1.bf16.msra.mxu0 0
    %846 = vmatprep.subr.bf16.mxu0 0
    %847 = vmatpush1.bf16.msra.mxu0 0
    %848 = vmatprep.subr.bf16.mxu0 0
    %849 = vmatpush1.bf16.msra.mxu0 0
    %850 = vmatprep.subr.bf16.mxu0 0
    %851 = vmatpush1.bf16.msra.mxu0 0
    %852 = vmatprep.subr.bf16.mxu0 0
    %853 = vmatpush1.bf16.msra.mxu0 0
    %854 = vmatprep.subr.bf16.mxu0 0
    %855 = vmatpush1.bf16.msra.mxu0 0
    %856 = vmatprep.subr.bf16.mxu0 0
    %857 = vmatpush1.bf16.msra.mxu0 0
    %858 = vmatprep.subr.bf16.mxu0 0
    %859 = vmatpush1.bf16.msra.mxu0 0
    %860 = vmatprep.subr.bf16.mxu0 0
    %861 = vmatpush1.bf16.msra.mxu0 0
    %862 = vmatprep.subr.bf16.mxu0 0
    %863 = vmatpush1.bf16.msra.mxu0 0
    %864 = vmatprep.subr.bf16.mxu0 0
    %865 = vmatpush1.bf16.msra.mxu0 0
    %866 = vmatprep.subr.bf16.mxu0 0
    %867 = vmatpush1.bf16.msra.mxu0 0
    %868 = vmatprep.subr.bf16.mxu0 0
    %869 = vmatpush1.bf16.msra.mxu0 0
    %870 = vmatprep.subr.bf16.mxu0 0
    %871 = vmatpush1.bf16.msra.mxu0 0
    %872 = vmatprep.mubr.bf16.mxu0 0
    %873 = vmatmul.mubr.bf16.gmra.mrb[0].mxu0 %v835
    %v874 = vpop.f32.mrb[0].mxu0
    %v875 = vadd.f32 0.0, %v874
    %v876 = vpop.f32.mrb[0].mxu0
    %v877 = vpop.f32.mrb[0].mxu0
    %v878 = vpop.f32.mrb[0].mxu0
    %879 = vdwg.mxu0
    %880 = vrot.lane.b32.xlu0 %v241, 64
    %v881 = vpop.permute.xlu0 %880
    %v883 = vsel %vm249, %v730, 0
    %v886 = vsel %vm740, %v881, 0
    %888 = vmatprep.subr.bf16.mxu0 0
    %889 = vmatpush1.bf16.msra.mxu0 %v886
    %890 = vmatprep.subr.bf16.mxu0 0
    %891 = vmatpush1.bf16.msra.mxu0 0
    %892 = vmatprep.subr.bf16.mxu0 0
    %893 = vmatpush1.bf16.msra.mxu0 0
    %894 = vmatprep.subr.bf16.mxu0 0
    %895 = vmatpush1.bf16.msra.mxu0 0
    %896 = vmatprep.subr.bf16.mxu0 0
    %897 = vmatpush1.bf16.msra.mxu0 0
    %898 = vmatprep.subr.bf16.mxu0 0
    %899 = vmatpush1.bf16.msra.mxu0 0
    %900 = vmatprep.subr.bf16.mxu0 0
    %901 = vmatpush1.bf16.msra.mxu0 0
    %902 = vmatprep.subr.bf16.mxu0 0
    %903 = vmatpush1.bf16.msra.mxu0 0
    %904 = vmatprep.subr.bf16.mxu0 0
    %905 = vmatpush1.bf16.msra.mxu0 0
    %906 = vmatprep.subr.bf16.mxu0 0
    %907 = vmatpush1.bf16.msra.mxu0 0
    %908 = vmatprep.subr.bf16.mxu0 0
    %909 = vmatpush1.bf16.msra.mxu0 0
    %910 = vmatprep.subr.bf16.mxu0 0
    %911 = vmatpush1.bf16.msra.mxu0 0
    %912 = vmatprep.subr.bf16.mxu0 0
    %913 = vmatpush1.bf16.msra.mxu0 0
    %914 = vmatprep.subr.bf16.mxu0 0
    %915 = vmatpush1.bf16.msra.mxu0 0
    %916 = vmatprep.subr.bf16.mxu0 0
    %917 = vmatpush1.bf16.msra.mxu0 0
    %918 = vmatprep.subr.bf16.mxu0 0
    %919 = vmatpush1.bf16.msra.mxu0 0
    %920 = vmatprep.mubr.bf16.mxu0 0
    %921 = vmatmul.mubr.bf16.gmra.mrb[0].mxu0 %v883
    %v922 = vpop.f32.mrb[0].mxu0
    %v923 = vadd.f32 0.0, %v922
    %v924 = vpop.f32.mrb[0].mxu0
    %v925 = vpop.f32.mrb[0].mxu0
    %v926 = vpop.f32.mrb[0].mxu0
    %927 = vdwg.mxu0
    %928 = vrot.lane.b32.xlu0 %v242, 64
    %v929 = vpop.permute.xlu0 %928
    %v931 = vsel %vm249, %v731, 0
    %v934 = vsel %vm740, %v929, 0
    %936 = vmatprep.subr.bf16.mxu0 0
    %937 = vmatpush1.bf16.msra.mxu0 %v934
    %938 = vmatprep.subr.bf16.mxu0 0
    %939 = vmatpush1.bf16.msra.mxu0 0
    %940 = vmatprep.subr.bf16.mxu0 0
    %941 = vmatpush1.bf16.msra.mxu0 0
    %942 = vmatprep.subr.bf16.mxu0 0
    %943 = vmatpush1.bf16.msra.mxu0 0
    %944 = vmatprep.subr.bf16.mxu0 0
    %945 = vmatpush1.bf16.msra.mxu0 0
    %946 = vmatprep.subr.bf16.mxu0 0
    %947 = vmatpush1.bf16.msra.mxu0 0
    %948 = vmatprep.subr.bf16.mxu0 0
    %949 = vmatpush1.bf16.msra.mxu0 0
    %950 = vmatprep.subr.bf16.mxu0 0
    %951 = vmatpush1.bf16.msra.mxu0 0
    %952 = vmatprep.subr.bf16.mxu0 0
    %953 = vmatpush1.bf16.msra.mxu0 0
    %954 = vmatprep.subr.bf16.mxu0 0
    %955 = vmatpush1.bf16.msra.mxu0 0
    %956 = vmatprep.subr.bf16.mxu0 0
    %957 = vmatpush1.bf16.msra.mxu0 0
    %958 = vmatprep.subr.bf16.mxu0 0
    %959 = vmatpush1.bf16.msra.mxu0 0
    %960 = vmatprep.subr.bf16.mxu0 0
    %961 = vmatpush1.bf16.msra.mxu0 0
    %962 = vmatprep.subr.bf16.mxu0 0
    %963 = vmatpush1.bf16.msra.mxu0 0
    %964 = vmatprep.subr.bf16.mxu0 0
    %965 = vmatpush1.bf16.msra.mxu0 0
    %966 = vmatprep.subr.bf16.mxu0 0
    %967 = vmatpush1.bf16.msra.mxu0 0
    %968 = vmatprep.mubr.bf16.mxu0 0
    %969 = vmatmul.mubr.bf16.gmra.mrb[0].mxu0 %v931
    %v970 = vpop.f32.mrb[0].mxu0
    %v971 = vadd.f32 0.0, %v970
    %v972 = vpop.f32.mrb[0].mxu0
    %v973 = vpop.f32.mrb[0].mxu0
    %v974 = vpop.f32.mrb[0].mxu0
    %975 = vdwg.mxu0
    %976 = vrot.lane.b32.xlu0 %v243, 64
    %v977 = vpop.permute.xlu0 %976
    %v979 = vsel %vm249, %v732, 0
    %v982 = vsel %vm740, %v977, 0
    %984 = vmatprep.subr.bf16.mxu0 0
    %985 = vmatpush1.bf16.msra.mxu0 %v982
    %986 = vmatprep.subr.bf16.mxu0 0
    %987 = vmatpush1.bf16.msra.mxu0 0
    %988 = vmatprep.subr.bf16.mxu0 0
    %989 = vmatpush1.bf16.msra.mxu0 0
    %990 = vmatprep.subr.bf16.mxu0 0
    %991 = vmatpush1.bf16.msra.mxu0 0
    %992 = vmatprep.subr.bf16.mxu0 0
    %993 = vmatpush1.bf16.msra.mxu0 0
    %994 = vmatprep.subr.bf16.mxu0 0
    %995 = vmatpush1.bf16.msra.mxu0 0
    %996 = vmatprep.subr.bf16.mxu0 0
    %997 = vmatpush1.bf16.msra.mxu0 0
    %998 = vmatprep.subr.bf16.mxu0 0
    %999 = vmatpush1.bf16.msra.mxu0 0
    %1000 = vmatprep.subr.bf16.mxu0 0
    %1001 = vmatpush1.bf16.msra.mxu0 0
    %1002 = vmatprep.subr.bf16.mxu0 0
    %1003 = vmatpush1.bf16.msra.mxu0 0
    %1004 = vmatprep.subr.bf16.mxu0 0
    %1005 = vmatpush1.bf16.msra.mxu0 0
    %1006 = vmatprep.subr.bf16.mxu0 0
    %1007 = vmatpush1.bf16.msra.mxu0 0
    %1008 = vmatprep.subr.bf16.mxu0 0
    %1009 = vmatpush1.bf16.msra.mxu0 0
    %1010 = vmatprep.subr.bf16.mxu0 0
    %1011 = vmatpush1.bf16.msra.mxu0 0
    %1012 = vmatprep.subr.bf16.mxu0 0
    %1013 = vmatpush1.bf16.msra.mxu0 0
    %1014 = vmatprep.subr.bf16.mxu0 0
    %1015 = vmatpush1.bf16.msra.mxu0 0
    %1016 = vmatprep.mubr.bf16.mxu0 0
    %1017 = vmatmul.mubr.bf16.gmra.mrb[0].mxu0 %v979
    %v1018 = vpop.f32.mrb[0].mxu0
    %v1019 = vadd.f32 0.0, %v1018
    %v1020 = vpop.f32.mrb[0].mxu0
    %v1021 = vpop.f32.mrb[0].mxu0
    %v1022 = vpop.f32.mrb[0].mxu0
    %1023 = vdwg.mxu0
    %1024 = vrot.lane.b32.xlu0 %v244, 64
    %v1025 = vpop.permute.xlu0 %1024
    %v1027 = vsel %vm249, %v733, 0
    %v1030 = vsel %vm740, %v1025, 0
    %1032 = vmatprep.subr.bf16.mxu0 0
    %1033 = vmatpush1.bf16.msra.mxu0 %v1030
    %1034 = vmatprep.subr.bf16.mxu0 0
    %1035 = vmatpush1.bf16.msra.mxu0 0
    %1036 = vmatprep.subr.bf16.mxu0 0
    %1037 = vmatpush1.bf16.msra.mxu0 0
    %1038 = vmatprep.subr.bf16.mxu0 0
    %1039 = vmatpush1.bf16.msra.mxu0 0
    %1040 = vmatprep.subr.bf16.mxu0 0
    %1041 = vmatpush1.bf16.msra.mxu0 0
    %1042 = vmatprep.subr.bf16.mxu0 0
    %1043 = vmatpush1.bf16.msra.mxu0 0
    %1044 = vmatprep.subr.bf16.mxu0 0
    %1045 = vmatpush1.bf16.msra.mxu0 0
    %1046 = vmatprep.subr.bf16.mxu0 0
    %1047 = vmatpush1.bf16.msra.mxu0 0
    %1048 = vmatprep.subr.bf16.mxu0 0
    %1049 = vmatpush1.bf16.msra.mxu0 0
    %1050 = vmatprep.subr.bf16.mxu0 0
    %1051 = vmatpush1.bf16.msra.mxu0 0
    %1052 = vmatprep.subr.bf16.mxu0 0
    %1053 = vmatpush1.bf16.msra.mxu0 0
    %1054 = vmatprep.subr.bf16.mxu0 0
    %1055 = vmatpush1.bf16.msra.mxu0 0
    %1056 = vmatprep.subr.bf16.mxu0 0
    %1057 = vmatpush1.bf16.msra.mxu0 0
    %1058 = vmatprep.subr.bf16.mxu0 0
    %1059 = vmatpush1.bf16.msra.mxu0 0
    %1060 = vmatprep.subr.bf16.mxu0 0
    %1061 = vmatpush1.bf16.msra.mxu0 0
    %1062 = vmatprep.subr.bf16.mxu0 0
    %1063 = vmatpush1.bf16.msra.mxu0 0
    %1064 = vmatprep.mubr.bf16.mxu0 0
    %1065 = vmatmul.mubr.bf16.gmra.mrb[0].mxu0 %v1027
    %v1066 = vpop.f32.mrb[0].mxu0
    %v1067 = vadd.f32 0.0, %v1066
    %v1068 = vpop.f32.mrb[0].mxu0
    %v1069 = vpop.f32.mrb[0].mxu0
    %v1070 = vpop.f32.mrb[0].mxu0
    %1071 = vdwg.mxu0
    %1072 = vrot.lane.b32.xlu0 %v245, 64
    %v1073 = vpop.permute.xlu0 %1072
    %v1075 = vsel %vm249, %v734, 0
    %v1078 = vsel %vm740, %v1073, 0
    %1080 = vmatprep.subr.bf16.mxu0 0
    %1081 = vmatpush1.bf16.msra.mxu0 %v1078
    %1082 = vmatprep.subr.bf16.mxu0 0
    %1083 = vmatpush1.bf16.msra.mxu0 0
    %1084 = vmatprep.subr.bf16.mxu0 0
    %1085 = vmatpush1.bf16.msra.mxu0 0
    %1086 = vmatprep.subr.bf16.mxu0 0
    %1087 = vmatpush1.bf16.msra.mxu0 0
    %1088 = vmatprep.subr.bf16.mxu0 0
    %1089 = vmatpush1.bf16.msra.mxu0 0
    %1090 = vmatprep.subr.bf16.mxu0 0
    %1091 = vmatpush1.bf16.msra.mxu0 0
    %1092 = vmatprep.subr.bf16.mxu0 0
    %1093 = vmatpush1.bf16.msra.mxu0 0
    %1094 = vmatprep.subr.bf16.mxu0 0
    %1095 = vmatpush1.bf16.msra.mxu0 0
    %1096 = vmatprep.subr.bf16.mxu0 0
    %1097 = vmatpush1.bf16.msra.mxu0 0
    %1098 = vmatprep.subr.bf16.mxu0 0
    %1099 = vmatpush1.bf16.msra.mxu0 0
    %1100 = vmatprep.subr.bf16.mxu0 0
    %1101 = vmatpush1.bf16.msra.mxu0 0
    %1102 = vmatprep.subr.bf16.mxu0 0
    %1103 = vmatpush1.bf16.msra.mxu0 0
    %1104 = vmatprep.subr.bf16.mxu0 0
    %1105 = vmatpush1.bf16.msra.mxu0 0
    %1106 = vmatprep.subr.bf16.mxu0 0
    %1107 = vmatpush1.bf16.msra.mxu0 0
    %1108 = vmatprep.subr.bf16.mxu0 0
    %1109 = vmatpush1.bf16.msra.mxu0 0
    %1110 = vmatprep.subr.bf16.mxu0 0
    %1111 = vmatpush1.bf16.msra.mxu0 0
    %1112 = vmatprep.mubr.bf16.mxu0 0
    %1113 = vmatmul.mubr.bf16.gmra.mrb[0].mxu0 %v1075
    %v1114 = vpop.f32.mrb[0].mxu0
    %v1115 = vadd.f32 0.0, %v1114
    %v1116 = vpop.f32.mrb[0].mxu0
    %v1117 = vpop.f32.mrb[0].mxu0
    %v1118 = vpop.f32.mrb[0].mxu0
    %1119 = vdwg.mxu0
    %v1120 = vpack.c.bf16 %v827, %v779
    %v1121 = vpack.c.bf16 %v923, %v875
    %v1122 = vpack.c.bf16 %v1019, %v971
    %v1123 = vpack.c.bf16 %v1115, %v1067
    %v1125 = vsel %vm249, %v1120, 0
    %v1128 = vsel %vm740, %v153, 0
    %1130 = vmatprep.subr.bf16.mxu0 0
    %1131 = vmatpush1.bf16.msra.mxu0 %v1128
    %1132 = vmatprep.subr.bf16.mxu0 0
    %1133 = vmatpush1.bf16.msra.mxu0 0
    %1134 = vmatprep.subr.bf16.mxu0 0
    %1135 = vmatpush1.bf16.msra.mxu0 0
    %1136 = vmatprep.subr.bf16.mxu0 0
    %1137 = vmatpush1.bf16.msra.mxu0 0
    %1138 = vmatprep.subr.bf16.mxu0 0
    %1139 = vmatpush1.bf16.msra.mxu0 0
    %1140 = vmatprep.subr.bf16.mxu0 0
    %1141 = vmatpush1.bf16.msra.mxu0 0
    %1142 = vmatprep.subr.bf16.mxu0 0
    %1143 = vmatpush1.bf16.msra.mxu0 0
    %1144 = vmatprep.subr.bf16.mxu0 0
    %1145 = vmatpush1.bf16.msra.mxu0 0
    %1146 = vmatprep.subr.bf16.mxu0 0
    %1147 = vmatpush1.bf16.msra.mxu0 0
    %1148 = vmatprep.subr.bf16.mxu0 0
    %1149 = vmatpush1.bf16.msra.mxu0 0
    %1150 = vmatprep.subr.bf16.mxu0 0
    %1151 = vmatpush1.bf16.msra.mxu0 0
    %1152 = vmatprep.subr.bf16.mxu0 0
    %1153 = vmatpush1.bf16.msra.mxu0 0
    %1154 = vmatprep.subr.bf16.mxu0 0
    %1155 = vmatpush1.bf16.msra.mxu0 0
    %1156 = vmatprep.subr.bf16.mxu0 0
    %1157 = vmatpush1.bf16.msra.mxu0 0
    %1158 = vmatprep.subr.bf16.mxu0 0
    %1159 = vmatpush1.bf16.msra.mxu0 0
    %1160 = vmatprep.subr.bf16.mxu0 0
    %1161 = vmatpush1.bf16.msra.mxu0 0
    %1162 = vmatprep.mubr.bf16.mxu0 0
    %1163 = vmatmul.mubr.bf16.gmra.mrb[0].mxu0 %v1125
    %v1164 = vpop.f32.mrb[0].mxu0
    %v1165 = vadd.f32 0.0, %v1164
    %v1166 = vpop.f32.mrb[0].mxu0
    %v1167 = vpop.f32.mrb[0].mxu0
    %v1168 = vadd.f32 0.0, %v1167
    %v1169 = vpop.f32.mrb[0].mxu0
    %1170 = vdwg.mxu0
    %v1172 = vsel %vm249, %v1121, 0
    %v1175 = vsel %vm740, %v154, 0
    %1177 = vmatprep.subr.bf16.mxu0 0
    %1178 = vmatpush1.bf16.msra.mxu0 %v1175
    %1179 = vmatprep.subr.bf16.mxu0 0
    %1180 = vmatpush1.bf16.msra.mxu0 0
    %1181 = vmatprep.subr.bf16.mxu0 0
    %1182 = vmatpush1.bf16.msra.mxu0 0
    %1183 = vmatprep.subr.bf16.mxu0 0
    %1184 = vmatpush1.bf16.msra.mxu0 0
    %1185 = vmatprep.subr.bf16.mxu0 0
    %1186 = vmatpush1.bf16.msra.mxu0 0
    %1187 = vmatprep.subr.bf16.mxu0 0
    %1188 = vmatpush1.bf16.msra.mxu0 0
    %1189 = vmatprep.subr.bf16.mxu0 0
    %1190 = vmatpush1.bf16.msra.mxu0 0
    %1191 = vmatprep.subr.bf16.mxu0 0
    %1192 = vmatpush1.bf16.msra.mxu0 0
    %1193 = vmatprep.subr.bf16.mxu0 0
    %1194 = vmatpush1.bf16.msra.mxu0 0
    %1195 = vmatprep.subr.bf16.mxu0 0
    %1196 = vmatpush1.bf16.msra.mxu0 0
    %1197 = vmatprep.subr.bf16.mxu0 0
    %1198 = vmatpush1.bf16.msra.mxu0 0
    %1199 = vmatprep.subr.bf16.mxu0 0
    %1200 = vmatpush1.bf16.msra.mxu0 0
    %1201 = vmatprep.subr.bf16.mxu0 0
    %1202 = vmatpush1.bf16.msra.mxu0 0
    %1203 = vmatprep.subr.bf16.mxu0 0
    %1204 = vmatpush1.bf16.msra.mxu0 0
    %1205 = vmatprep.subr.bf16.mxu0 0
    %1206 = vmatpush1.bf16.msra.mxu0 0
    %1207 = vmatprep.subr.bf16.mxu0 0
    %1208 = vmatpush1.bf16.msra.mxu0 0
    %1209 = vmatprep.mubr.bf16.mxu0 0
    %1210 = vmatmul.mubr.bf16.gmra.mrb[0].mxu0 %v1172
    %v1211 = vpop.f32.mrb[0].mxu0
    %v1212 = vadd.f32 0.0, %v1211
    %v1213 = vpop.f32.mrb[0].mxu0
    %v1214 = vpop.f32.mrb[0].mxu0
    %v1215 = vadd.f32 0.0, %v1214
    %v1216 = vpop.f32.mrb[0].mxu0
    %1217 = vdwg.mxu0
    %v1219 = vsel %vm249, %v1122, 0
    %v1222 = vsel %vm740, %v155, 0
    %1224 = vmatprep.subr.bf16.mxu0 0
    %1225 = vmatpush1.bf16.msra.mxu0 %v1222
    %1226 = vmatprep.subr.bf16.mxu0 0
    %1227 = vmatpush1.bf16.msra.mxu0 0
    %1228 = vmatprep.subr.bf16.mxu0 0
    %1229 = vmatpush1.bf16.msra.mxu0 0
    %1230 = vmatprep.subr.bf16.mxu0 0
    %1231 = vmatpush1.bf16.msra.mxu0 0
    %1232 = vmatprep.subr.bf16.mxu0 0
    %1233 = vmatpush1.bf16.msra.mxu0 0
    %1234 = vmatprep.subr.bf16.mxu0 0
    %1235 = vmatpush1.bf16.msra.mxu0 0
    %1236 = vmatprep.subr.bf16.mxu0 0
    %1237 = vmatpush1.bf16.msra.mxu0 0
    %1238 = vmatprep.subr.bf16.mxu0 0
    %1239 = vmatpush1.bf16.msra.mxu0 0
    %1240 = vmatprep.subr.bf16.mxu0 0
    %1241 = vmatpush1.bf16.msra.mxu0 0
    %1242 = vmatprep.subr.bf16.mxu0 0
    %1243 = vmatpush1.bf16.msra.mxu0 0
    %1244 = vmatprep.subr.bf16.mxu0 0
    %1245 = vmatpush1.bf16.msra.mxu0 0
    %1246 = vmatprep.subr.bf16.mxu0 0
    %1247 = vmatpush1.bf16.msra.mxu0 0
    %1248 = vmatprep.subr.bf16.mxu0 0
    %1249 = vmatpush1.bf16.msra.mxu0 0
    %1250 = vmatprep.subr.bf16.mxu0 0
    %1251 = vmatpush1.bf16.msra.mxu0 0
    %1252 = vmatprep.subr.bf16.mxu0 0
    %1253 = vmatpush1.bf16.msra.mxu0 0
    %1254 = vmatprep.subr.bf16.mxu0 0
    %1255 = vmatpush1.bf16.msra.mxu0 0
    %1256 = vmatprep.mubr.bf16.mxu0 0
    %1257 = vmatmul.mubr.bf16.gmra.mrb[0].mxu0 %v1219
    %v1258 = vpop.f32.mrb[0].mxu0
    %v1259 = vadd.f32 0.0, %v1258
    %v1260 = vpop.f32.mrb[0].mxu0
    %v1261 = vpop.f32.mrb[0].mxu0
    %v1262 = vadd.f32 0.0, %v1261
    %v1263 = vpop.f32.mrb[0].mxu0
    %1264 = vdwg.mxu0
    %v1266 = vsel %vm249, %v1123, 0
    %v1269 = vsel %vm740, %v156, 0
    %1271 = vmatprep.subr.bf16.mxu0 0
    %1272 = vmatpush1.bf16.msra.mxu0 %v1269
    %1273 = vmatprep.subr.bf16.mxu0 0
    %1274 = vmatpush1.bf16.msra.mxu0 0
    %1275 = vmatprep.subr.bf16.mxu0 0
    %1276 = vmatpush1.bf16.msra.mxu0 0
    %1277 = vmatprep.subr.bf16.mxu0 0
    %1278 = vmatpush1.bf16.msra.mxu0 0
    %1279 = vmatprep.subr.bf16.mxu0 0
    %1280 = vmatpush1.bf16.msra.mxu0 0
    %1281 = vmatprep.subr.bf16.mxu0 0
    %1282 = vmatpush1.bf16.msra.mxu0 0
    %1283 = vmatprep.subr.bf16.mxu0 0
    %1284 = vmatpush1.bf16.msra.mxu0 0
    %1285 = vmatprep.subr.bf16.mxu0 0
    %1286 = vmatpush1.bf16.msra.mxu0 0
    %1287 = vmatprep.subr.bf16.mxu0 0
    %1288 = vmatpush1.bf16.msra.mxu0 0
    %1289 = vmatprep.subr.bf16.mxu0 0
    %1290 = vmatpush1.bf16.msra.mxu0 0
    %1291 = vmatprep.subr.bf16.mxu0 0
    %1292 = vmatpush1.bf16.msra.mxu0 0
    %1293 = vmatprep.subr.bf16.mxu0 0
    %1294 = vmatpush1.bf16.msra.mxu0 0
    %1295 = vmatprep.subr.bf16.mxu0 0
    %1296 = vmatpush1.bf16.msra.mxu0 0
    %1297 = vmatprep.subr.bf16.mxu0 0
    %1298 = vmatpush1.bf16.msra.mxu0 0
    %1299 = vmatprep.subr.bf16.mxu0 0
    %1300 = vmatpush1.bf16.msra.mxu0 0
    %1301 = vmatprep.subr.bf16.mxu0 0
    %1302 = vmatpush1.bf16.msra.mxu0 0
    %1303 = vmatprep.mubr.bf16.mxu0 0
    %1304 = vmatmul.mubr.bf16.gmra.mrb[0].mxu0 %v1266
    %v1305 = vpop.f32.mrb[0].mxu0
    %v1306 = vadd.f32 0.0, %v1305
    %v1307 = vpop.f32.mrb[0].mxu0
    %v1308 = vpop.f32.mrb[0].mxu0
    %v1309 = vadd.f32 0.0, %v1308
    %v1310 = vpop.f32.mrb[0].mxu0
    %1311 = vdwg.mxu0
    %v1312 = vsel %vm109, %v1165, 0.0
    %v1313 = vsel %vm109, %v1212, 0.0
    %v1314 = vadd.f32 %v1312, %v1313
    %v1315 = vsel %vm109, %v1259, 0.0
    %v1316 = vadd.f32 %v1314, %v1315
    %v1317 = vsel %vm109, %v1306, 0.0
    %v1318 = vadd.f32 %v1316, %v1317
    %v1319 = vsel %vm109, %v1168, 0.0
    %v1320 = vsel %vm109, %v1215, 0.0
    %v1321 = vadd.f32 %v1319, %v1320
    %v1322 = vsel %vm109, %v1262, 0.0
    %v1323 = vadd.f32 %v1321, %v1322
    %v1324 = vsel %vm109, %v1309, 0.0
    %v1325 = vadd.f32 %v1323, %v1324
    %v1326 = vlaneseq
    %v1327 = vshrl.u32 %v1326, 7
    %v1328 = vsub.s32 6, %v1327
    %v1329 = vrot.slane %v100, %v1328
    %v1330 = vadd.f32 %v1318, %v1329
    %v1331 = vadd.f32 %v1325, %v1329
    %v1332 = vadd.f32 %v147, %v1330
    %v1333 = vadd.f32 %v148, %v1331
    %v1334 = vsel %vm109, %v98, 0.0
    %1335 = vadd.xlane.f32.xlu0 %v1334
    %v1336 = vpop.xlane.xlu0 %1335
    %v1337 = vsel %vm109, %v99, 0.0
    %1338 = vadd.xlane.f32.xlu0 %v1337
    %v1339 = vpop.xlane.xlu0 %1338
    %v1340 = vmul.f32 %v1336, %v116
    %v1341 = vmul.f32 %v1339, %v116
    %v1342 = vsub.f32 %v98, %v1340
    %v1343 = vsub.f32 %v99, %v1341
    %v1344 = vmul.f32 %v1342, %v1342
    %v1345 = vmul.f32 %v1343, %v1343
    %v1346 = vsel %vm109, %v1344, 0.0
    %1347 = vadd.xlane.f32.xlu0 %v1346
    %v1348 = vpop.xlane.xlu0 %1347
    %v1349 = vsel %vm109, %v1345, 0.0
    %1350 = vadd.xlane.f32.xlu0 %v1349
    %v1351 = vpop.xlane.xlu0 %1350
    %v1352 = vmul.f32 %v1348, %v116
    %v1353 = vmul.f32 %v1351, %v116
    %v1354 = vadd.f32 %v1352, 1e-05
    %v1355 = vadd.f32 %v1353, 1e-05
    %v1356 = vrsqrt.pop %v1354
    %v1357 = vrsqrt.pop %v1355
    %v1358 = vmul.f32 %v1342, %v1356
    %v1359 = vmul.f32 %v1343, %v1357
    %v1360 = vlaneseq
    %v1361 = vshrl.u32 %v1360, 7
    %v1362 = vsub.s32 2, %v1361
    %v1363 = vrot.slane %v100, %v1362
    %v1364 = vmul.f32 %v1358, %v1363
    %v1365 = vmul.f32 %v1359, %v1363
    %v1366 = vlaneseq
    %v1367 = vshrl.u32 %v1366, 7
    %v1368 = vsub.s32 3, %v1367
    %v1369 = vrot.slane %v100, %v1368
    %v1370 = vadd.f32 %v1364, %v1369
    %v1371 = vadd.f32 %v1365, %v1369
    %s1372 = scalar_lea.vmem [#allocation7], 16
    %v1373 = vld [vmem:[%s1372] sm:$0xf]
    %v1374 = vld [vmem:[%s1372 + $0x4] sm:$0xf]
    %v1375 = vld [vmem:[%s1372 + $0x8] sm:$0xf]
    %v1376 = vld [vmem:[%s1372 + $0xc] sm:$0xf]
    %s1377 = scalar_lea.vmem [#allocation10], 16
    %v1378 = vld [vmem:[%s1377] sm:$0xf]
    %v1379 = vld [vmem:[%s1377 + $0x4] sm:$0xf]
    %v1380 = vld [vmem:[%s1377 + $0x8] sm:$0xf]
    %v1381 = vld [vmem:[%s1377 + $0xc] sm:$0xf]
    %v1382 = vpack.c.bf16 %v1333, %v1332
    %v1383 = vlaneseq
    %v1384 = vshrl.u32 %v1383, 7
    %v1385 = vsub.s32 1, %v1384
    %v1386 = vrot.slane %v102, %v1385
    %v1391 = vunpack.c.l.b16 %v1373
    %v1392 = vunpack.c.l.b16 %v1374
    %v1393 = vunpack.c.l.b16 %v1375
    %v1394 = vunpack.c.l.b16 %v1376
    %v1395 = vpack.c.b16 %v1392, %v1391
    %v1396 = vpack.c.b16 %v1394, %v1393
    %v1400 = vsel %vm109, %v1382, 0
    %1402 = vmatprep.subr.bf16.mxu0 0
    %1403 = vmatpush1.bf16.msra.mxu0 %v1395
    %1404 = vmatprep.subr.bf16.mxu0 0
    %1405 = vmatpush1.bf16.msra.mxu0 %v1396
    %1406 = vmatprep.subr.bf16.mxu0 0
    %1407 = vmatpush1.bf16.msra.mxu0 0
    %1408 = vmatprep.subr.bf16.mxu0 0
    %1409 = vmatpush1.bf16.msra.mxu0 0
    %1410 = vmatprep.subr.bf16.mxu0 0
    %1411 = vmatpush1.bf16.msra.mxu0 0
    %1412 = vmatprep.subr.bf16.mxu0 0
    %1413 = vmatpush1.bf16.msra.mxu0 0
    %1414 = vmatprep.subr.bf16.mxu0 0
    %1415 = vmatpush1.bf16.msra.mxu0 0
    %1416 = vmatprep.subr.bf16.mxu0 0
    %1417 = vmatpush1.bf16.msra.mxu0 0
    %1418 = vmatprep.subr.bf16.mxu0 0
    %1419 = vmatpush1.bf16.msra.mxu0 0
    %1420 = vmatprep.subr.bf16.mxu0 0
    %1421 = vmatpush1.bf16.msra.mxu0 0
    %1422 = vmatprep.subr.bf16.mxu0 0
    %1423 = vmatpush1.bf16.msra.mxu0 0
    %1424 = vmatprep.subr.bf16.mxu0 0
    %1425 = vmatpush1.bf16.msra.mxu0 0
    %1426 = vmatprep.subr.bf16.mxu0 0
    %1427 = vmatpush1.bf16.msra.mxu0 0
    %1428 = vmatprep.subr.bf16.mxu0 0
    %1429 = vmatpush1.bf16.msra.mxu0 0
    %1430 = vmatprep.subr.bf16.mxu0 0
    %1431 = vmatpush1.bf16.msra.mxu0 0
    %1432 = vmatprep.subr.bf16.mxu0 0
    %1433 = vmatpush1.bf16.msra.mxu0 0
    %1434 = vmatprep.mubr.bf16.mxu0 0
    %1435 = vmatmul.mubr.bf16.gmra.mrb[0].mxu0 %v1400
    %v1436 = vpop.f32.mrb[0].mxu0
    %v1437 = vadd.f32 %v1386, %v1436
    %v1438 = vpop.f32.mrb[0].mxu0
    %v1439 = vpop.f32.mrb[0].mxu0
    %v1440 = vadd.f32 %v1386, %v1439
    %v1441 = vpop.f32.mrb[0].mxu0
    %1442 = vdwg.mxu0
    %v1443 = vpack.c.bf16 %v1371, %v1370
    %1444 = vrot.lane.b32.xlu0 %v1395, 96
    %v1445 = vpop.permute.xlu0 %1444
    %1446 = vrot.lane.b32.xlu0 %v1396, 96
    %v1447 = vpop.permute.xlu0 %1446
    %1451 = vrot.lane.b32.xlu0 %v1386, 96
    %v1452 = vpop.permute.xlu0 %1451
    %v1455 = vsel %vm109, %v1443, 0
    %1457 = vmatprep.subr.bf16.mxu0 0
    %1458 = vmatpush1.bf16.msra.mxu0 %v1445
    %1459 = vmatprep.subr.bf16.mxu0 0
    %1460 = vmatpush1.bf16.msra.mxu0 %v1447
    %1461 = vmatprep.subr.bf16.mxu0 0
    %1462 = vmatpush1.bf16.msra.mxu0 0
    %1463 = vmatprep.subr.bf16.mxu0 0
    %1464 = vmatpush1.bf16.msra.mxu0 0
    %1465 = vmatprep.subr.bf16.mxu0 0
    %1466 = vmatpush1.bf16.msra.mxu0 0
    %1467 = vmatprep.subr.bf16.mxu0 0
    %1468 = vmatpush1.bf16.msra.mxu0 0
    %1469 = vmatprep.subr.bf16.mxu0 0
    %1470 = vmatpush1.bf16.msra.mxu0 0
    %1471 = vmatprep.subr.bf16.mxu0 0
    %1472 = vmatpush1.bf16.msra.mxu0 0
    %1473 = vmatprep.subr.bf16.mxu0 0
    %1474 = vmatpush1.bf16.msra.mxu0 0
    %1475 = vmatprep.subr.bf16.mxu0 0
    %1476 = vmatpush1.bf16.msra.mxu0 0
    %1477 = vmatprep.subr.bf16.mxu0 0
    %1478 = vmatpush1.bf16.msra.mxu0 0
    %1479 = vmatprep.subr.bf16.mxu0 0
    %1480 = vmatpush1.bf16.msra.mxu0 0
    %1481 = vmatprep.subr.bf16.mxu0 0
    %1482 = vmatpush1.bf16.msra.mxu0 0
    %1483 = vmatprep.subr.bf16.mxu0 0
    %1484 = vmatpush1.bf16.msra.mxu0 0
    %1485 = vmatprep.subr.bf16.mxu0 0
    %1486 = vmatpush1.bf16.msra.mxu0 0
    %1487 = vmatprep.subr.bf16.mxu0 0
    %1488 = vmatpush1.bf16.msra.mxu0 0
    %1489 = vmatprep.mubr.bf16.mxu0 0
    %1490 = vmatmul.mubr.bf16.gmra.mrb[0].mxu0 %v1455
    %v1491 = vpop.f32.mrb[0].mxu0
    %v1492 = vadd.f32 %v1452, %v1491
    %v1493 = vpop.f32.mrb[0].mxu0
    %v1494 = vpop.f32.mrb[0].mxu0
    %v1495 = vadd.f32 %v1452, %v1494
    %v1496 = vpop.f32.mrb[0].mxu0
    %1497 = vdwg.mxu0
    %1500 = vrot.lane.b32.xlu0 %v1437, 120
    %v1501 = vpop.permute.xlu0 %1500
    %1502 = vrot.lane.b32.xlu0 %v1440, 120
    %v1503 = vpop.permute.xlu0 %1502
    %1506 = vrot.lane.b32.xlu0 %v1437, 112
    %v1507 = vpop.permute.xlu0 %1506
    %1508 = vrot.lane.b32.xlu0 %v1440, 112
    %v1509 = vpop.permute.xlu0 %1508
    %1512 = vrot.lane.b32.xlu0 %v1437, 104
    %v1513 = vpop.permute.xlu0 %1512
    %1514 = vrot.lane.b32.xlu0 %v1440, 104
    %v1515 = vpop.permute.xlu0 %1514
    %v1518 = vpack.c.bf16 %v1437, %v1437
    %v1519 = vpack.c.bf16 %v1440, %v1440
    %v1520 = vpack.c.bf16 %v1501, %v1501
    %v1521 = vpack.c.bf16 %v1503, %v1503
    %v1522 = vpack.c.bf16 %v1507, %v1507
    %v1523 = vpack.c.bf16 %v1509, %v1509
    %v1524 = vpack.c.bf16 %v1513, %v1513
    %v1525 = vpack.c.bf16 %v1515, %v1515
    %1528 = vrot.lane.b32.xlu0 %v1492, 120
    %v1529 = vpop.permute.xlu0 %1528
    %1530 = vrot.lane.b32.xlu0 %v1495, 120
    %v1531 = vpop.permute.xlu0 %1530
    %1534 = vrot.lane.b32.xlu0 %v1492, 112
    %v1535 = vpop.permute.xlu0 %1534
    %1536 = vrot.lane.b32.xlu0 %v1495, 112
    %v1537 = vpop.permute.xlu0 %1536
    %1540 = vrot.lane.b32.xlu0 %v1492, 104
    %v1541 = vpop.permute.xlu0 %1540
    %1542 = vrot.lane.b32.xlu0 %v1495, 104
    %v1543 = vpop.permute.xlu0 %1542
    %v1546 = vpack.c.bf16 %v1492, %v1492
    %v1547 = vpack.c.bf16 %v1495, %v1495
    %v1548 = vpack.c.bf16 %v1529, %v1529
    %v1549 = vpack.c.bf16 %v1531, %v1531
    %v1550 = vpack.c.bf16 %v1535, %v1535
    %v1551 = vpack.c.bf16 %v1537, %v1537
    %v1552 = vpack.c.bf16 %v1541, %v1541
    %v1553 = vpack.c.bf16 %v1543, %v1543
    %v1555 = vsel %vm249, %v1518, 0
    %v1558 = vsel %vm249, %v1546, 0
    %1560 = vmatprep.subr.bf16.mxu0 0
    %1561 = vmatpush1.bf16.xpose.msra.mxu0 %v1558
    %1562 = vmatprep.subr.bf16.mxu0 0
    %1563 = vmatpush1.bf16.xpose.msra.mxu0 0
    %1564 = vmatprep.subr.bf16.mxu0 0
    %1565 = vmatpush1.bf16.xpose.msra.mxu0 0
    %1566 = vmatprep.subr.bf16.mxu0 0
    %1567 = vmatpush1.bf16.xpose.msra.mxu0 0
    %1568 = vmatprep.subr.bf16.mxu0 0
    %1569 = vmatpush1.bf16.xpose.msra.mxu0 0
    %1570 = vmatprep.subr.bf16.mxu0 0
    %1571 = vmatpush1.bf16.xpose.msra.mxu0 0
    %1572 = vmatprep.subr.bf16.mxu0 0
    %1573 = vmatpush1.bf16.xpose.msra.mxu0 0
    %1574 = vmatprep.subr.bf16.mxu0 0
    %1575 = vmatpush1.bf16.xpose.msra.mxu0 0
    %1576 = vmatprep.subr.bf16.mxu0 0
    %1577 = vmatpush1.bf16.xpose.msra.mxu0 0
    %1578 = vmatprep.subr.bf16.mxu0 0
    %1579 = vmatpush1.bf16.xpose.msra.mxu0 0
    %1580 = vmatprep.subr.bf16.mxu0 0
    %1581 = vmatpush1.bf16.xpose.msra.mxu0 0
    %1582 = vmatprep.subr.bf16.mxu0 0
    %1583 = vmatpush1.bf16.xpose.msra.mxu0 0
    %1584 = vmatprep.subr.bf16.mxu0 0
    %1585 = vmatpush1.bf16.xpose.msra.mxu0 0
    %1586 = vmatprep.subr.bf16.mxu0 0
    %1587 = vmatpush1.bf16.xpose.msra.mxu0 0
    %1588 = vmatprep.subr.bf16.mxu0 0
    %1589 = vmatpush1.bf16.xpose.msra.mxu0 0
    %1590 = vmatprep.subr.bf16.mxu0 0
    %1591 = vmatpush1.bf16.xpose.msra.mxu0 0
    %1592 = vmatprep.mubr.bf16.mxu0 0
    %1593 = vmatmul.mubr.bf16.gmra.mrb[0].mxu0 %v1555
    %v1594 = vpop.f32.mrb[0].mxu0
    %v1595 = vadd.f32 %v108, %v1594
    %v1596 = vpop.f32.mrb[0].mxu0
    %v1597 = vpop.f32.mrb[0].mxu0
    %v1598 = vpop.f32.mrb[0].mxu0
    %1599 = vdwg.mxu0
    %v1601 = vsel %vm249, %v1519, 0
    %v1604 = vsel %vm249, %v1547, 0
    %1606 = vmatprep.subr.bf16.mxu0 0
    %1607 = vmatpush1.bf16.xpose.msra.mxu0 %v1604
    %1608 = vmatprep.subr.bf16.mxu0 0
    %1609 = vmatpush1.bf16.xpose.msra.mxu0 0
    %1610 = vmatprep.subr.bf16.mxu0 0
    %1611 = vmatpush1.bf16.xpose.msra.mxu0 0
    %1612 = vmatprep.subr.bf16.mxu0 0
    %1613 = vmatpush1.bf16.xpose.msra.mxu0 0
    %1614 = vmatprep.subr.bf16.mxu0 0
    %1615 = vmatpush1.bf16.xpose.msra.mxu0 0
    %1616 = vmatprep.subr.bf16.mxu0 0
    %1617 = vmatpush1.bf16.xpose.msra.mxu0 0
    %1618 = vmatprep.subr.bf16.mxu0 0
    %1619 = vmatpush1.bf16.xpose.msra.mxu0 0
    %1620 = vmatprep.subr.bf16.mxu0 0
    %1621 = vmatpush1.bf16.xpose.msra.mxu0 0
    %1622 = vmatprep.subr.bf16.mxu0 0
    %1623 = vmatpush1.bf16.xpose.msra.mxu0 0
    %1624 = vmatprep.subr.bf16.mxu0 0
    %1625 = vmatpush1.bf16.xpose.msra.mxu0 0
    %1626 = vmatprep.subr.bf16.mxu0 0
    %1627 = vmatpush1.bf16.xpose.msra.mxu0 0
    %1628 = vmatprep.subr.bf16.mxu0 0
    %1629 = vmatpush1.bf16.xpose.msra.mxu0 0
    %1630 = vmatprep.subr.bf16.mxu0 0
    %1631 = vmatpush1.bf16.xpose.msra.mxu0 0
    %1632 = vmatprep.subr.bf16.mxu0 0
    %1633 = vmatpush1.bf16.xpose.msra.mxu0 0
    %1634 = vmatprep.subr.bf16.mxu0 0
    %1635 = vmatpush1.bf16.xpose.msra.mxu0 0
    %1636 = vmatprep.subr.bf16.mxu0 0
    %1637 = vmatpush1.bf16.xpose.msra.mxu0 0
    %1638 = vmatprep.mubr.bf16.mxu0 0
    %1639 = vmatmul.mubr.bf16.gmra.mrb[0].mxu0 %v1601
    %v1640 = vpop.f32.mrb[0].mxu0
    %v1641 = vadd.f32 %v108, %v1640
    %v1642 = vpop.f32.mrb[0].mxu0
    %v1643 = vpop.f32.mrb[0].mxu0
    %v1644 = vpop.f32.mrb[0].mxu0
    %1645 = vdwg.mxu0
    %v1647 = vsel %vm249, %v1520, 0
    %v1650 = vsel %vm249, %v1548, 0
    %1652 = vmatprep.subr.bf16.mxu0 0
    %1653 = vmatpush1.bf16.xpose.msra.mxu0 %v1650
    %1654 = vmatprep.subr.bf16.mxu0 0
    %1655 = vmatpush1.bf16.xpose.msra.mxu0 0
    %1656 = vmatprep.subr.bf16.mxu0 0
    %1657 = vmatpush1.bf16.xpose.msra.mxu0 0
    %1658 = vmatprep.subr.bf16.mxu0 0
    %1659 = vmatpush1.bf16.xpose.msra.mxu0 0
    %1660 = vmatprep.subr.bf16.mxu0 0
    %1661 = vmatpush1.bf16.xpose.msra.mxu0 0
    %1662 = vmatprep.subr.bf16.mxu0 0
    %1663 = vmatpush1.bf16.xpose.msra.mxu0 0
    %1664 = vmatprep.subr.bf16.mxu0 0
    %1665 = vmatpush1.bf16.xpose.msra.mxu0 0
    %1666 = vmatprep.subr.bf16.mxu0 0
    %1667 = vmatpush1.bf16.xpose.msra.mxu0 0
    %1668 = vmatprep.subr.bf16.mxu0 0
    %1669 = vmatpush1.bf16.xpose.msra.mxu0 0
    %1670 = vmatprep.subr.bf16.mxu0 0
    %1671 = vmatpush1.bf16.xpose.msra.mxu0 0
    %1672 = vmatprep.subr.bf16.mxu0 0
    %1673 = vmatpush1.bf16.xpose.msra.mxu0 0
    %1674 = vmatprep.subr.bf16.mxu0 0
    %1675 = vmatpush1.bf16.xpose.msra.mxu0 0
    %1676 = vmatprep.subr.bf16.mxu0 0
    %1677 = vmatpush1.bf16.xpose.msra.mxu0 0
    %1678 = vmatprep.subr.bf16.mxu0 0
    %1679 = vmatpush1.bf16.xpose.msra.mxu0 0
    %1680 = vmatprep.subr.bf16.mxu0 0
    %1681 = vmatpush1.bf16.xpose.msra.mxu0 0
    %1682 = vmatprep.subr.bf16.mxu0 0
    %1683 = vmatpush1.bf16.xpose.msra.mxu0 0
    %1684 = vmatprep.mubr.bf16.mxu0 0
    %1685 = vmatmul.mubr.bf16.gmra.mrb[0].mxu0 %v1647
    %v1686 = vpop.f32.mrb[0].mxu0
    %v1687 = vadd.f32 %v108, %v1686
    %v1688 = vpop.f32.mrb[0].mxu0
    %v1689 = vpop.f32.mrb[0].mxu0
    %v1690 = vpop.f32.mrb[0].mxu0
    %1691 = vdwg.mxu0
    %v1693 = vsel %vm249, %v1521, 0
    %v1696 = vsel %vm249, %v1549, 0
    %1698 = vmatprep.subr.bf16.mxu0 0
    %1699 = vmatpush1.bf16.xpose.msra.mxu0 %v1696
    %1700 = vmatprep.subr.bf16.mxu0 0
    %1701 = vmatpush1.bf16.xpose.msra.mxu0 0
    %1702 = vmatprep.subr.bf16.mxu0 0
    %1703 = vmatpush1.bf16.xpose.msra.mxu0 0
    %1704 = vmatprep.subr.bf16.mxu0 0
    %1705 = vmatpush1.bf16.xpose.msra.mxu0 0
    %1706 = vmatprep.subr.bf16.mxu0 0
    %1707 = vmatpush1.bf16.xpose.msra.mxu0 0
    %1708 = vmatprep.subr.bf16.mxu0 0
    %1709 = vmatpush1.bf16.xpose.msra.mxu0 0
    %1710 = vmatprep.subr.bf16.mxu0 0
    %1711 = vmatpush1.bf16.xpose.msra.mxu0 0
    %1712 = vmatprep.subr.bf16.mxu0 0
    %1713 = vmatpush1.bf16.xpose.msra.mxu0 0
    %1714 = vmatprep.subr.bf16.mxu0 0
    %1715 = vmatpush1.bf16.xpose.msra.mxu0 0
    %1716 = vmatprep.subr.bf16.mxu0 0
    %1717 = vmatpush1.bf16.xpose.msra.mxu0 0
    %1718 = vmatprep.subr.bf16.mxu0 0
    %1719 = vmatpush1.bf16.xpose.msra.mxu0 0
    %1720 = vmatprep.subr.bf16.mxu0 0
    %1721 = vmatpush1.bf16.xpose.msra.mxu0 0
    %1722 = vmatprep.subr.bf16.mxu0 0
    %1723 = vmatpush1.bf16.xpose.msra.mxu0 0
    %1724 = vmatprep.subr.bf16.mxu0 0
    %1725 = vmatpush1.bf16.xpose.msra.mxu0 0
    %1726 = vmatprep.subr.bf16.mxu0 0
    %1727 = vmatpush1.bf16.xpose.msra.mxu0 0
    %1728 = vmatprep.subr.bf16.mxu0 0
    %1729 = vmatpush1.bf16.xpose.msra.mxu0 0
    %1730 = vmatprep.mubr.bf16.mxu0 0
    %1731 = vmatmul.mubr.bf16.gmra.mrb[0].mxu0 %v1693
    %v1732 = vpop.f32.mrb[0].mxu0
    %v1733 = vadd.f32 %v108, %v1732
    %v1734 = vpop.f32.mrb[0].mxu0
    %v1735 = vpop.f32.mrb[0].mxu0
    %v1736 = vpop.f32.mrb[0].mxu0
    %1737 = vdwg.mxu0
    %v1739 = vsel %vm249, %v1522, 0
    %v1742 = vsel %vm249, %v1550, 0
    %1744 = vmatprep.subr.bf16.mxu0 0
    %1745 = vmatpush1.bf16.xpose.msra.mxu0 %v1742
    %1746 = vmatprep.subr.bf16.mxu0 0
    %1747 = vmatpush1.bf16.xpose.msra.mxu0 0
    %1748 = vmatprep.subr.bf16.mxu0 0
    %1749 = vmatpush1.bf16.xpose.msra.mxu0 0
    %1750 = vmatprep.subr.bf16.mxu0 0
    %1751 = vmatpush1.bf16.xpose.msra.mxu0 0
    %1752 = vmatprep.subr.bf16.mxu0 0
    %1753 = vmatpush1.bf16.xpose.msra.mxu0 0
    %1754 = vmatprep.subr.bf16.mxu0 0
    %1755 = vmatpush1.bf16.xpose.msra.mxu0 0
    %1756 = vmatprep.subr.bf16.mxu0 0
    %1757 = vmatpush1.bf16.xpose.msra.mxu0 0
    %1758 = vmatprep.subr.bf16.mxu0 0
    %1759 = vmatpush1.bf16.xpose.msra.mxu0 0
    %1760 = vmatprep.subr.bf16.mxu0 0
    %1761 = vmatpush1.bf16.xpose.msra.mxu0 0
    %1762 = vmatprep.subr.bf16.mxu0 0
    %1763 = vmatpush1.bf16.xpose.msra.mxu0 0
    %1764 = vmatprep.subr.bf16.mxu0 0
    %1765 = vmatpush1.bf16.xpose.msra.mxu0 0
    %1766 = vmatprep.subr.bf16.mxu0 0
    %1767 = vmatpush1.bf16.xpose.msra.mxu0 0
    %1768 = vmatprep.subr.bf16.mxu0 0
    %1769 = vmatpush1.bf16.xpose.msra.mxu0 0
    %1770 = vmatprep.subr.bf16.mxu0 0
    %1771 = vmatpush1.bf16.xpose.msra.mxu0 0
    %1772 = vmatprep.subr.bf16.mxu0 0
    %1773 = vmatpush1.bf16.xpose.msra.mxu0 0
    %1774 = vmatprep.subr.bf16.mxu0 0
    %1775 = vmatpush1.bf16.xpose.msra.mxu0 0
    %1776 = vmatprep.mubr.bf16.mxu0 0
    %1777 = vmatmul.mubr.bf16.gmra.mrb[0].mxu0 %v1739
    %v1778 = vpop.f32.mrb[0].mxu0
    %v1779 = vadd.f32 %v108, %v1778
    %v1780 = vpop.f32.mrb[0].mxu0
    %v1781 = vpop.f32.mrb[0].mxu0
    %v1782 = vpop.f32.mrb[0].mxu0
    %1783 = vdwg.mxu0
    %v1785 = vsel %vm249, %v1523, 0
    %v1788 = vsel %vm249, %v1551, 0
    %1790 = vmatprep.subr.bf16.mxu0 0
    %1791 = vmatpush1.bf16.xpose.msra.mxu0 %v1788
    %1792 = vmatprep.subr.bf16.mxu0 0
    %1793 = vmatpush1.bf16.xpose.msra.mxu0 0
    %1794 = vmatprep.subr.bf16.mxu0 0
    %1795 = vmatpush1.bf16.xpose.msra.mxu0 0
    %1796 = vmatprep.subr.bf16.mxu0 0
    %1797 = vmatpush1.bf16.xpose.msra.mxu0 0
    %1798 = vmatprep.subr.bf16.mxu0 0
    %1799 = vmatpush1.bf16.xpose.msra.mxu0 0
    %1800 = vmatprep.subr.bf16.mxu0 0
    %1801 = vmatpush1.bf16.xpose.msra.mxu0 0
    %1802 = vmatprep.subr.bf16.mxu0 0
    %1803 = vmatpush1.bf16.xpose.msra.mxu0 0
    %1804 = vmatprep.subr.bf16.mxu0 0
    %1805 = vmatpush1.bf16.xpose.msra.mxu0 0
    %1806 = vmatprep.subr.bf16.mxu0 0
    %1807 = vmatpush1.bf16.xpose.msra.mxu0 0
    %1808 = vmatprep.subr.bf16.mxu0 0
    %1809 = vmatpush1.bf16.xpose.msra.mxu0 0
    %1810 = vmatprep.subr.bf16.mxu0 0
    %1811 = vmatpush1.bf16.xpose.msra.mxu0 0
    %1812 = vmatprep.subr.bf16.mxu0 0
    %1813 = vmatpush1.bf16.xpose.msra.mxu0 0
    %1814 = vmatprep.subr.bf16.mxu0 0
    %1815 = vmatpush1.bf16.xpose.msra.mxu0 0
    %1816 = vmatprep.subr.bf16.mxu0 0
    %1817 = vmatpush1.bf16.xpose.msra.mxu0 0
    %1818 = vmatprep.subr.bf16.mxu0 0
    %1819 = vmatpush1.bf16.xpose.msra.mxu0 0
    %1820 = vmatprep.subr.bf16.mxu0 0
    %1821 = vmatpush1.bf16.xpose.msra.mxu0 0
    %1822 = vmatprep.mubr.bf16.mxu0 0
    %1823 = vmatmul.mubr.bf16.gmra.mrb[0].mxu0 %v1785
    %v1824 = vpop.f32.mrb[0].mxu0
    %v1825 = vadd.f32 %v108, %v1824
    %v1826 = vpop.f32.mrb[0].mxu0
    %v1827 = vpop.f32.mrb[0].mxu0
    %v1828 = vpop.f32.mrb[0].mxu0
    %1829 = vdwg.mxu0
    %v1831 = vsel %vm249, %v1524, 0
    %v1834 = vsel %vm249, %v1552, 0
    %1836 = vmatprep.subr.bf16.mxu0 0
    %1837 = vmatpush1.bf16.xpose.msra.mxu0 %v1834
    %1838 = vmatprep.subr.bf16.mxu0 0
    %1839 = vmatpush1.bf16.xpose.msra.mxu0 0
    %1840 = vmatprep.subr.bf16.mxu0 0
    %1841 = vmatpush1.bf16.xpose.msra.mxu0 0
    %1842 = vmatprep.subr.bf16.mxu0 0
    %1843 = vmatpush1.bf16.xpose.msra.mxu0 0
    %1844 = vmatprep.subr.bf16.mxu0 0
    %1845 = vmatpush1.bf16.xpose.msra.mxu0 0
    %1846 = vmatprep.subr.bf16.mxu0 0
    %1847 = vmatpush1.bf16.xpose.msra.mxu0 0
    %1848 = vmatprep.subr.bf16.mxu0 0
    %1849 = vmatpush1.bf16.xpose.msra.mxu0 0
    %1850 = vmatprep.subr.bf16.mxu0 0
    %1851 = vmatpush1.bf16.xpose.msra.mxu0 0
    %1852 = vmatprep.subr.bf16.mxu0 0
    %1853 = vmatpush1.bf16.xpose.msra.mxu0 0
    %1854 = vmatprep.subr.bf16.mxu0 0
    %1855 = vmatpush1.bf16.xpose.msra.mxu0 0
    %1856 = vmatprep.subr.bf16.mxu0 0
    %1857 = vmatpush1.bf16.xpose.msra.mxu0 0
    %1858 = vmatprep.subr.bf16.mxu0 0
    %1859 = vmatpush1.bf16.xpose.msra.mxu0 0
    %1860 = vmatprep.subr.bf16.mxu0 0
    %1861 = vmatpush1.bf16.xpose.msra.mxu0 0
    %1862 = vmatprep.subr.bf16.mxu0 0
    %1863 = vmatpush1.bf16.xpose.msra.mxu0 0
    %1864 = vmatprep.subr.bf16.mxu0 0
    %1865 = vmatpush1.bf16.xpose.msra.mxu0 0
    %1866 = vmatprep.subr.bf16.mxu0 0
    %1867 = vmatpush1.bf16.xpose.msra.mxu0 0
    %1868 = vmatprep.mubr.bf16.mxu0 0
    %1869 = vmatmul.mubr.bf16.gmra.mrb[0].mxu0 %v1831
    %v1870 = vpop.f32.mrb[0].mxu0
    %v1871 = vadd.f32 %v108, %v1870
    %v1872 = vpop.f32.mrb[0].mxu0
    %v1873 = vpop.f32.mrb[0].mxu0
    %v1874 = vpop.f32.mrb[0].mxu0
    %1875 = vdwg.mxu0
    %v1877 = vsel %vm249, %v1525, 0
    %v1880 = vsel %vm249, %v1553, 0
    %1882 = vmatprep.subr.bf16.mxu0 0
    %1883 = vmatpush1.bf16.xpose.msra.mxu0 %v1880
    %1884 = vmatprep.subr.bf16.mxu0 0
    %1885 = vmatpush1.bf16.xpose.msra.mxu0 0
    %1886 = vmatprep.subr.bf16.mxu0 0
    %1887 = vmatpush1.bf16.xpose.msra.mxu0 0
    %1888 = vmatprep.subr.bf16.mxu0 0
    %1889 = vmatpush1.bf16.xpose.msra.mxu0 0
    %1890 = vmatprep.subr.bf16.mxu0 0
    %1891 = vmatpush1.bf16.xpose.msra.mxu0 0
    %1892 = vmatprep.subr.bf16.mxu0 0
    %1893 = vmatpush1.bf16.xpose.msra.mxu0 0
    %1894 = vmatprep.subr.bf16.mxu0 0
    %1895 = vmatpush1.bf16.xpose.msra.mxu0 0
    %1896 = vmatprep.subr.bf16.mxu0 0
    %1897 = vmatpush1.bf16.xpose.msra.mxu0 0
    %1898 = vmatprep.subr.bf16.mxu0 0
    %1899 = vmatpush1.bf16.xpose.msra.mxu0 0
    %1900 = vmatprep.subr.bf16.mxu0 0
    %1901 = vmatpush1.bf16.xpose.msra.mxu0 0
    %1902 = vmatprep.subr.bf16.mxu0 0
    %1903 = vmatpush1.bf16.xpose.msra.mxu0 0
    %1904 = vmatprep.subr.bf16.mxu0 0
    %1905 = vmatpush1.bf16.xpose.msra.mxu0 0
    %1906 = vmatprep.subr.bf16.mxu0 0
    %1907 = vmatpush1.bf16.xpose.msra.mxu0 0
    %1908 = vmatprep.subr.bf16.mxu0 0
    %1909 = vmatpush1.bf16.xpose.msra.mxu0 0
    %1910 = vmatprep.subr.bf16.mxu0 0
    %1911 = vmatpush1.bf16.xpose.msra.mxu0 0
    %1912 = vmatprep.subr.bf16.mxu0 0
    %1913 = vmatpush1.bf16.xpose.msra.mxu0 0
    %1914 = vmatprep.mubr.bf16.mxu0 0
    %1915 = vmatmul.mubr.bf16.gmra.mrb[0].mxu0 %v1877
    %v1916 = vpop.f32.mrb[0].mxu0
    %v1917 = vadd.f32 %v108, %v1916
    %v1918 = vpop.f32.mrb[0].mxu0
    %v1919 = vpop.f32.mrb[0].mxu0
    %v1920 = vpop.f32.mrb[0].mxu0
    %1921 = vdwg.mxu0
    %v1922 = vsel %vm249, %v1595, -inf
    %1923 = vmax.xlane.f32.xlu0 %v1922
    %v1924 = vpop.xlane.xlu0 %1923
    %v1925 = vsel %vm249, %v1641, -inf
    %1926 = vmax.xlane.f32.xlu0 %v1925
    %v1927 = vpop.xlane.xlu0 %1926
    %v1928 = vsel %vm249, %v1687, -inf
    %1929 = vmax.xlane.f32.xlu0 %v1928
    %v1930 = vpop.xlane.xlu0 %1929
    %v1931 = vsel %vm249, %v1733, -inf
    %1932 = vmax.xlane.f32.xlu0 %v1931
    %v1933 = vpop.xlane.xlu0 %1932
    %v1934 = vsel %vm249, %v1779, -inf
    %1935 = vmax.xlane.f32.xlu0 %v1934
    %v1936 = vpop.xlane.xlu0 %1935
    %v1937 = vsel %vm249, %v1825, -inf
    %1938 = vmax.xlane.f32.xlu0 %v1937
    %v1939 = vpop.xlane.xlu0 %1938
    %v1940 = vsel %vm249, %v1871, -inf
    %1941 = vmax.xlane.f32.xlu0 %v1940
    %v1942 = vpop.xlane.xlu0 %1941
    %v1943 = vsel %vm249, %v1917, -inf
    %1944 = vmax.xlane.f32.xlu0 %v1943
    %v1945 = vpop.xlane.xlu0 %1944
    %v1946 = vsub.f32 %v1595, %v1924
    %v1947 = vsub.f32 %v1641, %v1927
    %v1948 = vsub.f32 %v1687, %v1930
    %v1949 = vsub.f32 %v1733, %v1933
    %v1950 = vsub.f32 %v1779, %v1936
    %v1951 = vsub.f32 %v1825, %v1939
    %v1952 = vsub.f32 %v1871, %v1942
    %v1953 = vsub.f32 %v1917, %v1945
    %v1954 = vmul.f32 %v1946, 1.442695
    %v1955 = vpow.pop %v1954
    %v1956 = vmul.f32 %v1947, 1.442695
    %v1957 = vpow.pop %v1956
    %v1958 = vmul.f32 %v1948, 1.442695
    %v1959 = vpow.pop %v1958
    %v1960 = vmul.f32 %v1949, 1.442695
    %v1961 = vpow.pop %v1960
    %v1962 = vmul.f32 %v1950, 1.442695
    %v1963 = vpow.pop %v1962
    %v1964 = vmul.f32 %v1951, 1.442695
    %v1965 = vpow.pop %v1964
    %v1966 = vmul.f32 %v1952, 1.442695
    %v1967 = vpow.pop %v1966
    %v1968 = vmul.f32 %v1953, 1.442695
    %v1969 = vpow.pop %v1968
    %v1970 = vsel %vm249, %v1955, 0.0
    %1971 = vadd.xlane.f32.xlu0 %v1970
    %v1972 = vpop.xlane.xlu0 %1971
    %v1973 = vsel %vm249, %v1957, 0.0
    %1974 = vadd.xlane.f32.xlu0 %v1973
    %v1975 = vpop.xlane.xlu0 %1974
    %v1976 = vsel %vm249, %v1959, 0.0
    %1977 = vadd.xlane.f32.xlu0 %v1976
    %v1978 = vpop.xlane.xlu0 %1977
    %v1979 = vsel %vm249, %v1961, 0.0
    %1980 = vadd.xlane.f32.xlu0 %v1979
    %v1981 = vpop.xlane.xlu0 %1980
    %v1982 = vsel %vm249, %v1963, 0.0
    %1983 = vadd.xlane.f32.xlu0 %v1982
    %v1984 = vpop.xlane.xlu0 %1983
    %v1985 = vsel %vm249, %v1965, 0.0
    %1986 = vadd.xlane.f32.xlu0 %v1985
    %v1987 = vpop.xlane.xlu0 %1986
    %v1988 = vsel %vm249, %v1967, 0.0
    %1989 = vadd.xlane.f32.xlu0 %v1988
    %v1990 = vpop.xlane.xlu0 %1989
    %v1991 = vsel %vm249, %v1969, 0.0
    %1992 = vadd.xlane.f32.xlu0 %v1991
    %v1993 = vpop.xlane.xlu0 %1992
    %v1994 = vrcp.pop %v1972
    %v1995 = vrcp.pop %v1975
    %v1996 = vrcp.pop %v1978
    %v1997 = vrcp.pop %v1981
    %v1998 = vrcp.pop %v1984
    %v1999 = vrcp.pop %v1987
    %v2000 = vrcp.pop %v1990
    %v2001 = vrcp.pop %v1993
    %v2002 = vmul.f32 %v1955, %v1994
    %v2003 = vmul.f32 %v1957, %v1995
    %v2004 = vmul.f32 %v1959, %v1996
    %v2005 = vmul.f32 %v1961, %v1997
    %v2006 = vmul.f32 %v1963, %v1998
    %v2007 = vmul.f32 %v1965, %v1999
    %v2008 = vmul.f32 %v1967, %v2000
    %v2009 = vmul.f32 %v1969, %v2001
    %v2010 = vpack.c.bf16 %v2002, %v2002
    %v2011 = vpack.c.bf16 %v2003, %v2003
    %v2012 = vpack.c.bf16 %v2004, %v2004
    %v2013 = vpack.c.bf16 %v2005, %v2005
    %v2014 = vpack.c.bf16 %v2006, %v2006
    %v2015 = vpack.c.bf16 %v2007, %v2007
    %v2016 = vpack.c.bf16 %v2008, %v2008
    %v2017 = vpack.c.bf16 %v2009, %v2009
    %2019 = vrot.lane.b32.xlu0 %v1546, 96
    %v2020 = vpop.permute.xlu0 %2019
    %v2022 = vsel %vm249, %v2010, 0
    %v2025 = vsel %vm740, %v2020, 0
    %2027 = vmatprep.subr.bf16.mxu0 0
    %2028 = vmatpush1.bf16.msra.mxu0 %v2025
    %2029 = vmatprep.subr.bf16.mxu0 0
    %2030 = vmatpush1.bf16.msra.mxu0 0
    %2031 = vmatprep.subr.bf16.mxu0 0
    %2032 = vmatpush1.bf16.msra.mxu0 0
    %2033 = vmatprep.subr.bf16.mxu0 0
    %2034 = vmatpush1.bf16.msra.mxu0 0
    %2035 = vmatprep.subr.bf16.mxu0 0
    %2036 = vmatpush1.bf16.msra.mxu0 0
    %2037 = vmatprep.subr.bf16.mxu0 0
    %2038 = vmatpush1.bf16.msra.mxu0 0
    %2039 = vmatprep.subr.bf16.mxu0 0
    %2040 = vmatpush1.bf16.msra.mxu0 0
    %2041 = vmatprep.subr.bf16.mxu0 0
    %2042 = vmatpush1.bf16.msra.mxu0 0
    %2043 = vmatprep.subr.bf16.mxu0 0
    %2044 = vmatpush1.bf16.msra.mxu0 0
    %2045 = vmatprep.subr.bf16.mxu0 0
    %2046 = vmatpush1.bf16.msra.mxu0 0
    %2047 = vmatprep.subr.bf16.mxu0 0
    %2048 = vmatpush1.bf16.msra.mxu0 0
    %2049 = vmatprep.subr.bf16.mxu0 0
    %2050 = vmatpush1.bf16.msra.mxu0 0
    %2051 = vmatprep.subr.bf16.mxu0 0
    %2052 = vmatpush1.bf16.msra.mxu0 0
    %2053 = vmatprep.subr.bf16.mxu0 0
    %2054 = vmatpush1.bf16.msra.mxu0 0
    %2055 = vmatprep.subr.bf16.mxu0 0
    %2056 = vmatpush1.bf16.msra.mxu0 0
    %2057 = vmatprep.subr.bf16.mxu0 0
    %2058 = vmatpush1.bf16.msra.mxu0 0
    %2059 = vmatprep.mubr.bf16.mxu0 0
    %2060 = vmatmul.mubr.bf16.gmra.mrb[0].mxu0 %v2022
    %v2061 = vpop.f32.mrb[0].mxu0
    %v2062 = vadd.f32 0.0, %v2061
    %v2063 = vpop.f32.mrb[0].mxu0
    %v2064 = vpop.f32.mrb[0].mxu0
    %v2065 = vpop.f32.mrb[0].mxu0
    %2066 = vdwg.mxu0
    %2068 = vrot.lane.b32.xlu0 %v1547, 96
    %v2069 = vpop.permute.xlu0 %2068
    %v2071 = vsel %vm249, %v2011, 0
    %v2074 = vsel %vm740, %v2069, 0
    %2076 = vmatprep.subr.bf16.mxu0 0
    %2077 = vmatpush1.bf16.msra.mxu0 %v2074
    %2078 = vmatprep.subr.bf16.mxu0 0
    %2079 = vmatpush1.bf16.msra.mxu0 0
    %2080 = vmatprep.subr.bf16.mxu0 0
    %2081 = vmatpush1.bf16.msra.mxu0 0
    %2082 = vmatprep.subr.bf16.mxu0 0
    %2083 = vmatpush1.bf16.msra.mxu0 0
    %2084 = vmatprep.subr.bf16.mxu0 0
    %2085 = vmatpush1.bf16.msra.mxu0 0
    %2086 = vmatprep.subr.bf16.mxu0 0
    %2087 = vmatpush1.bf16.msra.mxu0 0
    %2088 = vmatprep.subr.bf16.mxu0 0
    %2089 = vmatpush1.bf16.msra.mxu0 0
    %2090 = vmatprep.subr.bf16.mxu0 0
    %2091 = vmatpush1.bf16.msra.mxu0 0
    %2092 = vmatprep.subr.bf16.mxu0 0
    %2093 = vmatpush1.bf16.msra.mxu0 0
    %2094 = vmatprep.subr.bf16.mxu0 0
    %2095 = vmatpush1.bf16.msra.mxu0 0
    %2096 = vmatprep.subr.bf16.mxu0 0
    %2097 = vmatpush1.bf16.msra.mxu0 0
    %2098 = vmatprep.subr.bf16.mxu0 0
    %2099 = vmatpush1.bf16.msra.mxu0 0
    %2100 = vmatprep.subr.bf16.mxu0 0
    %2101 = vmatpush1.bf16.msra.mxu0 0
    %2102 = vmatprep.subr.bf16.mxu0 0
    %2103 = vmatpush1.bf16.msra.mxu0 0
    %2104 = vmatprep.subr.bf16.mxu0 0
    %2105 = vmatpush1.bf16.msra.mxu0 0
    %2106 = vmatprep.subr.bf16.mxu0 0
    %2107 = vmatpush1.bf16.msra.mxu0 0
    %2108 = vmatprep.mubr.bf16.mxu0 0
    %2109 = vmatmul.mubr.bf16.gmra.mrb[0].mxu0 %v2071
    %v2110 = vpop.f32.mrb[0].mxu0
    %v2111 = vadd.f32 0.0, %v2110
    %v2112 = vpop.f32.mrb[0].mxu0
    %v2113 = vpop.f32.mrb[0].mxu0
    %v2114 = vpop.f32.mrb[0].mxu0
    %2115 = vdwg.mxu0
    %2117 = vrot.lane.b32.xlu0 %v1548, 96
    %v2118 = vpop.permute.xlu0 %2117
    %v2120 = vsel %vm249, %v2012, 0
    %v2123 = vsel %vm740, %v2118, 0
    %2125 = vmatprep.subr.bf16.mxu0 0
    %2126 = vmatpush1.bf16.msra.mxu0 %v2123
    %2127 = vmatprep.subr.bf16.mxu0 0
    %2128 = vmatpush1.bf16.msra.mxu0 0
    %2129 = vmatprep.subr.bf16.mxu0 0
    %2130 = vmatpush1.bf16.msra.mxu0 0
    %2131 = vmatprep.subr.bf16.mxu0 0
    %2132 = vmatpush1.bf16.msra.mxu0 0
    %2133 = vmatprep.subr.bf16.mxu0 0
    %2134 = vmatpush1.bf16.msra.mxu0 0
    %2135 = vmatprep.subr.bf16.mxu0 0
    %2136 = vmatpush1.bf16.msra.mxu0 0
    %2137 = vmatprep.subr.bf16.mxu0 0
    %2138 = vmatpush1.bf16.msra.mxu0 0
    %2139 = vmatprep.subr.bf16.mxu0 0
    %2140 = vmatpush1.bf16.msra.mxu0 0
    %2141 = vmatprep.subr.bf16.mxu0 0
    %2142 = vmatpush1.bf16.msra.mxu0 0
    %2143 = vmatprep.subr.bf16.mxu0 0
    %2144 = vmatpush1.bf16.msra.mxu0 0
    %2145 = vmatprep.subr.bf16.mxu0 0
    %2146 = vmatpush1.bf16.msra.mxu0 0
    %2147 = vmatprep.subr.bf16.mxu0 0
    %2148 = vmatpush1.bf16.msra.mxu0 0
    %2149 = vmatprep.subr.bf16.mxu0 0
    %2150 = vmatpush1.bf16.msra.mxu0 0
    %2151 = vmatprep.subr.bf16.mxu0 0
    %2152 = vmatpush1.bf16.msra.mxu0 0
    %2153 = vmatprep.subr.bf16.mxu0 0
    %2154 = vmatpush1.bf16.msra.mxu0 0
    %2155 = vmatprep.subr.bf16.mxu0 0
    %2156 = vmatpush1.bf16.msra.mxu0 0
    %2157 = vmatprep.mubr.bf16.mxu0 0
    %2158 = vmatmul.mubr.bf16.gmra.mrb[0].mxu0 %v2120
    %v2159 = vpop.f32.mrb[0].mxu0
    %v2160 = vadd.f32 0.0, %v2159
    %v2161 = vpop.f32.mrb[0].mxu0
    %v2162 = vpop.f32.mrb[0].mxu0
    %v2163 = vpop.f32.mrb[0].mxu0
    %2164 = vdwg.mxu0
    %2166 = vrot.lane.b32.xlu0 %v1549, 96
    %v2167 = vpop.permute.xlu0 %2166
    %v2169 = vsel %vm249, %v2013, 0
    %v2172 = vsel %vm740, %v2167, 0
    %2174 = vmatprep.subr.bf16.mxu0 0
    %2175 = vmatpush1.bf16.msra.mxu0 %v2172
    %2176 = vmatprep.subr.bf16.mxu0 0
    %2177 = vmatpush1.bf16.msra.mxu0 0
    %2178 = vmatprep.subr.bf16.mxu0 0
    %2179 = vmatpush1.bf16.msra.mxu0 0
    %2180 = vmatprep.subr.bf16.mxu0 0
    %2181 = vmatpush1.bf16.msra.mxu0 0
    %2182 = vmatprep.subr.bf16.mxu0 0
    %2183 = vmatpush1.bf16.msra.mxu0 0
    %2184 = vmatprep.subr.bf16.mxu0 0
    %2185 = vmatpush1.bf16.msra.mxu0 0
    %2186 = vmatprep.subr.bf16.mxu0 0
    %2187 = vmatpush1.bf16.msra.mxu0 0
    %2188 = vmatprep.subr.bf16.mxu0 0
    %2189 = vmatpush1.bf16.msra.mxu0 0
    %2190 = vmatprep.subr.bf16.mxu0 0
    %2191 = vmatpush1.bf16.msra.mxu0 0
    %2192 = vmatprep.subr.bf16.mxu0 0
    %2193 = vmatpush1.bf16.msra.mxu0 0
    %2194 = vmatprep.subr.bf16.mxu0 0
    %2195 = vmatpush1.bf16.msra.mxu0 0
    %2196 = vmatprep.subr.bf16.mxu0 0
    %2197 = vmatpush1.bf16.msra.mxu0 0
    %2198 = vmatprep.subr.bf16.mxu0 0
    %2199 = vmatpush1.bf16.msra.mxu0 0
    %2200 = vmatprep.subr.bf16.mxu0 0
    %2201 = vmatpush1.bf16.msra.mxu0 0
    %2202 = vmatprep.subr.bf16.mxu0 0
    %2203 = vmatpush1.bf16.msra.mxu0 0
    %2204 = vmatprep.subr.bf16.mxu0 0
    %2205 = vmatpush1.bf16.msra.mxu0 0
    %2206 = vmatprep.mubr.bf16.mxu0 0
    %2207 = vmatmul.mubr.bf16.gmra.mrb[0].mxu0 %v2169
    %v2208 = vpop.f32.mrb[0].mxu0
    %v2209 = vadd.f32 0.0, %v2208
    %v2210 = vpop.f32.mrb[0].mxu0
    %v2211 = vpop.f32.mrb[0].mxu0
    %v2212 = vpop.f32.mrb[0].mxu0
    %2213 = vdwg.mxu0
    %2215 = vrot.lane.b32.xlu0 %v1550, 96
    %v2216 = vpop.permute.xlu0 %2215
    %v2218 = vsel %vm249, %v2014, 0
    %v2221 = vsel %vm740, %v2216, 0
    %2223 = vmatprep.subr.bf16.mxu0 0
    %2224 = vmatpush1.bf16.msra.mxu0 %v2221
    %2225 = vmatprep.subr.bf16.mxu0 0
    %2226 = vmatpush1.bf16.msra.mxu0 0
    %2227 = vmatprep.subr.bf16.mxu0 0
    %2228 = vmatpush1.bf16.msra.mxu0 0
    %2229 = vmatprep.subr.bf16.mxu0 0
    %2230 = vmatpush1.bf16.msra.mxu0 0
    %2231 = vmatprep.subr.bf16.mxu0 0
    %2232 = vmatpush1.bf16.msra.mxu0 0
    %2233 = vmatprep.subr.bf16.mxu0 0
    %2234 = vmatpush1.bf16.msra.mxu0 0
    %2235 = vmatprep.subr.bf16.mxu0 0
    %2236 = vmatpush1.bf16.msra.mxu0 0
    %2237 = vmatprep.subr.bf16.mxu0 0
    %2238 = vmatpush1.bf16.msra.mxu0 0
    %2239 = vmatprep.subr.bf16.mxu0 0
    %2240 = vmatpush1.bf16.msra.mxu0 0
    %2241 = vmatprep.subr.bf16.mxu0 0
    %2242 = vmatpush1.bf16.msra.mxu0 0
    %2243 = vmatprep.subr.bf16.mxu0 0
    %2244 = vmatpush1.bf16.msra.mxu0 0
    %2245 = vmatprep.subr.bf16.mxu0 0
    %2246 = vmatpush1.bf16.msra.mxu0 0
    %2247 = vmatprep.subr.bf16.mxu0 0
    %2248 = vmatpush1.bf16.msra.mxu0 0
    %2249 = vmatprep.subr.bf16.mxu0 0
    %2250 = vmatpush1.bf16.msra.mxu0 0
    %2251 = vmatprep.subr.bf16.mxu0 0
    %2252 = vmatpush1.bf16.msra.mxu0 0
    %2253 = vmatprep.subr.bf16.mxu0 0
    %2254 = vmatpush1.bf16.msra.mxu0 0
    %2255 = vmatprep.mubr.bf16.mxu0 0
    %2256 = vmatmul.mubr.bf16.gmra.mrb[0].mxu0 %v2218
    %v2257 = vpop.f32.mrb[0].mxu0
    %v2258 = vadd.f32 0.0, %v2257
    %v2259 = vpop.f32.mrb[0].mxu0
    %v2260 = vpop.f32.mrb[0].mxu0
    %v2261 = vpop.f32.mrb[0].mxu0
    %2262 = vdwg.mxu0
    %2264 = vrot.lane.b32.xlu0 %v1551, 96
    %v2265 = vpop.permute.xlu0 %2264
    %v2267 = vsel %vm249, %v2015, 0
    %v2270 = vsel %vm740, %v2265, 0
    %2272 = vmatprep.subr.bf16.mxu0 0
    %2273 = vmatpush1.bf16.msra.mxu0 %v2270
    %2274 = vmatprep.subr.bf16.mxu0 0
    %2275 = vmatpush1.bf16.msra.mxu0 0
    %2276 = vmatprep.subr.bf16.mxu0 0
    %2277 = vmatpush1.bf16.msra.mxu0 0
    %2278 = vmatprep.subr.bf16.mxu0 0
    %2279 = vmatpush1.bf16.msra.mxu0 0
    %2280 = vmatprep.subr.bf16.mxu0 0
    %2281 = vmatpush1.bf16.msra.mxu0 0
    %2282 = vmatprep.subr.bf16.mxu0 0
    %2283 = vmatpush1.bf16.msra.mxu0 0
    %2284 = vmatprep.subr.bf16.mxu0 0
    %2285 = vmatpush1.bf16.msra.mxu0 0
    %2286 = vmatprep.subr.bf16.mxu0 0
    %2287 = vmatpush1.bf16.msra.mxu0 0
    %2288 = vmatprep.subr.bf16.mxu0 0
    %2289 = vmatpush1.bf16.msra.mxu0 0
    %2290 = vmatprep.subr.bf16.mxu0 0
    %2291 = vmatpush1.bf16.msra.mxu0 0
    %2292 = vmatprep.subr.bf16.mxu0 0
    %2293 = vmatpush1.bf16.msra.mxu0 0
    %2294 = vmatprep.subr.bf16.mxu0 0
    %2295 = vmatpush1.bf16.msra.mxu0 0
    %2296 = vmatprep.subr.bf16.mxu0 0
    %2297 = vmatpush1.bf16.msra.mxu0 0
    %2298 = vmatprep.subr.bf16.mxu0 0
    %2299 = vmatpush1.bf16.msra.mxu0 0
    %2300 = vmatprep.subr.bf16.mxu0 0
    %2301 = vmatpush1.bf16.msra.mxu0 0
    %2302 = vmatprep.subr.bf16.mxu0 0
    %2303 = vmatpush1.bf16.msra.mxu0 0
    %2304 = vmatprep.mubr.bf16.mxu0 0
    %2305 = vmatmul.mubr.bf16.gmra.mrb[0].mxu0 %v2267
    %v2306 = vpop.f32.mrb[0].mxu0
    %v2307 = vadd.f32 0.0, %v2306
    %v2308 = vpop.f32.mrb[0].mxu0
    %v2309 = vpop.f32.mrb[0].mxu0
    %v2310 = vpop.f32.mrb[0].mxu0
    %2311 = vdwg.mxu0
    %2313 = vrot.lane.b32.xlu0 %v1552, 96
    %v2314 = vpop.permute.xlu0 %2313
    %v2316 = vsel %vm249, %v2016, 0
    %v2319 = vsel %vm740, %v2314, 0
    %2321 = vmatprep.subr.bf16.mxu0 0
    %2322 = vmatpush1.bf16.msra.mxu0 %v2319
    %2323 = vmatprep.subr.bf16.mxu0 0
    %2324 = vmatpush1.bf16.msra.mxu0 0
    %2325 = vmatprep.subr.bf16.mxu0 0
    %2326 = vmatpush1.bf16.msra.mxu0 0
    %2327 = vmatprep.subr.bf16.mxu0 0
    %2328 = vmatpush1.bf16.msra.mxu0 0
    %2329 = vmatprep.subr.bf16.mxu0 0
    %2330 = vmatpush1.bf16.msra.mxu0 0
    %2331 = vmatprep.subr.bf16.mxu0 0
    %2332 = vmatpush1.bf16.msra.mxu0 0
    %2333 = vmatprep.subr.bf16.mxu0 0
    %2334 = vmatpush1.bf16.msra.mxu0 0
    %2335 = vmatprep.subr.bf16.mxu0 0
    %2336 = vmatpush1.bf16.msra.mxu0 0
    %2337 = vmatprep.subr.bf16.mxu0 0
    %2338 = vmatpush1.bf16.msra.mxu0 0
    %2339 = vmatprep.subr.bf16.mxu0 0
    %2340 = vmatpush1.bf16.msra.mxu0 0
    %2341 = vmatprep.subr.bf16.mxu0 0
    %2342 = vmatpush1.bf16.msra.mxu0 0
    %2343 = vmatprep.subr.bf16.mxu0 0
    %2344 = vmatpush1.bf16.msra.mxu0 0
    %2345 = vmatprep.subr.bf16.mxu0 0
    %2346 = vmatpush1.bf16.msra.mxu0 0
    %2347 = vmatprep.subr.bf16.mxu0 0
    %2348 = vmatpush1.bf16.msra.mxu0 0
    %2349 = vmatprep.subr.bf16.mxu0 0
    %2350 = vmatpush1.bf16.msra.mxu0 0
    %2351 = vmatprep.subr.bf16.mxu0 0
    %2352 = vmatpush1.bf16.msra.mxu0 0
    %2353 = vmatprep.mubr.bf16.mxu0 0
    %2354 = vmatmul.mubr.bf16.gmra.mrb[0].mxu0 %v2316
    %v2355 = vpop.f32.mrb[0].mxu0
    %v2356 = vadd.f32 0.0, %v2355
    %v2357 = vpop.f32.mrb[0].mxu0
    %v2358 = vpop.f32.mrb[0].mxu0
    %v2359 = vpop.f32.mrb[0].mxu0
    %2360 = vdwg.mxu0
    %2362 = vrot.lane.b32.xlu0 %v1553, 96
    %v2363 = vpop.permute.xlu0 %2362
    %v2365 = vsel %vm249, %v2017, 0
    %v2368 = vsel %vm740, %v2363, 0
    %2370 = vmatprep.subr.bf16.mxu0 0
    %2371 = vmatpush1.bf16.msra.mxu0 %v2368
    %2372 = vmatprep.subr.bf16.mxu0 0
    %2373 = vmatpush1.bf16.msra.mxu0 0
    %2374 = vmatprep.subr.bf16.mxu0 0
    %2375 = vmatpush1.bf16.msra.mxu0 0
    %2376 = vmatprep.subr.bf16.mxu0 0
    %2377 = vmatpush1.bf16.msra.mxu0 0
    %2378 = vmatprep.subr.bf16.mxu0 0
    %2379 = vmatpush1.bf16.msra.mxu0 0
    %2380 = vmatprep.subr.bf16.mxu0 0
    %2381 = vmatpush1.bf16.msra.mxu0 0
    %2382 = vmatprep.subr.bf16.mxu0 0
    %2383 = vmatpush1.bf16.msra.mxu0 0
    %2384 = vmatprep.subr.bf16.mxu0 0
    %2385 = vmatpush1.bf16.msra.mxu0 0
    %2386 = vmatprep.subr.bf16.mxu0 0
    %2387 = vmatpush1.bf16.msra.mxu0 0
    %2388 = vmatprep.subr.bf16.mxu0 0
    %2389 = vmatpush1.bf16.msra.mxu0 0
    %2390 = vmatprep.subr.bf16.mxu0 0
    %2391 = vmatpush1.bf16.msra.mxu0 0
    %2392 = vmatprep.subr.bf16.mxu0 0
    %2393 = vmatpush1.bf16.msra.mxu0 0
    %2394 = vmatprep.subr.bf16.mxu0 0
    %2395 = vmatpush1.bf16.msra.mxu0 0
    %2396 = vmatprep.subr.bf16.mxu0 0
    %2397 = vmatpush1.bf16.msra.mxu0 0
    %2398 = vmatprep.subr.bf16.mxu0 0
    %2399 = vmatpush1.bf16.msra.mxu0 0
    %2400 = vmatprep.subr.bf16.mxu0 0
    %2401 = vmatpush1.bf16.msra.mxu0 0
    %2402 = vmatprep.mubr.bf16.mxu0 0
    %2403 = vmatmul.mubr.bf16.gmra.mrb[0].mxu0 %v2365
    %v2404 = vpop.f32.mrb[0].mxu0
    %v2405 = vadd.f32 0.0, %v2404
    %v2406 = vpop.f32.mrb[0].mxu0
    %v2407 = vpop.f32.mrb[0].mxu0
    %v2408 = vpop.f32.mrb[0].mxu0
    %2409 = vdwg.mxu0
    %v2410 = vpack.c.bf16 %v2111, %v2062
    %v2411 = vpack.c.bf16 %v2209, %v2160
    %v2412 = vpack.c.bf16 %v2307, %v2258
    %v2413 = vpack.c.bf16 %v2405, %v2356
    %v2415 = vsel %vm249, %v2410, 0
    %v2418 = vsel %vm740, %v1378, 0
    %2420 = vmatprep.subr.bf16.mxu0 0
    %2421 = vmatpush1.bf16.msra.mxu0 %v2418
    %2422 = vmatprep.subr.bf16.mxu0 0
    %2423 = vmatpush1.bf16.msra.mxu0 0
    %2424 = vmatprep.subr.bf16.mxu0 0
    %2425 = vmatpush1.bf16.msra.mxu0 0
    %2426 = vmatprep.subr.bf16.mxu0 0
    %2427 = vmatpush1.bf16.msra.mxu0 0
    %2428 = vmatprep.subr.bf16.mxu0 0
    %2429 = vmatpush1.bf16.msra.mxu0 0
    %2430 = vmatprep.subr.bf16.mxu0 0
    %2431 = vmatpush1.bf16.msra.mxu0 0
    %2432 = vmatprep.subr.bf16.mxu0 0
    %2433 = vmatpush1.bf16.msra.mxu0 0
    %2434 = vmatprep.subr.bf16.mxu0 0
    %2435 = vmatpush1.bf16.msra.mxu0 0
    %2436 = vmatprep.subr.bf16.mxu0 0
    %2437 = vmatpush1.bf16.msra.mxu0 0
    %2438 = vmatprep.subr.bf16.mxu0 0
    %2439 = vmatpush1.bf16.msra.mxu0 0
    %2440 = vmatprep.subr.bf16.mxu0 0
    %2441 = vmatpush1.bf16.msra.mxu0 0
    %2442 = vmatprep.subr.bf16.mxu0 0
    %2443 = vmatpush1.bf16.msra.mxu0 0
    %2444 = vmatprep.subr.bf16.mxu0 0
    %2445 = vmatpush1.bf16.msra.mxu0 0
    %2446 = vmatprep.subr.bf16.mxu0 0
    %2447 = vmatpush1.bf16.msra.mxu0 0
    %2448 = vmatprep.subr.bf16.mxu0 0
    %2449 = vmatpush1.bf16.msra.mxu0 0
    %2450 = vmatprep.subr.bf16.mxu0 0
    %2451 = vmatpush1.bf16.msra.mxu0 0
    %2452 = vmatprep.mubr.bf16.mxu0 0
    %2453 = vmatmul.mubr.bf16.gmra.mrb[0].mxu0 %v2415
    %v2454 = vpop.f32.mrb[0].mxu0
    %v2455 = vadd.f32 0.0, %v2454
    %v2456 = vpop.f32.mrb[0].mxu0
    %v2457 = vpop.f32.mrb[0].mxu0
    %v2458 = vadd.f32 0.0, %v2457
    %v2459 = vpop.f32.mrb[0].mxu0
    %2460 = vdwg.mxu0
    %v2462 = vsel %vm249, %v2411, 0
    %v2465 = vsel %vm740, %v1379, 0
    %2467 = vmatprep.subr.bf16.mxu0 0
    %2468 = vmatpush1.bf16.msra.mxu0 %v2465
    %2469 = vmatprep.subr.bf16.mxu0 0
    %2470 = vmatpush1.bf16.msra.mxu0 0
    %2471 = vmatprep.subr.bf16.mxu0 0
    %2472 = vmatpush1.bf16.msra.mxu0 0
    %2473 = vmatprep.subr.bf16.mxu0 0
    %2474 = vmatpush1.bf16.msra.mxu0 0
    %2475 = vmatprep.subr.bf16.mxu0 0
    %2476 = vmatpush1.bf16.msra.mxu0 0
    %2477 = vmatprep.subr.bf16.mxu0 0
    %2478 = vmatpush1.bf16.msra.mxu0 0
    %2479 = vmatprep.subr.bf16.mxu0 0
    %2480 = vmatpush1.bf16.msra.mxu0 0
    %2481 = vmatprep.subr.bf16.mxu0 0
    %2482 = vmatpush1.bf16.msra.mxu0 0
    %2483 = vmatprep.subr.bf16.mxu0 0
    %2484 = vmatpush1.bf16.msra.mxu0 0
    %2485 = vmatprep.subr.bf16.mxu0 0
    %2486 = vmatpush1.bf16.msra.mxu0 0
    %2487 = vmatprep.subr.bf16.mxu0 0
    %2488 = vmatpush1.bf16.msra.mxu0 0
    %2489 = vmatprep.subr.bf16.mxu0 0
    %2490 = vmatpush1.bf16.msra.mxu0 0
    %2491 = vmatprep.subr.bf16.mxu0 0
    %2492 = vmatpush1.bf16.msra.mxu0 0
    %2493 = vmatprep.subr.bf16.mxu0 0
    %2494 = vmatpush1.bf16.msra.mxu0 0
    %2495 = vmatprep.subr.bf16.mxu0 0
    %2496 = vmatpush1.bf16.msra.mxu0 0
    %2497 = vmatprep.subr.bf16.mxu0 0
    %2498 = vmatpush1.bf16.msra.mxu0 0
    %2499 = vmatprep.mubr.bf16.mxu0 0
    %2500 = vmatmul.mubr.bf16.gmra.mrb[0].mxu0 %v2462
    %v2501 = vpop.f32.mrb[0].mxu0
    %v2502 = vadd.f32 0.0, %v2501
    %v2503 = vpop.f32.mrb[0].mxu0
    %v2504 = vpop.f32.mrb[0].mxu0
    %v2505 = vadd.f32 0.0, %v2504
    %v2506 = vpop.f32.mrb[0].mxu0
    %2507 = vdwg.mxu0
    %v2509 = vsel %vm249, %v2412, 0
    %v2512 = vsel %vm740, %v1380, 0
    %2514 = vmatprep.subr.bf16.mxu0 0
    %2515 = vmatpush1.bf16.msra.mxu0 %v2512
    %2516 = vmatprep.subr.bf16.mxu0 0
    %2517 = vmatpush1.bf16.msra.mxu0 0
    %2518 = vmatprep.subr.bf16.mxu0 0
    %2519 = vmatpush1.bf16.msra.mxu0 0
    %2520 = vmatprep.subr.bf16.mxu0 0
    %2521 = vmatpush1.bf16.msra.mxu0 0
    %2522 = vmatprep.subr.bf16.mxu0 0
    %2523 = vmatpush1.bf16.msra.mxu0 0
    %2524 = vmatprep.subr.bf16.mxu0 0
    %2525 = vmatpush1.bf16.msra.mxu0 0
    %2526 = vmatprep.subr.bf16.mxu0 0
    %2527 = vmatpush1.bf16.msra.mxu0 0
    %2528 = vmatprep.subr.bf16.mxu0 0
    %2529 = vmatpush1.bf16.msra.mxu0 0
    %2530 = vmatprep.subr.bf16.mxu0 0
    %2531 = vmatpush1.bf16.msra.mxu0 0
    %2532 = vmatprep.subr.bf16.mxu0 0
    %2533 = vmatpush1.bf16.msra.mxu0 0
    %2534 = vmatprep.subr.bf16.mxu0 0
    %2535 = vmatpush1.bf16.msra.mxu0 0
    %2536 = vmatprep.subr.bf16.mxu0 0
    %2537 = vmatpush1.bf16.msra.mxu0 0
    %2538 = vmatprep.subr.bf16.mxu0 0
    %2539 = vmatpush1.bf16.msra.mxu0 0
    %2540 = vmatprep.subr.bf16.mxu0 0
    %2541 = vmatpush1.bf16.msra.mxu0 0
    %2542 = vmatprep.subr.bf16.mxu0 0
    %2543 = vmatpush1.bf16.msra.mxu0 0
    %2544 = vmatprep.subr.bf16.mxu0 0
    %2545 = vmatpush1.bf16.msra.mxu0 0
    %2546 = vmatprep.mubr.bf16.mxu0 0
    %2547 = vmatmul.mubr.bf16.gmra.mrb[0].mxu0 %v2509
    %v2548 = vpop.f32.mrb[0].mxu0
    %v2549 = vadd.f32 0.0, %v2548
    %v2550 = vpop.f32.mrb[0].mxu0
    %v2551 = vpop.f32.mrb[0].mxu0
    %v2552 = vadd.f32 0.0, %v2551
    %v2553 = vpop.f32.mrb[0].mxu0
    %2554 = vdwg.mxu0
    %v2556 = vsel %vm249, %v2413, 0
    %v2559 = vsel %vm740, %v1381, 0
    %2561 = vmatprep.subr.bf16.mxu0 0
    %2562 = vmatpush1.bf16.msra.mxu0 %v2559
    %2563 = vmatprep.subr.bf16.mxu0 0
    %2564 = vmatpush1.bf16.msra.mxu0 0
    %2565 = vmatprep.subr.bf16.mxu0 0
    %2566 = vmatpush1.bf16.msra.mxu0 0
    %2567 = vmatprep.subr.bf16.mxu0 0
    %2568 = vmatpush1.bf16.msra.mxu0 0
    %2569 = vmatprep.subr.bf16.mxu0 0
    %2570 = vmatpush1.bf16.msra.mxu0 0
    %2571 = vmatprep.subr.bf16.mxu0 0
    %2572 = vmatpush1.bf16.msra.mxu0 0
    %2573 = vmatprep.subr.bf16.mxu0 0
    %2574 = vmatpush1.bf16.msra.mxu0 0
    %2575 = vmatprep.subr.bf16.mxu0 0
    %2576 = vmatpush1.bf16.msra.mxu0 0
    %2577 = vmatprep.subr.bf16.mxu0 0
    %2578 = vmatpush1.bf16.msra.mxu0 0
    %2579 = vmatprep.subr.bf16.mxu0 0
    %2580 = vmatpush1.bf16.msra.mxu0 0
    %2581 = vmatprep.subr.bf16.mxu0 0
    %2582 = vmatpush1.bf16.msra.mxu0 0
    %2583 = vmatprep.subr.bf16.mxu0 0
    %2584 = vmatpush1.bf16.msra.mxu0 0
    %2585 = vmatprep.subr.bf16.mxu0 0
    %2586 = vmatpush1.bf16.msra.mxu0 0
    %2587 = vmatprep.subr.bf16.mxu0 0
    %2588 = vmatpush1.bf16.msra.mxu0 0
    %2589 = vmatprep.subr.bf16.mxu0 0
    %2590 = vmatpush1.bf16.msra.mxu0 0
    %2591 = vmatprep.subr.bf16.mxu0 0
    %2592 = vmatpush1.bf16.msra.mxu0 0
    %2593 = vmatprep.mubr.bf16.mxu0 0
    %2594 = vmatmul.mubr.bf16.gmra.mrb[0].mxu0 %v2556
    %v2595 = vpop.f32.mrb[0].mxu0
    %v2596 = vadd.f32 0.0, %v2595
    %v2597 = vpop.f32.mrb[0].mxu0
    %v2598 = vpop.f32.mrb[0].mxu0
    %v2599 = vadd.f32 0.0, %v2598
    %v2600 = vpop.f32.mrb[0].mxu0
    %2601 = vdwg.mxu0
    %v2602 = vsel %vm109, %v2455, 0.0
    %v2603 = vsel %vm109, %v2502, 0.0
    %v2604 = vadd.f32 %v2602, %v2603
    %v2605 = vsel %vm109, %v2549, 0.0
    %v2606 = vadd.f32 %v2604, %v2605
    %v2607 = vsel %vm109, %v2596, 0.0
    %v2608 = vadd.f32 %v2606, %v2607
    %v2609 = vsel %vm109, %v2458, 0.0
    %v2610 = vsel %vm109, %v2505, 0.0
    %v2611 = vadd.f32 %v2609, %v2610
    %v2612 = vsel %vm109, %v2552, 0.0
    %v2613 = vadd.f32 %v2611, %v2612
    %v2614 = vsel %vm109, %v2599, 0.0
    %v2615 = vadd.f32 %v2613, %v2614
    %v2616 = vlaneseq
    %v2617 = vshrl.u32 %v2616, 7
    %v2618 = vsub.s32 7, %v2617
    %v2619 = vrot.slane %v100, %v2618
    %v2620 = vadd.f32 %v2608, %v2619
    %v2621 = vadd.f32 %v2615, %v2619
    %v2622 = vadd.f32 %v1332, %v2620
    %v2623 = vadd.f32 %v1333, %v2621
    %v2624 = vsel %vm109, %v2622, 0.0
    %2625 = vadd.xlane.f32.xlu0 %v2624
    %v2626 = vpop.xlane.xlu0 %2625
    %v2627 = vsel %vm109, %v2623, 0.0
    %2628 = vadd.xlane.f32.xlu0 %v2627
    %v2629 = vpop.xlane.xlu0 %2628
    %v2630 = vmul.f32 %v2626, %v116
    %v2631 = vmul.f32 %v2629, %v116
    %v2632 = vsub.f32 %v2622, %v2630
    %v2633 = vsub.f32 %v2623, %v2631
    %v2634 = vmul.f32 %v2632, %v2632
    %v2635 = vmul.f32 %v2633, %v2633
    %v2636 = vsel %vm109, %v2634, 0.0
    %2637 = vadd.xlane.f32.xlu0 %v2636
    %v2638 = vpop.xlane.xlu0 %2637
    %v2639 = vsel %vm109, %v2635, 0.0
    %2640 = vadd.xlane.f32.xlu0 %v2639
    %v2641 = vpop.xlane.xlu0 %2640
    %v2642 = vmul.f32 %v2638, %v116
    %v2643 = vmul.f32 %v2641, %v116
    %v2644 = vadd.f32 %v2642, 1e-05
    %v2645 = vadd.f32 %v2643, 1e-05
    %v2646 = vrsqrt.pop %v2644
    %v2647 = vrsqrt.pop %v2645
    %v2648 = vmul.f32 %v2632, %v2646
    %v2649 = vmul.f32 %v2633, %v2647
    %v2650 = vlaneseq
    %v2651 = vshrl.u32 %v2650, 7
    %v2652 = vsub.s32 4, %v2651
    %v2653 = vrot.slane %v100, %v2652
    %v2654 = vmul.f32 %v2648, %v2653
    %v2655 = vmul.f32 %v2649, %v2653
    %v2656 = vlaneseq
    %v2657 = vshrl.u32 %v2656, 7
    %v2658 = vsub.s32 5, %v2657
    %v2659 = vrot.slane %v100, %v2658
    %v2660 = vadd.f32 %v2654, %v2659
    %v2661 = vadd.f32 %v2655, %v2659
    %v2662 = vld [vmem:[#allocation8] sm:$0xf]
    %v2663 = vld [vmem:[#allocation8 + $0x4] sm:$0xf]
    %v2664 = vld [vmem:[#allocation8 + $0x8] sm:$0xf]
    %v2665 = vld [vmem:[#allocation8 + $0xc] sm:$0xf]
    %v2666 = vpack.c.bf16 %v2661, %v2660
    %v2667 = vlaneseq
    %v2668 = vshrl.u32 %v2667, 7
    %v2669 = vsub.s32 0, %v2668
    %v2670 = vrot.slane %v101, %v2669
    %v2675 = vunpack.c.l.b16 %v2662
    %v2676 = vunpack.c.l.b16 %v2663
    %v2677 = vunpack.c.l.b16 %v2664
    %v2678 = vunpack.c.l.b16 %v2665
    %v2679 = vpack.c.b16 %v2676, %v2675
    %v2680 = vpack.c.b16 %v2678, %v2677
    %v2684 = vsel %vm109, %v2666, 0
    %2686 = vmatprep.subr.bf16.mxu0 0
    %2687 = vmatpush1.bf16.msra.mxu0 %v2679
    %2688 = vmatprep.subr.bf16.mxu0 0
    %2689 = vmatpush1.bf16.msra.mxu0 %v2680
    %2690 = vmatprep.subr.bf16.mxu0 0
    %2691 = vmatpush1.bf16.msra.mxu0 0
    %2692 = vmatprep.subr.bf16.mxu0 0
    %2693 = vmatpush1.bf16.msra.mxu0 0
    %2694 = vmatprep.subr.bf16.mxu0 0
    %2695 = vmatpush1.bf16.msra.mxu0 0
    %2696 = vmatprep.subr.bf16.mxu0 0
    %2697 = vmatpush1.bf16.msra.mxu0 0
    %2698 = vmatprep.subr.bf16.mxu0 0
    %2699 = vmatpush1.bf16.msra.mxu0 0
    %2700 = vmatprep.subr.bf16.mxu0 0
    %2701 = vmatpush1.bf16.msra.mxu0 0
    %2702 = vmatprep.subr.bf16.mxu0 0
    %2703 = vmatpush1.bf16.msra.mxu0 0
    %2704 = vmatprep.subr.bf16.mxu0 0
    %2705 = vmatpush1.bf16.msra.mxu0 0
    %2706 = vmatprep.subr.bf16.mxu0 0
    %2707 = vmatpush1.bf16.msra.mxu0 0
    %2708 = vmatprep.subr.bf16.mxu0 0
    %2709 = vmatpush1.bf16.msra.mxu0 0
    %2710 = vmatprep.subr.bf16.mxu0 0
    %2711 = vmatpush1.bf16.msra.mxu0 0
    %2712 = vmatprep.subr.bf16.mxu0 0
    %2713 = vmatpush1.bf16.msra.mxu0 0
    %2714 = vmatprep.subr.bf16.mxu0 0
    %2715 = vmatpush1.bf16.msra.mxu0 0
    %2716 = vmatprep.subr.bf16.mxu0 0
    %2717 = vmatpush1.bf16.msra.mxu0 0
    %2718 = vmatprep.mubr.bf16.mxu0 0
    %2719 = vmatmul.mubr.bf16.gmra.mrb[0].mxu0 %v2684
    %v2720 = vpop.f32.mrb[0].mxu0
    %v2721 = vadd.f32 %v2670, %v2720
    %v2722 = vpop.f32.mrb[0].mxu0
    %v2723 = vpop.f32.mrb[0].mxu0
    %v2724 = vadd.f32 %v2670, %v2723
    %v2725 = vpop.f32.mrb[0].mxu0
    %2726 = vdwg.mxu0
    %v2727 = vmax.f32 %v2721, 0.0
    %v2728 = vmax.f32 %v2724, 0.0
    %s2729 = scalar_lea.vmem [#allocation8], 16
    %v2730 = vld [vmem:[%s2729] sm:$0xf]
    %v2731 = vld [vmem:[%s2729 + $0x4] sm:$0xf]
    %v2732 = vld [vmem:[%s2729 + $0x8] sm:$0xf]
    %v2733 = vld [vmem:[%s2729 + $0xc] sm:$0xf]
    %v2734 = vpack.c.bf16 %v2728, %v2727
    %v2735 = vlaneseq
    %v2736 = vshrl.u32 %v2735, 7
    %v2737 = vsub.s32 1, %v2736
    %v2738 = vrot.slane %v101, %v2737
    %v2743 = vunpack.c.l.b16 %v2730
    %v2744 = vunpack.c.l.b16 %v2731
    %v2745 = vunpack.c.l.b16 %v2732
    %v2746 = vunpack.c.l.b16 %v2733
    %v2747 = vpack.c.b16 %v2744, %v2743
    %v2748 = vpack.c.b16 %v2746, %v2745
    %v2752 = vsel %vm109, %v2734, 0
    %2754 = vmatprep.subr.bf16.mxu0 0
    %2755 = vmatpush1.bf16.msra.mxu0 %v2747
    %2756 = vmatprep.subr.bf16.mxu0 0
    %2757 = vmatpush1.bf16.msra.mxu0 %v2748
    %2758 = vmatprep.subr.bf16.mxu0 0
    %2759 = vmatpush1.bf16.msra.mxu0 0
    %2760 = vmatprep.subr.bf16.mxu0 0
    %2761 = vmatpush1.bf16.msra.mxu0 0
    %2762 = vmatprep.subr.bf16.mxu0 0
    %2763 = vmatpush1.bf16.msra.mxu0 0
    %2764 = vmatprep.subr.bf16.mxu0 0
    %2765 = vmatpush1.bf16.msra.mxu0 0
    %2766 = vmatprep.subr.bf16.mxu0 0
    %2767 = vmatpush1.bf16.msra.mxu0 0
    %2768 = vmatprep.subr.bf16.mxu0 0
    %2769 = vmatpush1.bf16.msra.mxu0 0
    %2770 = vmatprep.subr.bf16.mxu0 0
    %2771 = vmatpush1.bf16.msra.mxu0 0
    %2772 = vmatprep.subr.bf16.mxu0 0
    %2773 = vmatpush1.bf16.msra.mxu0 0
    %2774 = vmatprep.subr.bf16.mxu0 0
    %2775 = vmatpush1.bf16.msra.mxu0 0
    %2776 = vmatprep.subr.bf16.mxu0 0
    %2777 = vmatpush1.bf16.msra.mxu0 0
    %2778 = vmatprep.subr.bf16.mxu0 0
    %2779 = vmatpush1.bf16.msra.mxu0 0
    %2780 = vmatprep.subr.bf16.mxu0 0
    %2781 = vmatpush1.bf16.msra.mxu0 0
    %2782 = vmatprep.subr.bf16.mxu0 0
    %2783 = vmatpush1.bf16.msra.mxu0 0
    %2784 = vmatprep.subr.bf16.mxu0 0
    %2785 = vmatpush1.bf16.msra.mxu0 0
    %2786 = vmatprep.mubr.bf16.mxu0 0
    %2787 = vmatmul.mubr.bf16.gmra.mrb[0].mxu0 %v2752
    %v2788 = vpop.f32.mrb[0].mxu0
    %v2789 = vadd.f32 %v2738, %v2788
    %v2790 = vpop.f32.mrb[0].mxu0
    %v2791 = vpop.f32.mrb[0].mxu0
    %v2792 = vadd.f32 %v2738, %v2791
    %v2793 = vpop.f32.mrb[0].mxu0
    %2794 = vdwg.mxu0
    %v2795 = vadd.f32 %v2660, %v2789
    %v2796 = vadd.f32 %v2661, %v2792
    %2797 = vst.msk [vmem:[#allocation11] sm:$0xff] %vm109, %v2795
    %2798 = vst.msk [vmem:[#allocation11 + $0x8] sm:$0xff] %vm109, %v2796
    // Predicated region
    $region50: #{tpu_custom_call.1} parent=1 // pred_check
      _
    $region51: #{tpu_custom_call.1} parent=1 // pred_check_branch
      %2800 = sbr.rel (0) target = $region53
    $region52: #{tpu_custom_call.1} parent=1 // pred_region
      %s2802 = ssub.s32 256, 256
      %2803 = vsyncadd [#allocation4], %s2802
      %s2804 = sshll.u32 [#allocation11], 4
      %s2805 = int_to_ptr.vmem [resolvable:$true] %s2804
      %2810 = dma.vmem_to_hbm [thread:$0]  %s2805, 256, %s7, [#allocation4], 128, 128, 8
    $region53: #{tpu_custom_call.1} parent=1 // pred_fallthru
      _
    // Predicated region
    $region54: #{tpu_custom_call.1} parent=1 // pred_check
      _
    $region55: #{tpu_custom_call.1} parent=1 // pred_check_branch
      %2812 = sbr.rel (0) target = $region57
    $region56: #{tpu_custom_call.1} parent=1 // pred_region
      %2813 = dma.done [#allocation4], 256
    $region57: #{tpu_custom_call.1} parent=1 // pred_fallthru
      _
    %2814 = vsyncpa [#allocation3], 1
    %2815 = vsyncpa [#allocation6], 1
    %2816 = vsyncpa [#allocation9], 1
    %2817 = vsyncpa [#allocation4], 1

</llo_original>
